<compile_context>
chip_gen: v6e
topology: v6e:2x2x1
jax: 0.10.0
libtpu: 0.0.40
codegen_flags: <defaults>
</compile_context>

<pallas_src>
import jax
import jax.numpy as jnp
from jax.experimental import pallas as pl
from jax.experimental.pallas import tpu as pltpu

# Constructor arguments / small test shapes.
SEQ_LEN = 8
VOCAB_SIZE = 50
EMBD_SIZE = 32
N_LAYERS = 10          # forced by the (20, B, 64) h0/c0 in forward()
ANS_SIZE = 16
HIDDEN = 128           # self.hidden_dim
H = HIDDEN // 2        # per-direction hidden size (64)
G4 = 4 * H             # per-direction packed gate width (256), order i,f,g,o
G8 = 4 * HIDDEN        # fused (both-direction) gate width (512)
BATCH = 2


def _lstm_layer_kernel(x_ref, wih_ref, whh_ref, b_ref, wout_ref, bout_ref,
                       out_ref, seq_ref, gx_ref):
    """One bidirectional LSTM layer per grid step; Linear head on the last.

    x_ref   : (T, B, 128)   padded embedded input (read only at layer 0)
    wih_ref : (1, 128, 512) bf16  fused fwd+bwd input->hidden (gate-interleaved)
    whh_ref : (1, 128, 512) bf16  block-diagonal fused hidden->hidden
    b_ref   : (1, 1, 512)   f32   b_ih + b_hh, fused layout
    wout_ref: (128, ANS), bout_ref: (1, ANS)
    out_ref : (B, ANS)
    seq_ref : (T, B, 128)   persistent layer input/output (reused in place)
    gx_ref  : (T, B, 512)   persistent hoisted x-gates scratch
    """
    layer = pl.program_id(0)
    n_layers = pl.num_programs(0)
    T, B, _ = seq_ref.shape

    # Seed layer 0 with the (padded) embedded input.
    @pl.when(layer == 0)
    def _():
        seq_ref[...] = x_ref[...]

    wih = wih_ref[0]        # (128, 512) bf16
    whh = whh_ref[0]        # (128, 512) bf16
    bias = b_ref[0]         # (1, 512)  f32

    # ---- Pre-pass (off the recurrent chain): x @ Wih + bias for every
    #      timestep and both directions. Independent MXU matmuls; the bias
    #      broadcast is hoisted out of the recurrence.
    for t in range(T):
        gx_ref[t] = (jnp.dot(seq_ref[t].astype(jnp.bfloat16), wih,
                             preferred_element_type=jnp.float32) + bias)

    # Static lane masks for the fused layouts (built once per layer).
    gate_lane = jax.lax.broadcasted_iota(jnp.int32, (1, G8), 1)
    fwd_gate_cols = (gate_lane % (2 * H)) < H        # fwd half of each gate block
    out_lane = jax.lax.broadcasted_iota(jnp.int32, (1, HIDDEN), 1)
    fwd_out_cols = out_lane < H                      # lanes 0:64 = forward hidden

    # ---- Recurrent chain: only h @ Whh + elementwise per step.  h/c carried
    #      in vregs; fully unrolled (T = 8); both directions fused per step.
    h = jnp.zeros((B, HIDDEN), jnp.float32)          # [h_fwd | h_bwd]
    c = jnp.zeros((B, HIDDEN), jnp.float32)          # [c_fwd | c_bwd]
    for t in range(T):
        rt = T - 1 - t                               # backward-direction index
        # forward columns from timestep t, backward columns from timestep rt
        gx = jnp.where(fwd_gate_cols, gx_ref[t], gx_ref[rt])
        gates = gx + jnp.dot(h.astype(jnp.bfloat16), whh,
                             preferred_element_type=jnp.float32)   # (B, 512)
        i_g = jax.nn.sigmoid(gates[:, 0 * HIDDEN:1 * HIDDEN])      # 128-lane slices
        f_g = jax.nn.sigmoid(gates[:, 1 * HIDDEN:2 * HIDDEN])
        g_g = jnp.tanh(gates[:, 2 * HIDDEN:3 * HIDDEN])
        o_g = jax.nn.sigmoid(gates[:, 3 * HIDDEN:4 * HIDDEN])
        c = f_g * c + i_g * g_g
        h = o_g * jnp.tanh(c)
        # Blend this step's outputs straight into the (already consumed) seq
        # buffer: forward hidden -> row t lanes 0:64, backward -> row rt 64:128.
        seq_ref[t] = jnp.where(fwd_out_cols, h, seq_ref[t])
        seq_ref[rt] = jnp.where(fwd_out_cols, seq_ref[rt], h)

    # ---- Linear head on output[-1], only after the last layer.
    @pl.when(layer == n_layers - 1)
    def _():
        last = seq_ref[T - 1]                        # (B, 128)
        out_ref[...] = (jnp.dot(last, wout_ref[...],
                                preferred_element_type=jnp.float32)
                        + bout_ref[...])


def _fuse_gate_cols(w_fwd, w_bwd):
    """[i,f,g,o] per direction -> [i_f|i_b][f_f|f_b][g_f|g_b][o_f|o_b]."""
    parts = []
    for g in range(4):
        parts.append(w_fwd[..., g * H:(g + 1) * H])
        parts.append(w_bwd[..., g * H:(g + 1) * H])
    return jnp.concatenate(parts, axis=-1)


def _pack_lstm_weights(params):
    """Build fused, MXU-friendly (bf16) weight layouts from PyTorch-style ones."""
    wih, whh, bias = params["wih"], params["whh"], params["bias"]
    # Input->hidden: both directions see the same input -> stack the columns.
    wih_f = _fuse_gate_cols(wih[:, 0], wih[:, 1]).astype(jnp.bfloat16)   # (L,128,512)
    # Hidden->hidden: block-diagonal over the [h_fwd | h_bwd] input rows.
    zeros = jnp.zeros_like(whh[:, 0])                                    # (L,64,256)
    whh_fwd = jnp.concatenate([whh[:, 0], zeros], axis=1)                # (L,128,256)
    whh_bwd = jnp.concatenate([zeros, whh[:, 1]], axis=1)                # (L,128,256)
    whh_f = _fuse_gate_cols(whh_fwd, whh_bwd).astype(jnp.bfloat16)       # (L,128,512)
    bias_f = _fuse_gate_cols(bias[:, 0], bias[:, 1])                     # (L,1,512) f32
    return wih_f, whh_f, bias_f


def somenet_pallas(X, params):
    """X: (B, T) int32 token ids -> (B, ANS_SIZE) float32 logits."""
    emb = jnp.take(params["embed"], X, axis=0)                 # (B, T, E) embedding (glue)
    x = jnp.transpose(emb, (1, 0, 2))                          # (T, B, E) == permute(1,0,2)
    T, B, E = x.shape
    x_pad = jnp.pad(x, ((0, 0), (0, 0), (0, HIDDEN - E)))      # (T, B, 128)

    wih_f, whh_f, bias_f = _pack_lstm_weights(params)

    grid_spec = pltpu.PrefetchScalarGridSpec(
        num_scalar_prefetch=0,
        grid=(N_LAYERS,),                                      # one step per layer
        in_specs=[
            pl.BlockSpec((T, B, HIDDEN), lambda l: (0, 0, 0)),    # x (resident)
            pl.BlockSpec((1, HIDDEN, G8), lambda l: (l, 0, 0)),   # Wih[l] (bf16)
            pl.BlockSpec((1, HIDDEN, G8), lambda l: (l, 0, 0)),   # Whh[l] (bf16)
            pl.BlockSpec((1, 1, G8), lambda l: (l, 0, 0)),        # bias[l]
            pl.BlockSpec((HIDDEN, ANS_SIZE), lambda l: (0, 0)),   # Wout
            pl.BlockSpec((1, ANS_SIZE), lambda l: (0, 0)),        # bout
        ],
        out_specs=pl.BlockSpec((B, ANS_SIZE), lambda l: (0, 0)),
        scratch_shapes=[
            pltpu.VMEM((T, B, HIDDEN), jnp.float32),   # layer input/output (in place)
            pltpu.VMEM((T, B, G8), jnp.float32),       # hoisted x-gates (both dirs)
        ],
    )
    return pl.pallas_call(
        _lstm_layer_kernel,
        out_shape=jax.ShapeDtypeStruct((B, ANS_SIZE), jnp.float32),
        grid_spec=grid_spec,
        compiler_params=pltpu.CompilerParams(
            dimension_semantics=("arbitrary",)),       # layers are sequential
    )(x_pad, wih_f, whh_f, bias_f, params["wout"], params["bout"])


def init_params(key):
    ks = jax.random.split(key, 7)
    k = 1.0 / jnp.sqrt(H)            # PyTorch LSTM init bound
    embed = jax.random.normal(ks[0], (VOCAB_SIZE, EMBD_SIZE), jnp.float32)

    # Layer 0 input dim is EMBD_SIZE, later layers see 2H; pad the input dim of
    # every layer to HIDDEN with zero rows so one uniform shape feeds the MXU.
    wih = jax.random.uniform(ks[1], (N_LAYERS, 2, HIDDEN, G4), jnp.float32, -k, k)
    mask0 = (jnp.arange(HIDDEN) < EMBD_SIZE).astype(jnp.float32)[:, None]
    wih = wih.at[0].set(wih[0] * mask0)

    whh = jax.random.uniform(ks[2], (N_LAYERS, 2, H, G4), jnp.float32, -k, k)
    b_ih = jax.random.uniform(ks[3], (N_LAYERS, 2, 1, G4), jnp.float32, -k, k)
    b_hh = jax.random.uniform(ks[4], (N_LAYERS, 2, 1, G4), jnp.float32, -k, k)
    bias = b_ih + b_hh

    ko = 1.0 / jnp.sqrt(HIDDEN)      # nn.Linear init bound
    wout = jax.random.uniform(ks[5], (HIDDEN, ANS_SIZE), jnp.float32, -ko, ko)
    bout = jax.random.uniform(ks[6], (1, ANS_SIZE), jnp.float32, -ko, ko)
    return dict(embed=embed, wih=wih, whh=whh, bias=bias, wout=wout, bout=bout)


if __name__ == "__main__":
    key = jax.random.PRNGKey(0)
    pkey, xkey = jax.random.split(key)
    params = init_params(pkey)
    X = jax.random.randint(xkey, (BATCH, SEQ_LEN), 0, VOCAB_SIZE, dtype=jnp.int32)

    fwd = jax.jit(somenet_pallas)
    y = fwd(X, params)
    y = jax.block_until_ready(y)
    assert y.shape == (BATCH, ANS_SIZE) and y.dtype == jnp.float32
    print("KERNEL_OK")
</pallas_src>

<mosaic_0001>
module attributes {stable_mosaic.version = 11 : i64} {
  func.func @_lstm_layer_kernel(%arg0: i32, %arg1: memref<8x2x128xf32, #tpu.memory_space<vmem>>, %arg2: memref<1x128x512xbf16, #tpu.memory_space<vmem>>, %arg3: memref<1x128x512xbf16, #tpu.memory_space<vmem>>, %arg4: memref<1x1x512xf32, #tpu.memory_space<vmem>>, %arg5: memref<128x16xf32, #tpu.memory_space<vmem>>, %arg6: memref<1x16xf32, #tpu.memory_space<vmem>>, %arg7: memref<2x16xf32, #tpu.memory_space<vmem>>, %arg8: memref<8x2x128xf32, #tpu.memory_space<vmem>>, %arg9: memref<8x2x512xf32, #tpu.memory_space<vmem>>) attributes {dimension_semantics = [#tpu.dimension_semantics<arbitrary>], iteration_bounds = array<i64: 10>, scalar_prefetch = 0 : i64, scratch_operands = 2 : i64, tpu.core_type = #tpu.core_type<tc>, window_params = [{pipeline_mode = #tpu.pipeline_mode<synchronous>, transform_indices = @transform_0, window_bounds = array<i64: 8, 2, 128>}, {transform_indices = @transform_1, window_bounds = array<i64: 1, 128, 512>}, {transform_indices = @transform_2, window_bounds = array<i64: 1, 128, 512>}, {transform_indices = @transform_3, window_bounds = array<i64: 1, 1, 512>}, {pipeline_mode = #tpu.pipeline_mode<synchronous>, transform_indices = @transform_4, window_bounds = array<i64: 128, 16>}, {pipeline_mode = #tpu.pipeline_mode<synchronous>, transform_indices = @transform_5, window_bounds = array<i64: 1, 16>}, {pipeline_mode = #tpu.pipeline_mode<synchronous>, transform_indices = @transform_6, window_bounds = array<i64: 2, 16>}]} {
    %c0_i32 = arith.constant 0 : i32
    %0 = arith.cmpi eq, %arg0, %c0_i32 : i32
    %1 = arith.extui %0 : i1 to i32
    %c0_i32_0 = arith.constant 0 : i32
    %2 = arith.cmpi ne, %1, %c0_i32_0 : i32
    scf.if %2 {
      %c0_241 = arith.constant 0 : index
      %c0_242 = arith.constant 0 : index
      %c0_243 = arith.constant 0 : index
      %516 = vector.load %arg1[%c0_241, %c0_242, %c0_243] : memref<8x2x128xf32, #tpu.memory_space<vmem>>, vector<8x2x128xf32>
      %c0_244 = arith.constant 0 : index
      %c0_245 = arith.constant 0 : index
      %c0_246 = arith.constant 0 : index
      %517 = vector.load %arg8[%c0_244, %c0_245, %c0_246] : memref<8x2x128xf32, #tpu.memory_space<vmem>>, vector<8x2x128xf32>
      tpu.vector_store %arg8[%c0_244, %c0_245, %c0_246], %516 {strides = array<i32>} : memref<8x2x128xf32, #tpu.memory_space<vmem>>, vector<8x2x128xf32>,
    } else {
    }
    %c0 = arith.constant 0 : index
    %c0_1 = arith.constant 0 : index
    %c0_2 = arith.constant 0 : index
    %3 = vector.load %arg2[%c0, %c0_1, %c0_2] : memref<1x128x512xbf16, #tpu.memory_space<vmem>>, vector<1x128x512xbf16>
    %4 = vector.shape_cast %3 : vector<1x128x512xbf16> to vector<128x512xbf16>
    %c0_3 = arith.constant 0 : index
    %c0_4 = arith.constant 0 : index
    %c0_5 = arith.constant 0 : index
    %5 = vector.load %arg3[%c0_3, %c0_4, %c0_5] : memref<1x128x512xbf16, #tpu.memory_space<vmem>>, vector<1x128x512xbf16>
    %6 = vector.shape_cast %5 : vector<1x128x512xbf16> to vector<128x512xbf16>
    %c0_6 = arith.constant 0 : index
    %c0_7 = arith.constant 0 : index
    %c0_8 = arith.constant 0 : index
    %7 = vector.load %arg4[%c0_6, %c0_7, %c0_8] : memref<1x1x512xf32, #tpu.memory_space<vmem>>, vector<1x1x512xf32>
    %8 = vector.shape_cast %7 : vector<1x1x512xf32> to vector<1x512xf32>
    %c0_9 = arith.constant 0 : index
    %c0_10 = arith.constant 0 : index
    %c0_11 = arith.constant 0 : index
    %9 = vector.load %arg8[%c0_9, %c0_10, %c0_11] : memref<8x2x128xf32, #tpu.memory_space<vmem>>, vector<1x2x128xf32>
    %10 = vector.shape_cast %9 : vector<1x2x128xf32> to vector<2x128xf32>
    %11 = arith.truncf %10 : vector<2x128xf32> to vector<2x128xbf16>
    %cst = arith.constant dense<0.000000e+00> : vector<2x512xf32>
    %12 = tpu.matmul %11, %4, %cst {dimension_numbers = #tpu.dot_dimension_numbers<[1], [0], [0], [1], [0, 0, 1, 1], [], []>} : vector<2x128xbf16>, vector<128x512xbf16>, vector<2x512xf32> -> vector<2x512xf32>
    %13 = vector.broadcast %8 : vector<1x512xf32> to vector<2x512xf32>
    %14 = arith.addf %12, %13 : vector<2x512xf32>
    %c0_12 = arith.constant 0 : index
    %c0_13 = arith.constant 0 : index
    %c0_14 = arith.constant 0 : index
    %15 = vector.load %arg9[%c0_12, %c0_13, %c0_14] : memref<8x2x512xf32, #tpu.memory_space<vmem>>, vector<1x2x512xf32>
    %16 = vector.shape_cast %15 : vector<1x2x512xf32> to vector<2x512xf32>
    %17 = vector.shape_cast %14 : vector<2x512xf32> to vector<1x2x512xf32>
    tpu.vector_store %arg9[%c0_12, %c0_13, %c0_14], %17 {strides = array<i32>} : memref<8x2x512xf32, #tpu.memory_space<vmem>>, vector<1x2x512xf32>,
    %c1 = arith.constant 1 : index
    %c0_15 = arith.constant 0 : index
    %c0_16 = arith.constant 0 : index
    %18 = vector.load %arg8[%c1, %c0_15, %c0_16] : memref<8x2x128xf32, #tpu.memory_space<vmem>>, vector<1x2x128xf32>
    %19 = vector.shape_cast %18 : vector<1x2x128xf32> to vector<2x128xf32>
    %20 = arith.truncf %19 : vector<2x128xf32> to vector<2x128xbf16>
    %cst_17 = arith.constant dense<0.000000e+00> : vector<2x512xf32>
    %21 = tpu.matmul %20, %4, %cst_17 {dimension_numbers = #tpu.dot_dimension_numbers<[1], [0], [0], [1], [0, 0, 1, 1], [], []>} : vector<2x128xbf16>, vector<128x512xbf16>, vector<2x512xf32> -> vector<2x512xf32>
    %22 = vector.broadcast %8 : vector<1x512xf32> to vector<2x512xf32>
    %23 = arith.addf %21, %22 : vector<2x512xf32>
    %c1_18 = arith.constant 1 : index
    %c0_19 = arith.constant 0 : index
    %c0_20 = arith.constant 0 : index
    %24 = vector.load %arg9[%c1_18, %c0_19, %c0_20] : memref<8x2x512xf32, #tpu.memory_space<vmem>>, vector<1x2x512xf32>
    %25 = vector.shape_cast %24 : vector<1x2x512xf32> to vector<2x512xf32>
    %26 = vector.shape_cast %23 : vector<2x512xf32> to vector<1x2x512xf32>
    tpu.vector_store %arg9[%c1_18, %c0_19, %c0_20], %26 {strides = array<i32>} : memref<8x2x512xf32, #tpu.memory_space<vmem>>, vector<1x2x512xf32>,
    %c2 = arith.constant 2 : index
    %c0_21 = arith.constant 0 : index
    %c0_22 = arith.constant 0 : index
    %27 = vector.load %arg8[%c2, %c0_21, %c0_22] : memref<8x2x128xf32, #tpu.memory_space<vmem>>, vector<1x2x128xf32>
    %28 = vector.shape_cast %27 : vector<1x2x128xf32> to vector<2x128xf32>
    %29 = arith.truncf %28 : vector<2x128xf32> to vector<2x128xbf16>
    %cst_23 = arith.constant dense<0.000000e+00> : vector<2x512xf32>
    %30 = tpu.matmul %29, %4, %cst_23 {dimension_numbers = #tpu.dot_dimension_numbers<[1], [0], [0], [1], [0, 0, 1, 1], [], []>} : vector<2x128xbf16>, vector<128x512xbf16>, vector<2x512xf32> -> vector<2x512xf32>
    %31 = vector.broadcast %8 : vector<1x512xf32> to vector<2x512xf32>
    %32 = arith.addf %30, %31 : vector<2x512xf32>
    %c2_24 = arith.constant 2 : index
    %c0_25 = arith.constant 0 : index
    %c0_26 = arith.constant 0 : index
    %33 = vector.load %arg9[%c2_24, %c0_25, %c0_26] : memref<8x2x512xf32, #tpu.memory_space<vmem>>, vector<1x2x512xf32>
    %34 = vector.shape_cast %33 : vector<1x2x512xf32> to vector<2x512xf32>
    %35 = vector.shape_cast %32 : vector<2x512xf32> to vector<1x2x512xf32>
    tpu.vector_store %arg9[%c2_24, %c0_25, %c0_26], %35 {strides = array<i32>} : memref<8x2x512xf32, #tpu.memory_space<vmem>>, vector<1x2x512xf32>,
    %c3 = arith.constant 3 : index
    %c0_27 = arith.constant 0 : index
    %c0_28 = arith.constant 0 : index
    %36 = vector.load %arg8[%c3, %c0_27, %c0_28] : memref<8x2x128xf32, #tpu.memory_space<vmem>>, vector<1x2x128xf32>
    %37 = vector.shape_cast %36 : vector<1x2x128xf32> to vector<2x128xf32>
    %38 = arith.truncf %37 : vector<2x128xf32> to vector<2x128xbf16>
    %cst_29 = arith.constant dense<0.000000e+00> : vector<2x512xf32>
    %39 = tpu.matmul %38, %4, %cst_29 {dimension_numbers = #tpu.dot_dimension_numbers<[1], [0], [0], [1], [0, 0, 1, 1], [], []>} : vector<2x128xbf16>, vector<128x512xbf16>, vector<2x512xf32> -> vector<2x512xf32>
    %40 = vector.broadcast %8 : vector<1x512xf32> to vector<2x512xf32>
    %41 = arith.addf %39, %40 : vector<2x512xf32>
    %c3_30 = arith.constant 3 : index
    %c0_31 = arith.constant 0 : index
    %c0_32 = arith.constant 0 : index
    %42 = vector.load %arg9[%c3_30, %c0_31, %c0_32] : memref<8x2x512xf32, #tpu.memory_space<vmem>>, vector<1x2x512xf32>
    %43 = vector.shape_cast %42 : vector<1x2x512xf32> to vector<2x512xf32>
    %44 = vector.shape_cast %41 : vector<2x512xf32> to vector<1x2x512xf32>
    tpu.vector_store %arg9[%c3_30, %c0_31, %c0_32], %44 {strides = array<i32>} : memref<8x2x512xf32, #tpu.memory_space<vmem>>, vector<1x2x512xf32>,
    %c4 = arith.constant 4 : index
    %c0_33 = arith.constant 0 : index
    %c0_34 = arith.constant 0 : index
    %45 = vector.load %arg8[%c4, %c0_33, %c0_34] : memref<8x2x128xf32, #tpu.memory_space<vmem>>, vector<1x2x128xf32>
    %46 = vector.shape_cast %45 : vector<1x2x128xf32> to vector<2x128xf32>
    %47 = arith.truncf %46 : vector<2x128xf32> to vector<2x128xbf16>
    %cst_35 = arith.constant dense<0.000000e+00> : vector<2x512xf32>
    %48 = tpu.matmul %47, %4, %cst_35 {dimension_numbers = #tpu.dot_dimension_numbers<[1], [0], [0], [1], [0, 0, 1, 1], [], []>} : vector<2x128xbf16>, vector<128x512xbf16>, vector<2x512xf32> -> vector<2x512xf32>
    %49 = vector.broadcast %8 : vector<1x512xf32> to vector<2x512xf32>
    %50 = arith.addf %48, %49 : vector<2x512xf32>
    %c4_36 = arith.constant 4 : index
    %c0_37 = arith.constant 0 : index
    %c0_38 = arith.constant 0 : index
    %51 = vector.load %arg9[%c4_36, %c0_37, %c0_38] : memref<8x2x512xf32, #tpu.memory_space<vmem>>, vector<1x2x512xf32>
    %52 = vector.shape_cast %51 : vector<1x2x512xf32> to vector<2x512xf32>
    %53 = vector.shape_cast %50 : vector<2x512xf32> to vector<1x2x512xf32>
    tpu.vector_store %arg9[%c4_36, %c0_37, %c0_38], %53 {strides = array<i32>} : memref<8x2x512xf32, #tpu.memory_space<vmem>>, vector<1x2x512xf32>,
    %c5 = arith.constant 5 : index
    %c0_39 = arith.constant 0 : index
    %c0_40 = arith.constant 0 : index
    %54 = vector.load %arg8[%c5, %c0_39, %c0_40] : memref<8x2x128xf32, #tpu.memory_space<vmem>>, vector<1x2x128xf32>
    %55 = vector.shape_cast %54 : vector<1x2x128xf32> to vector<2x128xf32>
    %56 = arith.truncf %55 : vector<2x128xf32> to vector<2x128xbf16>
    %cst_41 = arith.constant dense<0.000000e+00> : vector<2x512xf32>
    %57 = tpu.matmul %56, %4, %cst_41 {dimension_numbers = #tpu.dot_dimension_numbers<[1], [0], [0], [1], [0, 0, 1, 1], [], []>} : vector<2x128xbf16>, vector<128x512xbf16>, vector<2x512xf32> -> vector<2x512xf32>
    %58 = vector.broadcast %8 : vector<1x512xf32> to vector<2x512xf32>
    %59 = arith.addf %57, %58 : vector<2x512xf32>
    %c5_42 = arith.constant 5 : index
    %c0_43 = arith.constant 0 : index
    %c0_44 = arith.constant 0 : index
    %60 = vector.load %arg9[%c5_42, %c0_43, %c0_44] : memref<8x2x512xf32, #tpu.memory_space<vmem>>, vector<1x2x512xf32>
    %61 = vector.shape_cast %60 : vector<1x2x512xf32> to vector<2x512xf32>
    %62 = vector.shape_cast %59 : vector<2x512xf32> to vector<1x2x512xf32>
    tpu.vector_store %arg9[%c5_42, %c0_43, %c0_44], %62 {strides = array<i32>} : memref<8x2x512xf32, #tpu.memory_space<vmem>>, vector<1x2x512xf32>,
    %c6 = arith.constant 6 : index
    %c0_45 = arith.constant 0 : index
    %c0_46 = arith.constant 0 : index
    %63 = vector.load %arg8[%c6, %c0_45, %c0_46] : memref<8x2x128xf32, #tpu.memory_space<vmem>>, vector<1x2x128xf32>
    %64 = vector.shape_cast %63 : vector<1x2x128xf32> to vector<2x128xf32>
    %65 = arith.truncf %64 : vector<2x128xf32> to vector<2x128xbf16>
    %cst_47 = arith.constant dense<0.000000e+00> : vector<2x512xf32>
    %66 = tpu.matmul %65, %4, %cst_47 {dimension_numbers = #tpu.dot_dimension_numbers<[1], [0], [0], [1], [0, 0, 1, 1], [], []>} : vector<2x128xbf16>, vector<128x512xbf16>, vector<2x512xf32> -> vector<2x512xf32>
    %67 = vector.broadcast %8 : vector<1x512xf32> to vector<2x512xf32>
    %68 = arith.addf %66, %67 : vector<2x512xf32>
    %c6_48 = arith.constant 6 : index
    %c0_49 = arith.constant 0 : index
    %c0_50 = arith.constant 0 : index
    %69 = vector.load %arg9[%c6_48, %c0_49, %c0_50] : memref<8x2x512xf32, #tpu.memory_space<vmem>>, vector<1x2x512xf32>
    %70 = vector.shape_cast %69 : vector<1x2x512xf32> to vector<2x512xf32>
    %71 = vector.shape_cast %68 : vector<2x512xf32> to vector<1x2x512xf32>
    tpu.vector_store %arg9[%c6_48, %c0_49, %c0_50], %71 {strides = array<i32>} : memref<8x2x512xf32, #tpu.memory_space<vmem>>, vector<1x2x512xf32>,
    %c7 = arith.constant 7 : index
    %c0_51 = arith.constant 0 : index
    %c0_52 = arith.constant 0 : index
    %72 = vector.load %arg8[%c7, %c0_51, %c0_52] : memref<8x2x128xf32, #tpu.memory_space<vmem>>, vector<1x2x128xf32>
    %73 = vector.shape_cast %72 : vector<1x2x128xf32> to vector<2x128xf32>
    %74 = arith.truncf %73 : vector<2x128xf32> to vector<2x128xbf16>
    %cst_53 = arith.constant dense<0.000000e+00> : vector<2x512xf32>
    %75 = tpu.matmul %74, %4, %cst_53 {dimension_numbers = #tpu.dot_dimension_numbers<[1], [0], [0], [1], [0, 0, 1, 1], [], []>} : vector<2x128xbf16>, vector<128x512xbf16>, vector<2x512xf32> -> vector<2x512xf32>
    %76 = vector.broadcast %8 : vector<1x512xf32> to vector<2x512xf32>
    %77 = arith.addf %75, %76 : vector<2x512xf32>
    %c7_54 = arith.constant 7 : index
    %c0_55 = arith.constant 0 : index
    %c0_56 = arith.constant 0 : index
    %78 = vector.load %arg9[%c7_54, %c0_55, %c0_56] : memref<8x2x512xf32, #tpu.memory_space<vmem>>, vector<1x2x512xf32>
    %79 = vector.shape_cast %78 : vector<1x2x512xf32> to vector<2x512xf32>
    %80 = vector.shape_cast %77 : vector<2x512xf32> to vector<1x2x512xf32>
    tpu.vector_store %arg9[%c7_54, %c0_55, %c0_56], %80 {strides = array<i32>} : memref<8x2x512xf32, #tpu.memory_space<vmem>>, vector<1x2x512xf32>,
    %81 = tpu.iota {dimensions = array<i32: 1>} : vector<1x512xi32>
    %c128_i32 = arith.constant 128 : i32
    %c0_i32_57 = arith.constant 0 : i32
    %82 = arith.cmpi eq, %c128_i32, %c0_i32_57 : i32
    %c1_i32 = arith.constant 1 : i32
    %83 = arith.select %82, %c1_i32, %c128_i32 : i32
    %84 = vector.broadcast %83 : i32 to vector<1x512xi32>
    %85 = arith.remsi %81, %84 : vector<1x512xi32>
    %c0_i32_58 = arith.constant 0 : i32
    %86 = vector.broadcast %c0_i32_58 : i32 to vector<1x512xi32>
    %87 = arith.cmpi ne, %85, %86 : vector<1x512xi32>
    %c0_i32_59 = arith.constant 0 : i32
    %88 = vector.broadcast %c0_i32_59 : i32 to vector<1x512xi32>
    %89 = arith.cmpi slt, %85, %88 : vector<1x512xi32>
    %c0_i32_60 = arith.constant 0 : i32
    %90 = arith.cmpi slt, %83, %c0_i32_60 : i32
    %91 = vector.broadcast %90 : i1 to vector<1x512xi1>
    %92 = vector.broadcast %91 : vector<1x512xi1> to vector<1x512xi1>
    %93 = arith.xori %89, %92 : vector<1x512xi1>
    %94 = arith.andi %93, %87 : vector<1x512xi1>
    %95 = vector.broadcast %83 : i32 to vector<1x512xi32>
    %96 = arith.addi %85, %95 : vector<1x512xi32>
    %97 = arith.select %94, %96, %85 : vector<1x512xi1>, vector<1x512xi32>
    %c64_i32 = arith.constant 64 : i32
    %98 = vector.broadcast %c64_i32 : i32 to vector<1x512xi32>
    %99 = arith.cmpi slt, %97, %98 : vector<1x512xi32>
    %100 = tpu.iota {dimensions = array<i32: 1>} : vector<1x128xi32>
    %c64_i32_61 = arith.constant 64 : i32
    %101 = vector.broadcast %c64_i32_61 : i32 to vector<1x128xi32>
    %102 = arith.cmpi slt, %100, %101 : vector<1x128xi32>
    %cst_62 = arith.constant 0.000000e+00 : f32
    %103 = vector.broadcast %cst_62 : f32 to vector<2x128xf32>
    %cst_63 = arith.constant 0.000000e+00 : f32
    %104 = vector.broadcast %cst_63 : f32 to vector<2x128xf32>
    %c0_64 = arith.constant 0 : index
    %c0_65 = arith.constant 0 : index
    %c0_66 = arith.constant 0 : index
    %105 = vector.load %arg9[%c0_64, %c0_65, %c0_66] : memref<8x2x512xf32, #tpu.memory_space<vmem>>, vector<1x2x512xf32>
    %106 = vector.shape_cast %105 : vector<1x2x512xf32> to vector<2x512xf32>
    %c7_67 = arith.constant 7 : index
    %c0_68 = arith.constant 0 : index
    %c0_69 = arith.constant 0 : index
    %107 = vector.load %arg9[%c7_67, %c0_68, %c0_69] : memref<8x2x512xf32, #tpu.memory_space<vmem>>, vector<1x2x512xf32>
    %108 = vector.shape_cast %107 : vector<1x2x512xf32> to vector<2x512xf32>
    %109 = vector.shape_cast %99 : vector<1x512xi1> to vector<1x512xi1>
    %110 = vector.broadcast %109 : vector<1x512xi1> to vector<2x512xi1>
    %111 = arith.select %110, %106, %108 : vector<2x512xi1>, vector<2x512xf32>
    %112 = arith.truncf %103 : vector<2x128xf32> to vector<2x128xbf16>
    %cst_70 = arith.constant dense<0.000000e+00> : vector<2x512xf32>
    %113 = tpu.matmul %112, %6, %cst_70 {dimension_numbers = #tpu.dot_dimension_numbers<[1], [0], [0], [1], [0, 0, 1, 1], [], []>} : vector<2x128xbf16>, vector<128x512xbf16>, vector<2x512xf32> -> vector<2x512xf32>
    %114 = arith.addf %111, %113 : vector<2x512xf32>
    %115 = vector.extract_strided_slice %114 {offsets = [0, 0], sizes = [2, 128], strides = [1, 1]} : vector<2x512xf32> to vector<2x128xf32>
    %116 = arith.negf %115 : vector<2x128xf32>
    %117 = math.exp %116 : vector<2x128xf32>
    %cst_71 = arith.constant 1.000000e+00 : f32
    %118 = vector.broadcast %cst_71 : f32 to vector<2x128xf32>
    %119 = arith.addf %118, %117 : vector<2x128xf32>
    %120 = arith.divf %118, %119 : vector<2x128xf32>
    %121 = vector.extract_strided_slice %114 {offsets = [0, 128], sizes = [2, 128], strides = [1, 1]} : vector<2x512xf32> to vector<2x128xf32>
    %122 = arith.negf %121 : vector<2x128xf32>
    %123 = math.exp %122 : vector<2x128xf32>
    %cst_72 = arith.constant 1.000000e+00 : f32
    %124 = vector.broadcast %cst_72 : f32 to vector<2x128xf32>
    %125 = arith.addf %124, %123 : vector<2x128xf32>
    %126 = arith.divf %124, %125 : vector<2x128xf32>
    %127 = vector.extract_strided_slice %114 {offsets = [0, 256], sizes = [2, 128], strides = [1, 1]} : vector<2x512xf32> to vector<2x128xf32>
    %128 = math.tanh %127 : vector<2x128xf32>
    %129 = vector.extract_strided_slice %114 {offsets = [0, 384], sizes = [2, 128], strides = [1, 1]} : vector<2x512xf32> to vector<2x128xf32>
    %130 = arith.negf %129 : vector<2x128xf32>
    %131 = math.exp %130 : vector<2x128xf32>
    %cst_73 = arith.constant 1.000000e+00 : f32
    %132 = vector.broadcast %cst_73 : f32 to vector<2x128xf32>
    %133 = arith.addf %132, %131 : vector<2x128xf32>
    %134 = arith.divf %132, %133 : vector<2x128xf32>
    %135 = arith.mulf %126, %104 : vector<2x128xf32>
    %136 = arith.mulf %120, %128 : vector<2x128xf32>
    %137 = arith.addf %135, %136 : vector<2x128xf32>
    %138 = math.tanh %137 : vector<2x128xf32>
    %139 = arith.mulf %134, %138 : vector<2x128xf32>
    %c0_74 = arith.constant 0 : index
    %c0_75 = arith.constant 0 : index
    %c0_76 = arith.constant 0 : index
    %140 = vector.load %arg8[%c0_74, %c0_75, %c0_76] : memref<8x2x128xf32, #tpu.memory_space<vmem>>, vector<1x2x128xf32>
    %141 = vector.shape_cast %140 : vector<1x2x128xf32> to vector<2x128xf32>
    %142 = vector.shape_cast %102 : vector<1x128xi1> to vector<1x128xi1>
    %143 = vector.broadcast %142 : vector<1x128xi1> to vector<2x128xi1>
    %144 = arith.select %143, %139, %141 : vector<2x128xi1>, vector<2x128xf32>
    %c0_77 = arith.constant 0 : index
    %c0_78 = arith.constant 0 : index
    %c0_79 = arith.constant 0 : index
    %145 = vector.load %arg8[%c0_77, %c0_78, %c0_79] : memref<8x2x128xf32, #tpu.memory_space<vmem>>, vector<1x2x128xf32>
    %146 = vector.shape_cast %145 : vector<1x2x128xf32> to vector<2x128xf32>
    %147 = vector.shape_cast %144 : vector<2x128xf32> to vector<1x2x128xf32>
    tpu.vector_store %arg8[%c0_77, %c0_78, %c0_79], %147 {strides = array<i32>} : memref<8x2x128xf32, #tpu.memory_space<vmem>>, vector<1x2x128xf32>,
    %c7_80 = arith.constant 7 : index
    %c0_81 = arith.constant 0 : index
    %c0_82 = arith.constant 0 : index
    %148 = vector.load %arg8[%c7_80, %c0_81, %c0_82] : memref<8x2x128xf32, #tpu.memory_space<vmem>>, vector<1x2x128xf32>
    %149 = vector.shape_cast %148 : vector<1x2x128xf32> to vector<2x128xf32>
    %150 = vector.shape_cast %102 : vector<1x128xi1> to vector<1x128xi1>
    %151 = vector.broadcast %150 : vector<1x128xi1> to vector<2x128xi1>
    %152 = arith.select %151, %149, %139 : vector<2x128xi1>, vector<2x128xf32>
    %c7_83 = arith.constant 7 : index
    %c0_84 = arith.constant 0 : index
    %c0_85 = arith.constant 0 : index
    %153 = vector.load %arg8[%c7_83, %c0_84, %c0_85] : memref<8x2x128xf32, #tpu.memory_space<vmem>>, vector<1x2x128xf32>
    %154 = vector.shape_cast %153 : vector<1x2x128xf32> to vector<2x128xf32>
    %155 = vector.shape_cast %152 : vector<2x128xf32> to vector<1x2x128xf32>
    tpu.vector_store %arg8[%c7_83, %c0_84, %c0_85], %155 {strides = array<i32>} : memref<8x2x128xf32, #tpu.memory_space<vmem>>, vector<1x2x128xf32>,
    %c1_86 = arith.constant 1 : index
    %c0_87 = arith.constant 0 : index
    %c0_88 = arith.constant 0 : index
    %156 = vector.load %arg9[%c1_86, %c0_87, %c0_88] : memref<8x2x512xf32, #tpu.memory_space<vmem>>, vector<1x2x512xf32>
    %157 = vector.shape_cast %156 : vector<1x2x512xf32> to vector<2x512xf32>
    %c6_89 = arith.constant 6 : index
    %c0_90 = arith.constant 0 : index
    %c0_91 = arith.constant 0 : index
    %158 = vector.load %arg9[%c6_89, %c0_90, %c0_91] : memref<8x2x512xf32, #tpu.memory_space<vmem>>, vector<1x2x512xf32>
    %159 = vector.shape_cast %158 : vector<1x2x512xf32> to vector<2x512xf32>
    %160 = vector.shape_cast %99 : vector<1x512xi1> to vector<1x512xi1>
    %161 = vector.broadcast %160 : vector<1x512xi1> to vector<2x512xi1>
    %162 = arith.select %161, %157, %159 : vector<2x512xi1>, vector<2x512xf32>
    %163 = arith.truncf %139 : vector<2x128xf32> to vector<2x128xbf16>
    %cst_92 = arith.constant dense<0.000000e+00> : vector<2x512xf32>
    %164 = tpu.matmul %163, %6, %cst_92 {dimension_numbers = #tpu.dot_dimension_numbers<[1], [0], [0], [1], [0, 0, 1, 1], [], []>} : vector<2x128xbf16>, vector<128x512xbf16>, vector<2x512xf32> -> vector<2x512xf32>
    %165 = arith.addf %162, %164 : vector<2x512xf32>
    %166 = vector.extract_strided_slice %165 {offsets = [0, 0], sizes = [2, 128], strides = [1, 1]} : vector<2x512xf32> to vector<2x128xf32>
    %167 = arith.negf %166 : vector<2x128xf32>
    %168 = math.exp %167 : vector<2x128xf32>
    %cst_93 = arith.constant 1.000000e+00 : f32
    %169 = vector.broadcast %cst_93 : f32 to vector<2x128xf32>
    %170 = arith.addf %169, %168 : vector<2x128xf32>
    %171 = arith.divf %169, %170 : vector<2x128xf32>
    %172 = vector.extract_strided_slice %165 {offsets = [0, 128], sizes = [2, 128], strides = [1, 1]} : vector<2x512xf32> to vector<2x128xf32>
    %173 = arith.negf %172 : vector<2x128xf32>
    %174 = math.exp %173 : vector<2x128xf32>
    %cst_94 = arith.constant 1.000000e+00 : f32
    %175 = vector.broadcast %cst_94 : f32 to vector<2x128xf32>
    %176 = arith.addf %175, %174 : vector<2x128xf32>
    %177 = arith.divf %175, %176 : vector<2x128xf32>
    %178 = vector.extract_strided_slice %165 {offsets = [0, 256], sizes = [2, 128], strides = [1, 1]} : vector<2x512xf32> to vector<2x128xf32>
    %179 = math.tanh %178 : vector<2x128xf32>
    %180 = vector.extract_strided_slice %165 {offsets = [0, 384], sizes = [2, 128], strides = [1, 1]} : vector<2x512xf32> to vector<2x128xf32>
    %181 = arith.negf %180 : vector<2x128xf32>
    %182 = math.exp %181 : vector<2x128xf32>
    %cst_95 = arith.constant 1.000000e+00 : f32
    %183 = vector.broadcast %cst_95 : f32 to vector<2x128xf32>
    %184 = arith.addf %183, %182 : vector<2x128xf32>
    %185 = arith.divf %183, %184 : vector<2x128xf32>
    %186 = arith.mulf %177, %137 : vector<2x128xf32>
    %187 = arith.mulf %171, %179 : vector<2x128xf32>
    %188 = arith.addf %186, %187 : vector<2x128xf32>
    %189 = math.tanh %188 : vector<2x128xf32>
    %190 = arith.mulf %185, %189 : vector<2x128xf32>
    %c1_96 = arith.constant 1 : index
    %c0_97 = arith.constant 0 : index
    %c0_98 = arith.constant 0 : index
    %191 = vector.load %arg8[%c1_96, %c0_97, %c0_98] : memref<8x2x128xf32, #tpu.memory_space<vmem>>, vector<1x2x128xf32>
    %192 = vector.shape_cast %191 : vector<1x2x128xf32> to vector<2x128xf32>
    %193 = vector.shape_cast %102 : vector<1x128xi1> to vector<1x128xi1>
    %194 = vector.broadcast %193 : vector<1x128xi1> to vector<2x128xi1>
    %195 = arith.select %194, %190, %192 : vector<2x128xi1>, vector<2x128xf32>
    %c1_99 = arith.constant 1 : index
    %c0_100 = arith.constant 0 : index
    %c0_101 = arith.constant 0 : index
    %196 = vector.load %arg8[%c1_99, %c0_100, %c0_101] : memref<8x2x128xf32, #tpu.memory_space<vmem>>, vector<1x2x128xf32>
    %197 = vector.shape_cast %196 : vector<1x2x128xf32> to vector<2x128xf32>
    %198 = vector.shape_cast %195 : vector<2x128xf32> to vector<1x2x128xf32>
    tpu.vector_store %arg8[%c1_99, %c0_100, %c0_101], %198 {strides = array<i32>} : memref<8x2x128xf32, #tpu.memory_space<vmem>>, vector<1x2x128xf32>,
    %c6_102 = arith.constant 6 : index
    %c0_103 = arith.constant 0 : index
    %c0_104 = arith.constant 0 : index
    %199 = vector.load %arg8[%c6_102, %c0_103, %c0_104] : memref<8x2x128xf32, #tpu.memory_space<vmem>>, vector<1x2x128xf32>
    %200 = vector.shape_cast %199 : vector<1x2x128xf32> to vector<2x128xf32>
    %201 = vector.shape_cast %102 : vector<1x128xi1> to vector<1x128xi1>
    %202 = vector.broadcast %201 : vector<1x128xi1> to vector<2x128xi1>
    %203 = arith.select %202, %200, %190 : vector<2x128xi1>, vector<2x128xf32>
    %c6_105 = arith.constant 6 : index
    %c0_106 = arith.constant 0 : index
    %c0_107 = arith.constant 0 : index
    %204 = vector.load %arg8[%c6_105, %c0_106, %c0_107] : memref<8x2x128xf32, #tpu.memory_space<vmem>>, vector<1x2x128xf32>
    %205 = vector.shape_cast %204 : vector<1x2x128xf32> to vector<2x128xf32>
    %206 = vector.shape_cast %203 : vector<2x128xf32> to vector<1x2x128xf32>
    tpu.vector_store %arg8[%c6_105, %c0_106, %c0_107], %206 {strides = array<i32>} : memref<8x2x128xf32, #tpu.memory_space<vmem>>, vector<1x2x128xf32>,
    %c2_108 = arith.constant 2 : index
    %c0_109 = arith.constant 0 : index
    %c0_110 = arith.constant 0 : index
    %207 = vector.load %arg9[%c2_108, %c0_109, %c0_110] : memref<8x2x512xf32, #tpu.memory_space<vmem>>, vector<1x2x512xf32>
    %208 = vector.shape_cast %207 : vector<1x2x512xf32> to vector<2x512xf32>
    %c5_111 = arith.constant 5 : index
    %c0_112 = arith.constant 0 : index
    %c0_113 = arith.constant 0 : index
    %209 = vector.load %arg9[%c5_111, %c0_112, %c0_113] : memref<8x2x512xf32, #tpu.memory_space<vmem>>, vector<1x2x512xf32>
    %210 = vector.shape_cast %209 : vector<1x2x512xf32> to vector<2x512xf32>
    %211 = vector.shape_cast %99 : vector<1x512xi1> to vector<1x512xi1>
    %212 = vector.broadcast %211 : vector<1x512xi1> to vector<2x512xi1>
    %213 = arith.select %212, %208, %210 : vector<2x512xi1>, vector<2x512xf32>
    %214 = arith.truncf %190 : vector<2x128xf32> to vector<2x128xbf16>
    %cst_114 = arith.constant dense<0.000000e+00> : vector<2x512xf32>
    %215 = tpu.matmul %214, %6, %cst_114 {dimension_numbers = #tpu.dot_dimension_numbers<[1], [0], [0], [1], [0, 0, 1, 1], [], []>} : vector<2x128xbf16>, vector<128x512xbf16>, vector<2x512xf32> -> vector<2x512xf32>
    %216 = arith.addf %213, %215 : vector<2x512xf32>
    %217 = vector.extract_strided_slice %216 {offsets = [0, 0], sizes = [2, 128], strides = [1, 1]} : vector<2x512xf32> to vector<2x128xf32>
    %218 = arith.negf %217 : vector<2x128xf32>
    %219 = math.exp %218 : vector<2x128xf32>
    %cst_115 = arith.constant 1.000000e+00 : f32
    %220 = vector.broadcast %cst_115 : f32 to vector<2x128xf32>
    %221 = arith.addf %220, %219 : vector<2x128xf32>
    %222 = arith.divf %220, %221 : vector<2x128xf32>
    %223 = vector.extract_strided_slice %216 {offsets = [0, 128], sizes = [2, 128], strides = [1, 1]} : vector<2x512xf32> to vector<2x128xf32>
    %224 = arith.negf %223 : vector<2x128xf32>
    %225 = math.exp %224 : vector<2x128xf32>
    %cst_116 = arith.constant 1.000000e+00 : f32
    %226 = vector.broadcast %cst_116 : f32 to vector<2x128xf32>
    %227 = arith.addf %226, %225 : vector<2x128xf32>
    %228 = arith.divf %226, %227 : vector<2x128xf32>
    %229 = vector.extract_strided_slice %216 {offsets = [0, 256], sizes = [2, 128], strides = [1, 1]} : vector<2x512xf32> to vector<2x128xf32>
    %230 = math.tanh %229 : vector<2x128xf32>
    %231 = vector.extract_strided_slice %216 {offsets = [0, 384], sizes = [2, 128], strides = [1, 1]} : vector<2x512xf32> to vector<2x128xf32>
    %232 = arith.negf %231 : vector<2x128xf32>
    %233 = math.exp %232 : vector<2x128xf32>
    %cst_117 = arith.constant 1.000000e+00 : f32
    %234 = vector.broadcast %cst_117 : f32 to vector<2x128xf32>
    %235 = arith.addf %234, %233 : vector<2x128xf32>
    %236 = arith.divf %234, %235 : vector<2x128xf32>
    %237 = arith.mulf %228, %188 : vector<2x128xf32>
    %238 = arith.mulf %222, %230 : vector<2x128xf32>
    %239 = arith.addf %237, %238 : vector<2x128xf32>
    %240 = math.tanh %239 : vector<2x128xf32>
    %241 = arith.mulf %236, %240 : vector<2x128xf32>
    %c2_118 = arith.constant 2 : index
    %c0_119 = arith.constant 0 : index
    %c0_120 = arith.constant 0 : index
    %242 = vector.load %arg8[%c2_118, %c0_119, %c0_120] : memref<8x2x128xf32, #tpu.memory_space<vmem>>, vector<1x2x128xf32>
    %243 = vector.shape_cast %242 : vector<1x2x128xf32> to vector<2x128xf32>
    %244 = vector.shape_cast %102 : vector<1x128xi1> to vector<1x128xi1>
    %245 = vector.broadcast %244 : vector<1x128xi1> to vector<2x128xi1>
    %246 = arith.select %245, %241, %243 : vector<2x128xi1>, vector<2x128xf32>
    %c2_121 = arith.constant 2 : index
    %c0_122 = arith.constant 0 : index
    %c0_123 = arith.constant 0 : index
    %247 = vector.load %arg8[%c2_121, %c0_122, %c0_123] : memref<8x2x128xf32, #tpu.memory_space<vmem>>, vector<1x2x128xf32>
    %248 = vector.shape_cast %247 : vector<1x2x128xf32> to vector<2x128xf32>
    %249 = vector.shape_cast %246 : vector<2x128xf32> to vector<1x2x128xf32>
    tpu.vector_store %arg8[%c2_121, %c0_122, %c0_123], %249 {strides = array<i32>} : memref<8x2x128xf32, #tpu.memory_space<vmem>>, vector<1x2x128xf32>,
    %c5_124 = arith.constant 5 : index
    %c0_125 = arith.constant 0 : index
    %c0_126 = arith.constant 0 : index
    %250 = vector.load %arg8[%c5_124, %c0_125, %c0_126] : memref<8x2x128xf32, #tpu.memory_space<vmem>>, vector<1x2x128xf32>
    %251 = vector.shape_cast %250 : vector<1x2x128xf32> to vector<2x128xf32>
    %252 = vector.shape_cast %102 : vector<1x128xi1> to vector<1x128xi1>
    %253 = vector.broadcast %252 : vector<1x128xi1> to vector<2x128xi1>
    %254 = arith.select %253, %251, %241 : vector<2x128xi1>, vector<2x128xf32>
    %c5_127 = arith.constant 5 : index
    %c0_128 = arith.constant 0 : index
    %c0_129 = arith.constant 0 : index
    %255 = vector.load %arg8[%c5_127, %c0_128, %c0_129] : memref<8x2x128xf32, #tpu.memory_space<vmem>>, vector<1x2x128xf32>
    %256 = vector.shape_cast %255 : vector<1x2x128xf32> to vector<2x128xf32>
    %257 = vector.shape_cast %254 : vector<2x128xf32> to vector<1x2x128xf32>
    tpu.vector_store %arg8[%c5_127, %c0_128, %c0_129], %257 {strides = array<i32>} : memref<8x2x128xf32, #tpu.memory_space<vmem>>, vector<1x2x128xf32>,
    %c3_130 = arith.constant 3 : index
    %c0_131 = arith.constant 0 : index
    %c0_132 = arith.constant 0 : index
    %258 = vector.load %arg9[%c3_130, %c0_131, %c0_132] : memref<8x2x512xf32, #tpu.memory_space<vmem>>, vector<1x2x512xf32>
    %259 = vector.shape_cast %258 : vector<1x2x512xf32> to vector<2x512xf32>
    %c4_133 = arith.constant 4 : index
    %c0_134 = arith.constant 0 : index
    %c0_135 = arith.constant 0 : index
    %260 = vector.load %arg9[%c4_133, %c0_134, %c0_135] : memref<8x2x512xf32, #tpu.memory_space<vmem>>, vector<1x2x512xf32>
    %261 = vector.shape_cast %260 : vector<1x2x512xf32> to vector<2x512xf32>
    %262 = vector.shape_cast %99 : vector<1x512xi1> to vector<1x512xi1>
    %263 = vector.broadcast %262 : vector<1x512xi1> to vector<2x512xi1>
    %264 = arith.select %263, %259, %261 : vector<2x512xi1>, vector<2x512xf32>
    %265 = arith.truncf %241 : vector<2x128xf32> to vector<2x128xbf16>
    %cst_136 = arith.constant dense<0.000000e+00> : vector<2x512xf32>
    %266 = tpu.matmul %265, %6, %cst_136 {dimension_numbers = #tpu.dot_dimension_numbers<[1], [0], [0], [1], [0, 0, 1, 1], [], []>} : vector<2x128xbf16>, vector<128x512xbf16>, vector<2x512xf32> -> vector<2x512xf32>
    %267 = arith.addf %264, %266 : vector<2x512xf32>
    %268 = vector.extract_strided_slice %267 {offsets = [0, 0], sizes = [2, 128], strides = [1, 1]} : vector<2x512xf32> to vector<2x128xf32>
    %269 = arith.negf %268 : vector<2x128xf32>
    %270 = math.exp %269 : vector<2x128xf32>
    %cst_137 = arith.constant 1.000000e+00 : f32
    %271 = vector.broadcast %cst_137 : f32 to vector<2x128xf32>
    %272 = arith.addf %271, %270 : vector<2x128xf32>
    %273 = arith.divf %271, %272 : vector<2x128xf32>
    %274 = vector.extract_strided_slice %267 {offsets = [0, 128], sizes = [2, 128], strides = [1, 1]} : vector<2x512xf32> to vector<2x128xf32>
    %275 = arith.negf %274 : vector<2x128xf32>
    %276 = math.exp %275 : vector<2x128xf32>
    %cst_138 = arith.constant 1.000000e+00 : f32
    %277 = vector.broadcast %cst_138 : f32 to vector<2x128xf32>
    %278 = arith.addf %277, %276 : vector<2x128xf32>
    %279 = arith.divf %277, %278 : vector<2x128xf32>
    %280 = vector.extract_strided_slice %267 {offsets = [0, 256], sizes = [2, 128], strides = [1, 1]} : vector<2x512xf32> to vector<2x128xf32>
    %281 = math.tanh %280 : vector<2x128xf32>
    %282 = vector.extract_strided_slice %267 {offsets = [0, 384], sizes = [2, 128], strides = [1, 1]} : vector<2x512xf32> to vector<2x128xf32>
    %283 = arith.negf %282 : vector<2x128xf32>
    %284 = math.exp %283 : vector<2x128xf32>
    %cst_139 = arith.constant 1.000000e+00 : f32
    %285 = vector.broadcast %cst_139 : f32 to vector<2x128xf32>
    %286 = arith.addf %285, %284 : vector<2x128xf32>
    %287 = arith.divf %285, %286 : vector<2x128xf32>
    %288 = arith.mulf %279, %239 : vector<2x128xf32>
    %289 = arith.mulf %273, %281 : vector<2x128xf32>
    %290 = arith.addf %288, %289 : vector<2x128xf32>
    %291 = math.tanh %290 : vector<2x128xf32>
    %292 = arith.mulf %287, %291 : vector<2x128xf32>
    %c3_140 = arith.constant 3 : index
    %c0_141 = arith.constant 0 : index
    %c0_142 = arith.constant 0 : index
    %293 = vector.load %arg8[%c3_140, %c0_141, %c0_142] : memref<8x2x128xf32, #tpu.memory_space<vmem>>, vector<1x2x128xf32>
    %294 = vector.shape_cast %293 : vector<1x2x128xf32> to vector<2x128xf32>
    %295 = vector.shape_cast %102 : vector<1x128xi1> to vector<1x128xi1>
    %296 = vector.broadcast %295 : vector<1x128xi1> to vector<2x128xi1>
    %297 = arith.select %296, %292, %294 : vector<2x128xi1>, vector<2x128xf32>
    %c3_143 = arith.constant 3 : index
    %c0_144 = arith.constant 0 : index
    %c0_145 = arith.constant 0 : index
    %298 = vector.load %arg8[%c3_143, %c0_144, %c0_145] : memref<8x2x128xf32, #tpu.memory_space<vmem>>, vector<1x2x128xf32>
    %299 = vector.shape_cast %298 : vector<1x2x128xf32> to vector<2x128xf32>
    %300 = vector.shape_cast %297 : vector<2x128xf32> to vector<1x2x128xf32>
    tpu.vector_store %arg8[%c3_143, %c0_144, %c0_145], %300 {strides = array<i32>} : memref<8x2x128xf32, #tpu.memory_space<vmem>>, vector<1x2x128xf32>,
    %c4_146 = arith.constant 4 : index
    %c0_147 = arith.constant 0 : index
    %c0_148 = arith.constant 0 : index
    %301 = vector.load %arg8[%c4_146, %c0_147, %c0_148] : memref<8x2x128xf32, #tpu.memory_space<vmem>>, vector<1x2x128xf32>
    %302 = vector.shape_cast %301 : vector<1x2x128xf32> to vector<2x128xf32>
    %303 = vector.shape_cast %102 : vector<1x128xi1> to vector<1x128xi1>
    %304 = vector.broadcast %303 : vector<1x128xi1> to vector<2x128xi1>
    %305 = arith.select %304, %302, %292 : vector<2x128xi1>, vector<2x128xf32>
    %c4_149 = arith.constant 4 : index
    %c0_150 = arith.constant 0 : index
    %c0_151 = arith.constant 0 : index
    %306 = vector.load %arg8[%c4_149, %c0_150, %c0_151] : memref<8x2x128xf32, #tpu.memory_space<vmem>>, vector<1x2x128xf32>
    %307 = vector.shape_cast %306 : vector<1x2x128xf32> to vector<2x128xf32>
    %308 = vector.shape_cast %305 : vector<2x128xf32> to vector<1x2x128xf32>
    tpu.vector_store %arg8[%c4_149, %c0_150, %c0_151], %308 {strides = array<i32>} : memref<8x2x128xf32, #tpu.memory_space<vmem>>, vector<1x2x128xf32>,
    %c4_152 = arith.constant 4 : index
    %c0_153 = arith.constant 0 : index
    %c0_154 = arith.constant 0 : index
    %309 = vector.load %arg9[%c4_152, %c0_153, %c0_154] : memref<8x2x512xf32, #tpu.memory_space<vmem>>, vector<1x2x512xf32>
    %310 = vector.shape_cast %309 : vector<1x2x512xf32> to vector<2x512xf32>
    %c3_155 = arith.constant 3 : index
    %c0_156 = arith.constant 0 : index
    %c0_157 = arith.constant 0 : index
    %311 = vector.load %arg9[%c3_155, %c0_156, %c0_157] : memref<8x2x512xf32, #tpu.memory_space<vmem>>, vector<1x2x512xf32>
    %312 = vector.shape_cast %311 : vector<1x2x512xf32> to vector<2x512xf32>
    %313 = vector.shape_cast %99 : vector<1x512xi1> to vector<1x512xi1>
    %314 = vector.broadcast %313 : vector<1x512xi1> to vector<2x512xi1>
    %315 = arith.select %314, %310, %312 : vector<2x512xi1>, vector<2x512xf32>
    %316 = arith.truncf %292 : vector<2x128xf32> to vector<2x128xbf16>
    %cst_158 = arith.constant dense<0.000000e+00> : vector<2x512xf32>
    %317 = tpu.matmul %316, %6, %cst_158 {dimension_numbers = #tpu.dot_dimension_numbers<[1], [0], [0], [1], [0, 0, 1, 1], [], []>} : vector<2x128xbf16>, vector<128x512xbf16>, vector<2x512xf32> -> vector<2x512xf32>
    %318 = arith.addf %315, %317 : vector<2x512xf32>
    %319 = vector.extract_strided_slice %318 {offsets = [0, 0], sizes = [2, 128], strides = [1, 1]} : vector<2x512xf32> to vector<2x128xf32>
    %320 = arith.negf %319 : vector<2x128xf32>
    %321 = math.exp %320 : vector<2x128xf32>
    %cst_159 = arith.constant 1.000000e+00 : f32
    %322 = vector.broadcast %cst_159 : f32 to vector<2x128xf32>
    %323 = arith.addf %322, %321 : vector<2x128xf32>
    %324 = arith.divf %322, %323 : vector<2x128xf32>
    %325 = vector.extract_strided_slice %318 {offsets = [0, 128], sizes = [2, 128], strides = [1, 1]} : vector<2x512xf32> to vector<2x128xf32>
    %326 = arith.negf %325 : vector<2x128xf32>
    %327 = math.exp %326 : vector<2x128xf32>
    %cst_160 = arith.constant 1.000000e+00 : f32
    %328 = vector.broadcast %cst_160 : f32 to vector<2x128xf32>
    %329 = arith.addf %328, %327 : vector<2x128xf32>
    %330 = arith.divf %328, %329 : vector<2x128xf32>
    %331 = vector.extract_strided_slice %318 {offsets = [0, 256], sizes = [2, 128], strides = [1, 1]} : vector<2x512xf32> to vector<2x128xf32>
    %332 = math.tanh %331 : vector<2x128xf32>
    %333 = vector.extract_strided_slice %318 {offsets = [0, 384], sizes = [2, 128], strides = [1, 1]} : vector<2x512xf32> to vector<2x128xf32>
    %334 = arith.negf %333 : vector<2x128xf32>
    %335 = math.exp %334 : vector<2x128xf32>
    %cst_161 = arith.constant 1.000000e+00 : f32
    %336 = vector.broadcast %cst_161 : f32 to vector<2x128xf32>
    %337 = arith.addf %336, %335 : vector<2x128xf32>
    %338 = arith.divf %336, %337 : vector<2x128xf32>
    %339 = arith.mulf %330, %290 : vector<2x128xf32>
    %340 = arith.mulf %324, %332 : vector<2x128xf32>
    %341 = arith.addf %339, %340 : vector<2x128xf32>
    %342 = math.tanh %341 : vector<2x128xf32>
    %343 = arith.mulf %338, %342 : vector<2x128xf32>
    %c4_162 = arith.constant 4 : index
    %c0_163 = arith.constant 0 : index
    %c0_164 = arith.constant 0 : index
    %344 = vector.load %arg8[%c4_162, %c0_163, %c0_164] : memref<8x2x128xf32, #tpu.memory_space<vmem>>, vector<1x2x128xf32>
    %345 = vector.shape_cast %344 : vector<1x2x128xf32> to vector<2x128xf32>
    %346 = vector.shape_cast %102 : vector<1x128xi1> to vector<1x128xi1>
    %347 = vector.broadcast %346 : vector<1x128xi1> to vector<2x128xi1>
    %348 = arith.select %347, %343, %345 : vector<2x128xi1>, vector<2x128xf32>
    %c4_165 = arith.constant 4 : index
    %c0_166 = arith.constant 0 : index
    %c0_167 = arith.constant 0 : index
    %349 = vector.load %arg8[%c4_165, %c0_166, %c0_167] : memref<8x2x128xf32, #tpu.memory_space<vmem>>, vector<1x2x128xf32>
    %350 = vector.shape_cast %349 : vector<1x2x128xf32> to vector<2x128xf32>
    %351 = vector.shape_cast %348 : vector<2x128xf32> to vector<1x2x128xf32>
    tpu.vector_store %arg8[%c4_165, %c0_166, %c0_167], %351 {strides = array<i32>} : memref<8x2x128xf32, #tpu.memory_space<vmem>>, vector<1x2x128xf32>,
    %c3_168 = arith.constant 3 : index
    %c0_169 = arith.constant 0 : index
    %c0_170 = arith.constant 0 : index
    %352 = vector.load %arg8[%c3_168, %c0_169, %c0_170] : memref<8x2x128xf32, #tpu.memory_space<vmem>>, vector<1x2x128xf32>
    %353 = vector.shape_cast %352 : vector<1x2x128xf32> to vector<2x128xf32>
    %354 = vector.shape_cast %102 : vector<1x128xi1> to vector<1x128xi1>
    %355 = vector.broadcast %354 : vector<1x128xi1> to vector<2x128xi1>
    %356 = arith.select %355, %353, %343 : vector<2x128xi1>, vector<2x128xf32>
    %c3_171 = arith.constant 3 : index
    %c0_172 = arith.constant 0 : index
    %c0_173 = arith.constant 0 : index
    %357 = vector.load %arg8[%c3_171, %c0_172, %c0_173] : memref<8x2x128xf32, #tpu.memory_space<vmem>>, vector<1x2x128xf32>
    %358 = vector.shape_cast %357 : vector<1x2x128xf32> to vector<2x128xf32>
    %359 = vector.shape_cast %356 : vector<2x128xf32> to vector<1x2x128xf32>
    tpu.vector_store %arg8[%c3_171, %c0_172, %c0_173], %359 {strides = array<i32>} : memref<8x2x128xf32, #tpu.memory_space<vmem>>, vector<1x2x128xf32>,
    %c5_174 = arith.constant 5 : index
    %c0_175 = arith.constant 0 : index
    %c0_176 = arith.constant 0 : index
    %360 = vector.load %arg9[%c5_174, %c0_175, %c0_176] : memref<8x2x512xf32, #tpu.memory_space<vmem>>, vector<1x2x512xf32>
    %361 = vector.shape_cast %360 : vector<1x2x512xf32> to vector<2x512xf32>
    %c2_177 = arith.constant 2 : index
    %c0_178 = arith.constant 0 : index
    %c0_179 = arith.constant 0 : index
    %362 = vector.load %arg9[%c2_177, %c0_178, %c0_179] : memref<8x2x512xf32, #tpu.memory_space<vmem>>, vector<1x2x512xf32>
    %363 = vector.shape_cast %362 : vector<1x2x512xf32> to vector<2x512xf32>
    %364 = vector.shape_cast %99 : vector<1x512xi1> to vector<1x512xi1>
    %365 = vector.broadcast %364 : vector<1x512xi1> to vector<2x512xi1>
    %366 = arith.select %365, %361, %363 : vector<2x512xi1>, vector<2x512xf32>
    %367 = arith.truncf %343 : vector<2x128xf32> to vector<2x128xbf16>
    %cst_180 = arith.constant dense<0.000000e+00> : vector<2x512xf32>
    %368 = tpu.matmul %367, %6, %cst_180 {dimension_numbers = #tpu.dot_dimension_numbers<[1], [0], [0], [1], [0, 0, 1, 1], [], []>} : vector<2x128xbf16>, vector<128x512xbf16>, vector<2x512xf32> -> vector<2x512xf32>
    %369 = arith.addf %366, %368 : vector<2x512xf32>
    %370 = vector.extract_strided_slice %369 {offsets = [0, 0], sizes = [2, 128], strides = [1, 1]} : vector<2x512xf32> to vector<2x128xf32>
    %371 = arith.negf %370 : vector<2x128xf32>
    %372 = math.exp %371 : vector<2x128xf32>
    %cst_181 = arith.constant 1.000000e+00 : f32
    %373 = vector.broadcast %cst_181 : f32 to vector<2x128xf32>
    %374 = arith.addf %373, %372 : vector<2x128xf32>
    %375 = arith.divf %373, %374 : vector<2x128xf32>
    %376 = vector.extract_strided_slice %369 {offsets = [0, 128], sizes = [2, 128], strides = [1, 1]} : vector<2x512xf32> to vector<2x128xf32>
    %377 = arith.negf %376 : vector<2x128xf32>
    %378 = math.exp %377 : vector<2x128xf32>
    %cst_182 = arith.constant 1.000000e+00 : f32
    %379 = vector.broadcast %cst_182 : f32 to vector<2x128xf32>
    %380 = arith.addf %379, %378 : vector<2x128xf32>
    %381 = arith.divf %379, %380 : vector<2x128xf32>
    %382 = vector.extract_strided_slice %369 {offsets = [0, 256], sizes = [2, 128], strides = [1, 1]} : vector<2x512xf32> to vector<2x128xf32>
    %383 = math.tanh %382 : vector<2x128xf32>
    %384 = vector.extract_strided_slice %369 {offsets = [0, 384], sizes = [2, 128], strides = [1, 1]} : vector<2x512xf32> to vector<2x128xf32>
    %385 = arith.negf %384 : vector<2x128xf32>
    %386 = math.exp %385 : vector<2x128xf32>
    %cst_183 = arith.constant 1.000000e+00 : f32
    %387 = vector.broadcast %cst_183 : f32 to vector<2x128xf32>
    %388 = arith.addf %387, %386 : vector<2x128xf32>
    %389 = arith.divf %387, %388 : vector<2x128xf32>
    %390 = arith.mulf %381, %341 : vector<2x128xf32>
    %391 = arith.mulf %375, %383 : vector<2x128xf32>
    %392 = arith.addf %390, %391 : vector<2x128xf32>
    %393 = math.tanh %392 : vector<2x128xf32>
    %394 = arith.mulf %389, %393 : vector<2x128xf32>
    %c5_184 = arith.constant 5 : index
    %c0_185 = arith.constant 0 : index
    %c0_186 = arith.constant 0 : index
    %395 = vector.load %arg8[%c5_184, %c0_185, %c0_186] : memref<8x2x128xf32, #tpu.memory_space<vmem>>, vector<1x2x128xf32>
    %396 = vector.shape_cast %395 : vector<1x2x128xf32> to vector<2x128xf32>
    %397 = vector.shape_cast %102 : vector<1x128xi1> to vector<1x128xi1>
    %398 = vector.broadcast %397 : vector<1x128xi1> to vector<2x128xi1>
    %399 = arith.select %398, %394, %396 : vector<2x128xi1>, vector<2x128xf32>
    %c5_187 = arith.constant 5 : index
    %c0_188 = arith.constant 0 : index
    %c0_189 = arith.constant 0 : index
    %400 = vector.load %arg8[%c5_187, %c0_188, %c0_189] : memref<8x2x128xf32, #tpu.memory_space<vmem>>, vector<1x2x128xf32>
    %401 = vector.shape_cast %400 : vector<1x2x128xf32> to vector<2x128xf32>
    %402 = vector.shape_cast %399 : vector<2x128xf32> to vector<1x2x128xf32>
    tpu.vector_store %arg8[%c5_187, %c0_188, %c0_189], %402 {strides = array<i32>} : memref<8x2x128xf32, #tpu.memory_space<vmem>>, vector<1x2x128xf32>,
    %c2_190 = arith.constant 2 : index
    %c0_191 = arith.constant 0 : index
    %c0_192 = arith.constant 0 : index
    %403 = vector.load %arg8[%c2_190, %c0_191, %c0_192] : memref<8x2x128xf32, #tpu.memory_space<vmem>>, vector<1x2x128xf32>
    %404 = vector.shape_cast %403 : vector<1x2x128xf32> to vector<2x128xf32>
    %405 = vector.shape_cast %102 : vector<1x128xi1> to vector<1x128xi1>
    %406 = vector.broadcast %405 : vector<1x128xi1> to vector<2x128xi1>
    %407 = arith.select %406, %404, %394 : vector<2x128xi1>, vector<2x128xf32>
    %c2_193 = arith.constant 2 : index
    %c0_194 = arith.constant 0 : index
    %c0_195 = arith.constant 0 : index
    %408 = vector.load %arg8[%c2_193, %c0_194, %c0_195] : memref<8x2x128xf32, #tpu.memory_space<vmem>>, vector<1x2x128xf32>
    %409 = vector.shape_cast %408 : vector<1x2x128xf32> to vector<2x128xf32>
    %410 = vector.shape_cast %407 : vector<2x128xf32> to vector<1x2x128xf32>
    tpu.vector_store %arg8[%c2_193, %c0_194, %c0_195], %410 {strides = array<i32>} : memref<8x2x128xf32, #tpu.memory_space<vmem>>, vector<1x2x128xf32>,
    %c6_196 = arith.constant 6 : index
    %c0_197 = arith.constant 0 : index
    %c0_198 = arith.constant 0 : index
    %411 = vector.load %arg9[%c6_196, %c0_197, %c0_198] : memref<8x2x512xf32, #tpu.memory_space<vmem>>, vector<1x2x512xf32>
    %412 = vector.shape_cast %411 : vector<1x2x512xf32> to vector<2x512xf32>
    %c1_199 = arith.constant 1 : index
    %c0_200 = arith.constant 0 : index
    %c0_201 = arith.constant 0 : index
    %413 = vector.load %arg9[%c1_199, %c0_200, %c0_201] : memref<8x2x512xf32, #tpu.memory_space<vmem>>, vector<1x2x512xf32>
    %414 = vector.shape_cast %413 : vector<1x2x512xf32> to vector<2x512xf32>
    %415 = vector.shape_cast %99 : vector<1x512xi1> to vector<1x512xi1>
    %416 = vector.broadcast %415 : vector<1x512xi1> to vector<2x512xi1>
    %417 = arith.select %416, %412, %414 : vector<2x512xi1>, vector<2x512xf32>
    %418 = arith.truncf %394 : vector<2x128xf32> to vector<2x128xbf16>
    %cst_202 = arith.constant dense<0.000000e+00> : vector<2x512xf32>
    %419 = tpu.matmul %418, %6, %cst_202 {dimension_numbers = #tpu.dot_dimension_numbers<[1], [0], [0], [1], [0, 0, 1, 1], [], []>} : vector<2x128xbf16>, vector<128x512xbf16>, vector<2x512xf32> -> vector<2x512xf32>
    %420 = arith.addf %417, %419 : vector<2x512xf32>
    %421 = vector.extract_strided_slice %420 {offsets = [0, 0], sizes = [2, 128], strides = [1, 1]} : vector<2x512xf32> to vector<2x128xf32>
    %422 = arith.negf %421 : vector<2x128xf32>
    %423 = math.exp %422 : vector<2x128xf32>
    %cst_203 = arith.constant 1.000000e+00 : f32
    %424 = vector.broadcast %cst_203 : f32 to vector<2x128xf32>
    %425 = arith.addf %424, %423 : vector<2x128xf32>
    %426 = arith.divf %424, %425 : vector<2x128xf32>
    %427 = vector.extract_strided_slice %420 {offsets = [0, 128], sizes = [2, 128], strides = [1, 1]} : vector<2x512xf32> to vector<2x128xf32>
    %428 = arith.negf %427 : vector<2x128xf32>
    %429 = math.exp %428 : vector<2x128xf32>
    %cst_204 = arith.constant 1.000000e+00 : f32
    %430 = vector.broadcast %cst_204 : f32 to vector<2x128xf32>
    %431 = arith.addf %430, %429 : vector<2x128xf32>
    %432 = arith.divf %430, %431 : vector<2x128xf32>
    %433 = vector.extract_strided_slice %420 {offsets = [0, 256], sizes = [2, 128], strides = [1, 1]} : vector<2x512xf32> to vector<2x128xf32>
    %434 = math.tanh %433 : vector<2x128xf32>
    %435 = vector.extract_strided_slice %420 {offsets = [0, 384], sizes = [2, 128], strides = [1, 1]} : vector<2x512xf32> to vector<2x128xf32>
    %436 = arith.negf %435 : vector<2x128xf32>
    %437 = math.exp %436 : vector<2x128xf32>
    %cst_205 = arith.constant 1.000000e+00 : f32
    %438 = vector.broadcast %cst_205 : f32 to vector<2x128xf32>
    %439 = arith.addf %438, %437 : vector<2x128xf32>
    %440 = arith.divf %438, %439 : vector<2x128xf32>
    %441 = arith.mulf %432, %392 : vector<2x128xf32>
    %442 = arith.mulf %426, %434 : vector<2x128xf32>
    %443 = arith.addf %441, %442 : vector<2x128xf32>
    %444 = math.tanh %443 : vector<2x128xf32>
    %445 = arith.mulf %440, %444 : vector<2x128xf32>
    %c6_206 = arith.constant 6 : index
    %c0_207 = arith.constant 0 : index
    %c0_208 = arith.constant 0 : index
    %446 = vector.load %arg8[%c6_206, %c0_207, %c0_208] : memref<8x2x128xf32, #tpu.memory_space<vmem>>, vector<1x2x128xf32>
    %447 = vector.shape_cast %446 : vector<1x2x128xf32> to vector<2x128xf32>
    %448 = vector.shape_cast %102 : vector<1x128xi1> to vector<1x128xi1>
    %449 = vector.broadcast %448 : vector<1x128xi1> to vector<2x128xi1>
    %450 = arith.select %449, %445, %447 : vector<2x128xi1>, vector<2x128xf32>
    %c6_209 = arith.constant 6 : index
    %c0_210 = arith.constant 0 : index
    %c0_211 = arith.constant 0 : index
    %451 = vector.load %arg8[%c6_209, %c0_210, %c0_211] : memref<8x2x128xf32, #tpu.memory_space<vmem>>, vector<1x2x128xf32>
    %452 = vector.shape_cast %451 : vector<1x2x128xf32> to vector<2x128xf32>
    %453 = vector.shape_cast %450 : vector<2x128xf32> to vector<1x2x128xf32>
    tpu.vector_store %arg8[%c6_209, %c0_210, %c0_211], %453 {strides = array<i32>} : memref<8x2x128xf32, #tpu.memory_space<vmem>>, vector<1x2x128xf32>,
    %c1_212 = arith.constant 1 : index
    %c0_213 = arith.constant 0 : index
    %c0_214 = arith.constant 0 : index
    %454 = vector.load %arg8[%c1_212, %c0_213, %c0_214] : memref<8x2x128xf32, #tpu.memory_space<vmem>>, vector<1x2x128xf32>
    %455 = vector.shape_cast %454 : vector<1x2x128xf32> to vector<2x128xf32>
    %456 = vector.shape_cast %102 : vector<1x128xi1> to vector<1x128xi1>
    %457 = vector.broadcast %456 : vector<1x128xi1> to vector<2x128xi1>
    %458 = arith.select %457, %455, %445 : vector<2x128xi1>, vector<2x128xf32>
    %c1_215 = arith.constant 1 : index
    %c0_216 = arith.constant 0 : index
    %c0_217 = arith.constant 0 : index
    %459 = vector.load %arg8[%c1_215, %c0_216, %c0_217] : memref<8x2x128xf32, #tpu.memory_space<vmem>>, vector<1x2x128xf32>
    %460 = vector.shape_cast %459 : vector<1x2x128xf32> to vector<2x128xf32>
    %461 = vector.shape_cast %458 : vector<2x128xf32> to vector<1x2x128xf32>
    tpu.vector_store %arg8[%c1_215, %c0_216, %c0_217], %461 {strides = array<i32>} : memref<8x2x128xf32, #tpu.memory_space<vmem>>, vector<1x2x128xf32>,
    %c7_218 = arith.constant 7 : index
    %c0_219 = arith.constant 0 : index
    %c0_220 = arith.constant 0 : index
    %462 = vector.load %arg9[%c7_218, %c0_219, %c0_220] : memref<8x2x512xf32, #tpu.memory_space<vmem>>, vector<1x2x512xf32>
    %463 = vector.shape_cast %462 : vector<1x2x512xf32> to vector<2x512xf32>
    %c0_221 = arith.constant 0 : index
    %c0_222 = arith.constant 0 : index
    %c0_223 = arith.constant 0 : index
    %464 = vector.load %arg9[%c0_221, %c0_222, %c0_223] : memref<8x2x512xf32, #tpu.memory_space<vmem>>, vector<1x2x512xf32>
    %465 = vector.shape_cast %464 : vector<1x2x512xf32> to vector<2x512xf32>
    %466 = vector.shape_cast %99 : vector<1x512xi1> to vector<1x512xi1>
    %467 = vector.broadcast %466 : vector<1x512xi1> to vector<2x512xi1>
    %468 = arith.select %467, %463, %465 : vector<2x512xi1>, vector<2x512xf32>
    %469 = arith.truncf %445 : vector<2x128xf32> to vector<2x128xbf16>
    %cst_224 = arith.constant dense<0.000000e+00> : vector<2x512xf32>
    %470 = tpu.matmul %469, %6, %cst_224 {dimension_numbers = #tpu.dot_dimension_numbers<[1], [0], [0], [1], [0, 0, 1, 1], [], []>} : vector<2x128xbf16>, vector<128x512xbf16>, vector<2x512xf32> -> vector<2x512xf32>
    %471 = arith.addf %468, %470 : vector<2x512xf32>
    %472 = vector.extract_strided_slice %471 {offsets = [0, 0], sizes = [2, 128], strides = [1, 1]} : vector<2x512xf32> to vector<2x128xf32>
    %473 = arith.negf %472 : vector<2x128xf32>
    %474 = math.exp %473 : vector<2x128xf32>
    %cst_225 = arith.constant 1.000000e+00 : f32
    %475 = vector.broadcast %cst_225 : f32 to vector<2x128xf32>
    %476 = arith.addf %475, %474 : vector<2x128xf32>
    %477 = arith.divf %475, %476 : vector<2x128xf32>
    %478 = vector.extract_strided_slice %471 {offsets = [0, 128], sizes = [2, 128], strides = [1, 1]} : vector<2x512xf32> to vector<2x128xf32>
    %479 = arith.negf %478 : vector<2x128xf32>
    %480 = math.exp %479 : vector<2x128xf32>
    %cst_226 = arith.constant 1.000000e+00 : f32
    %481 = vector.broadcast %cst_226 : f32 to vector<2x128xf32>
    %482 = arith.addf %481, %480 : vector<2x128xf32>
    %483 = arith.divf %481, %482 : vector<2x128xf32>
    %484 = vector.extract_strided_slice %471 {offsets = [0, 256], sizes = [2, 128], strides = [1, 1]} : vector<2x512xf32> to vector<2x128xf32>
    %485 = math.tanh %484 : vector<2x128xf32>
    %486 = vector.extract_strided_slice %471 {offsets = [0, 384], sizes = [2, 128], strides = [1, 1]} : vector<2x512xf32> to vector<2x128xf32>
    %487 = arith.negf %486 : vector<2x128xf32>
    %488 = math.exp %487 : vector<2x128xf32>
    %cst_227 = arith.constant 1.000000e+00 : f32
    %489 = vector.broadcast %cst_227 : f32 to vector<2x128xf32>
    %490 = arith.addf %489, %488 : vector<2x128xf32>
    %491 = arith.divf %489, %490 : vector<2x128xf32>
    %492 = arith.mulf %483, %443 : vector<2x128xf32>
    %493 = arith.mulf %477, %485 : vector<2x128xf32>
    %494 = arith.addf %492, %493 : vector<2x128xf32>
    %495 = math.tanh %494 : vector<2x128xf32>
    %496 = arith.mulf %491, %495 : vector<2x128xf32>
    %c7_228 = arith.constant 7 : index
    %c0_229 = arith.constant 0 : index
    %c0_230 = arith.constant 0 : index
    %497 = vector.load %arg8[%c7_228, %c0_229, %c0_230] : memref<8x2x128xf32, #tpu.memory_space<vmem>>, vector<1x2x128xf32>
    %498 = vector.shape_cast %497 : vector<1x2x128xf32> to vector<2x128xf32>
    %499 = vector.shape_cast %102 : vector<1x128xi1> to vector<1x128xi1>
    %500 = vector.broadcast %499 : vector<1x128xi1> to vector<2x128xi1>
    %501 = arith.select %500, %496, %498 : vector<2x128xi1>, vector<2x128xf32>
    %c7_231 = arith.constant 7 : index
    %c0_232 = arith.constant 0 : index
    %c0_233 = arith.constant 0 : index
    %502 = vector.load %arg8[%c7_231, %c0_232, %c0_233] : memref<8x2x128xf32, #tpu.memory_space<vmem>>, vector<1x2x128xf32>
    %503 = vector.shape_cast %502 : vector<1x2x128xf32> to vector<2x128xf32>
    %504 = vector.shape_cast %501 : vector<2x128xf32> to vector<1x2x128xf32>
    tpu.vector_store %arg8[%c7_231, %c0_232, %c0_233], %504 {strides = array<i32>} : memref<8x2x128xf32, #tpu.memory_space<vmem>>, vector<1x2x128xf32>,
    %c0_234 = arith.constant 0 : index
    %c0_235 = arith.constant 0 : index
    %c0_236 = arith.constant 0 : index
    %505 = vector.load %arg8[%c0_234, %c0_235, %c0_236] : memref<8x2x128xf32, #tpu.memory_space<vmem>>, vector<1x2x128xf32>
    %506 = vector.shape_cast %505 : vector<1x2x128xf32> to vector<2x128xf32>
    %507 = vector.shape_cast %102 : vector<1x128xi1> to vector<1x128xi1>
    %508 = vector.broadcast %507 : vector<1x128xi1> to vector<2x128xi1>
    %509 = arith.select %508, %506, %496 : vector<2x128xi1>, vector<2x128xf32>
    %c0_237 = arith.constant 0 : index
    %c0_238 = arith.constant 0 : index
    %c0_239 = arith.constant 0 : index
    %510 = vector.load %arg8[%c0_237, %c0_238, %c0_239] : memref<8x2x128xf32, #tpu.memory_space<vmem>>, vector<1x2x128xf32>
    %511 = vector.shape_cast %510 : vector<1x2x128xf32> to vector<2x128xf32>
    %512 = vector.shape_cast %509 : vector<2x128xf32> to vector<1x2x128xf32>
    tpu.vector_store %arg8[%c0_237, %c0_238, %c0_239], %512 {strides = array<i32>} : memref<8x2x128xf32, #tpu.memory_space<vmem>>, vector<1x2x128xf32>,
    %c9_i32 = arith.constant 9 : i32
    %513 = arith.cmpi eq, %arg0, %c9_i32 : i32
    %514 = arith.extui %513 : i1 to i32
    %c0_i32_240 = arith.constant 0 : i32
    %515 = arith.cmpi ne, %514, %c0_i32_240 : i32
    scf.if %515 {
      %c7_241 = arith.constant 7 : index
      %c0_242 = arith.constant 0 : index
      %c0_243 = arith.constant 0 : index
      %516 = vector.load %arg8[%c7_241, %c0_242, %c0_243] : memref<8x2x128xf32, #tpu.memory_space<vmem>>, vector<1x2x128xf32>
      %517 = vector.shape_cast %516 : vector<1x2x128xf32> to vector<2x128xf32>
      %c0_244 = arith.constant 0 : index
      %c0_245 = arith.constant 0 : index
      %518 = vector.load %arg5[%c0_244, %c0_245] : memref<128x16xf32, #tpu.memory_space<vmem>>, vector<128x16xf32>
      %cst_246 = arith.constant dense<0.000000e+00> : vector<2x16xf32>
      %519 = tpu.matmul %517, %518, %cst_246 {dimension_numbers = #tpu.dot_dimension_numbers<[1], [0], [0], [1], [0, 0, 1, 1], [], []>} : vector<2x128xf32>, vector<128x16xf32>, vector<2x16xf32> -> vector<2x16xf32>
      %c0_247 = arith.constant 0 : index
      %c0_248 = arith.constant 0 : index
      %520 = vector.load %arg6[%c0_247, %c0_248] : memref<1x16xf32, #tpu.memory_space<vmem>>, vector<1x16xf32>
      %521 = vector.broadcast %520 : vector<1x16xf32> to vector<2x16xf32>
      %522 = arith.addf %519, %521 : vector<2x16xf32>
      %c0_249 = arith.constant 0 : index
      %c0_250 = arith.constant 0 : index
      %523 = vector.load %arg7[%c0_249, %c0_250] : memref<2x16xf32, #tpu.memory_space<vmem>>, vector<2x16xf32>
      tpu.vector_store %arg7[%c0_249, %c0_250], %522 {strides = array<i32>} : memref<2x16xf32, #tpu.memory_space<vmem>>, vector<2x16xf32>,
    } else {
    }
    return
  }
  func.func @transform_0(%arg0: i32) -> (i32, i32, i32) {
    %c0_i32 = arith.constant 0 : i32
    %c0_i32_0 = arith.constant 0 : i32
    %c0_i32_1 = arith.constant 0 : i32
    %c0_i32_2 = arith.constant 0 : i32
    return %c0_i32, %c0_i32_0, %c0_i32_1 : i32, i32, i32
  }
  func.func @transform_1(%arg0: i32) -> (i32, i32, i32) {
    %c0_i32 = arith.constant 0 : i32
    %c0_i32_0 = arith.constant 0 : i32
    %c0_i32_1 = arith.constant 0 : i32
    return %arg0, %c0_i32, %c0_i32_0 : i32, i32, i32
  }
  func.func @transform_2(%arg0: i32) -> (i32, i32, i32) {
    %c0_i32 = arith.constant 0 : i32
    %c0_i32_0 = arith.constant 0 : i32
    %c0_i32_1 = arith.constant 0 : i32
    return %arg0, %c0_i32, %c0_i32_0 : i32, i32, i32
  }
  func.func @transform_3(%arg0: i32) -> (i32, i32, i32) {
    %c0_i32 = arith.constant 0 : i32
    %c0_i32_0 = arith.constant 0 : i32
    %c0_i32_1 = arith.constant 0 : i32
    return %arg0, %c0_i32, %c0_i32_0 : i32, i32, i32
  }
  func.func @transform_4(%arg0: i32) -> (i32, i32) {
    %c0_i32 = arith.constant 0 : i32
    %c0_i32_0 = arith.constant 0 : i32
    %c0_i32_1 = arith.constant 0 : i32
    return %c0_i32, %c0_i32_0 : i32, i32
  }
  func.func @transform_5(%arg0: i32) -> (i32, i32) {
    %c0_i32 = arith.constant 0 : i32
    %c0_i32_0 = arith.constant 0 : i32
    %c0_i32_1 = arith.constant 0 : i32
    return %c0_i32, %c0_i32_0 : i32, i32
  }
  func.func @transform_6(%arg0: i32) -> (i32, i32) {
    %c0_i32 = arith.constant 0 : i32
    %c0_i32_0 = arith.constant 0 : i32
    %c0_i32_1 = arith.constant 0 : i32
    return %c0_i32, %c0_i32_0 : i32, i32
  }
}

</mosaic_0001>

<llo_original>
// kernel: somenet_pallas.1
$region0: #{somenet_pallas.1}
  #allocation0 [shape = 'u32[]', space=smem, size = 0x4, offset = 0x4, fixed_abs, tag = 'smem constant byte address 0x4 - core index']
  #allocation1 [shape = 'u32[144,128]{1,0:T(1,128)}', space=vmem, size = 0x12000, scoped, tag = 'internal scratch']
  #allocation2 [shape = 'f32[8,2,128]{2,1,0:T(2,128)}', space=vmem, size = 0x2000, scoped, tag = 'scratch operand']
  #allocation3 [shape = 'f32[8,2,512]{2,1,0:T(2,128)}', space=vmem, size = 0x8000, scoped, tag = 'scratch operand']
  %s0 = inlined_call_operand.vmem [shape: f32[8,2,128], index: 0, kind: input, shape index: {}]
  %s1 = inlined_call_operand.vmem [shape: bf16[10,128,512], index: 1, kind: input, shape index: {}]
  %s2 = inlined_call_operand.vmem [shape: bf16[10,128,512], index: 2, kind: input, shape index: {}]
  %s3 = inlined_call_operand.vmem [shape: f32[10,1,512], index: 3, kind: input, shape index: {}]
  %s4 = inlined_call_operand.vmem [shape: f32[128,16], index: 4, kind: input, shape index: {}]
  %s5 = inlined_call_operand.vmem [shape: f32[1,16], index: 5, kind: input, shape index: {}]
  %s6 = inlined_call_operand.hbm [shape: f32[2,16], index: 6, kind: output, shape index: {}]
  %s7 = sld [smem:[#allocation0]]
  $region65: #{somenet_pallas.1} parent=0
    _
  %s9 = ssub.s32 1, %s7
  %s10 = scalar_select 0, %s9, %s7
  $region1: #{somenet_pallas.1} parent=0
    #allocation4 [shape = 'u8[1024]{0}', space=vmem, size = 0x400, scoped, tag = 'output window, operand 0, single buffered']
    #allocation5 [shape = 's32[2]{0}', space=sflag, size = 0x8, scoped, tag = 'scoped memory for somenet_pallas.1']
    %11 = vsyncpa [#allocation5], 0
    loop: start=0, step=1, limit=12
    $region2: #{somenet_pallas.1} parent=1 // loop_pre_header
      _
    $region3: #{somenet_pallas.1} parent=1 // loop_header
      %s13 = sphi 0, %s17
      %p14 = scmp.ge.s32.totalorder %s13, 12
      %s21 = sphi 0, %s21
      %s23 = sphi 0, %s21
      %s24 = sphi 0, %s23
      %s38 = sphi 0, %s24
      %s44 = sphi 0, %s46
      %s47 = sphi 0, %s44
      %s48 = sphi 0, %s47
      %s64 = sphi 0, %s48
      %s70 = sphi 0, %s72
      %s73 = sphi 0, %s70
      %s74 = sphi 0, %s73
      %s90 = sphi 0, %s74
      %s96 = sphi 0, %s98
      %s99 = sphi 0, %s96
      %s100 = sphi 0, %s99
      %s116 = sphi 0, %s100
      %s120 = sphi 0, %s120
      %s122 = sphi 0, %s120
      %s123 = sphi 0, %s122
      %s137 = sphi 0, %s123
      %s141 = sphi 0, %s141
      %s143 = sphi 0, %s141
      %s144 = sphi 0, %s143
      %s158 = sphi 0, %s144
      %s162 = sphi 0, %s162
      %s164 = sphi 0, %s162
      %s165 = sphi 0, %s164
      %s179 = sphi 0, %s165
    $region4: #{somenet_pallas.1} parent=1 // loop_header_branch
      %16 = sbr.rel (%p14) target = $region8
    $region5: #{somenet_pallas.1} parent=1 // loop_body
      %s18 = ssub.s32 %s13, 1
      %s19 = ssub.s32 %s13, 2
      %s20 = sadd.s32 %s13, 1
      %s22 = sadd.s32 %s21, 1
      %p25 = scmp.eq.s32.totalorder %s13, 9
      %p26 = scmp.ne.s32.totalorder %s21, %s23
      %p27 = scmp.eq.s32.totalorder %s13, 0
      %p28 = por %p26, %p27
      %p29 = scmp.ne.s32.totalorder %s21, %s23
      %p30 = scmp.eq.s32.totalorder %s18, 9
      %p31 = por %p29, %p30
      %p32 = scmp.ne.s32.totalorder %s23, %s24
      %p33 = scmp.eq.s32.totalorder %s18, 0
      %p34 = por %p32, %p33
      %p35 = scmp.ne.s32.totalorder %s23, %s24
      %p36 = scmp.eq.s32.totalorder %s19, 9
      %p37 = por %p35, %p36
      %p39 = scmp.ne.s32.totalorder %s24, %s38
      %p40 = scmp.eq.s32.totalorder %s19, 0
      %p41 = por %p39, %p40
      %s42 = ssub.s32 %s13, %s20
      %p43 = scmp.eq.s32.totalorder %s42, 0
      %s45 = sadd.s32 %s44, 1
      %s46 = scalar_select %p43, %s44, %s45
      %p49 = pneg %p43
      %p50 = scmp.eq.s32.totalorder %s13, 9
      %p51 = por %p49, %p50
      %p52 = scmp.ne.s32.totalorder %s44, %s47
      %p53 = scmp.eq.s32.totalorder %s13, 0
      %p54 = por %p52, %p53
      %p55 = scmp.ne.s32.totalorder %s44, %s47
      %p56 = scmp.eq.s32.totalorder %s18, 9
      %p57 = por %p55, %p56
      %p58 = scmp.ne.s32.totalorder %s47, %s48
      %p59 = scmp.eq.s32.totalorder %s18, 0
      %p60 = por %p58, %p59
      %p61 = scmp.ne.s32.totalorder %s47, %s48
      %p62 = scmp.eq.s32.totalorder %s19, 9
      %p63 = por %p61, %p62
      %p65 = scmp.ne.s32.totalorder %s48, %s64
      %p66 = scmp.eq.s32.totalorder %s19, 0
      %p67 = por %p65, %p66
      %s68 = ssub.s32 %s13, %s20
      %p69 = scmp.eq.s32.totalorder %s68, 0
      %s71 = sadd.s32 %s70, 1
      %s72 = scalar_select %p69, %s70, %s71
      %p75 = pneg %p69
      %p76 = scmp.eq.s32.totalorder %s13, 9
      %p77 = por %p75, %p76
      %p78 = scmp.ne.s32.totalorder %s70, %s73
      %p79 = scmp.eq.s32.totalorder %s13, 0
      %p80 = por %p78, %p79
      %p81 = scmp.ne.s32.totalorder %s70, %s73
      %p82 = scmp.eq.s32.totalorder %s18, 9
      %p83 = por %p81, %p82
      %p84 = scmp.ne.s32.totalorder %s73, %s74
      %p85 = scmp.eq.s32.totalorder %s18, 0
      %p86 = por %p84, %p85
      %p87 = scmp.ne.s32.totalorder %s73, %s74
      %p88 = scmp.eq.s32.totalorder %s19, 9
      %p89 = por %p87, %p88
      %p91 = scmp.ne.s32.totalorder %s74, %s90
      %p92 = scmp.eq.s32.totalorder %s19, 0
      %p93 = por %p91, %p92
      %s94 = ssub.s32 %s13, %s20
      %p95 = scmp.eq.s32.totalorder %s94, 0
      %s97 = sadd.s32 %s96, 1
      %s98 = scalar_select %p95, %s96, %s97
      %p101 = pneg %p95
      %p102 = scmp.eq.s32.totalorder %s13, 9
      %p103 = por %p101, %p102
      %p104 = scmp.ne.s32.totalorder %s96, %s99
      %p105 = scmp.eq.s32.totalorder %s13, 0
      %p106 = por %p104, %p105
      %p107 = scmp.ne.s32.totalorder %s96, %s99
      %p108 = scmp.eq.s32.totalorder %s18, 9
      %p109 = por %p107, %p108
      %p110 = scmp.ne.s32.totalorder %s99, %s100
      %p111 = scmp.eq.s32.totalorder %s18, 0
      %p112 = por %p110, %p111
      %p113 = scmp.ne.s32.totalorder %s99, %s100
      %p114 = scmp.eq.s32.totalorder %s19, 9
      %p115 = por %p113, %p114
      %p117 = scmp.ne.s32.totalorder %s100, %s116
      %p118 = scmp.eq.s32.totalorder %s19, 0
      %p119 = por %p117, %p118
      %s121 = sadd.s32 %s120, 1
      %p124 = scmp.eq.s32.totalorder %s13, 9
      %p125 = scmp.ne.s32.totalorder %s120, %s122
      %p126 = scmp.eq.s32.totalorder %s13, 0
      %p127 = por %p125, %p126
      %p128 = scmp.ne.s32.totalorder %s120, %s122
      %p129 = scmp.eq.s32.totalorder %s18, 9
      %p130 = por %p128, %p129
      %p131 = scmp.ne.s32.totalorder %s122, %s123
      %p132 = scmp.eq.s32.totalorder %s18, 0
      %p133 = por %p131, %p132
      %p134 = scmp.ne.s32.totalorder %s122, %s123
      %p135 = scmp.eq.s32.totalorder %s19, 9
      %p136 = por %p134, %p135
      %p138 = scmp.ne.s32.totalorder %s123, %s137
      %p139 = scmp.eq.s32.totalorder %s19, 0
      %p140 = por %p138, %p139
      %s142 = sadd.s32 %s141, 1
      %p145 = scmp.eq.s32.totalorder %s13, 9
      %p146 = scmp.ne.s32.totalorder %s141, %s143
      %p147 = scmp.eq.s32.totalorder %s13, 0
      %p148 = por %p146, %p147
      %p149 = scmp.ne.s32.totalorder %s141, %s143
      %p150 = scmp.eq.s32.totalorder %s18, 9
      %p151 = por %p149, %p150
      %p152 = scmp.ne.s32.totalorder %s143, %s144
      %p153 = scmp.eq.s32.totalorder %s18, 0
      %p154 = por %p152, %p153
      %p155 = scmp.ne.s32.totalorder %s143, %s144
      %p156 = scmp.eq.s32.totalorder %s19, 9
      %p157 = por %p155, %p156
      %p159 = scmp.ne.s32.totalorder %s144, %s158
      %p160 = scmp.eq.s32.totalorder %s19, 0
      %p161 = por %p159, %p160
      %s163 = sadd.s32 %s162, 1
      %p166 = scmp.eq.s32.totalorder %s13, 9
      %p167 = scmp.ne.s32.totalorder %s162, %s164
      %p168 = scmp.eq.s32.totalorder %s13, 0
      %p169 = por %p167, %p168
      %p170 = scmp.ne.s32.totalorder %s162, %s164
      %p171 = scmp.eq.s32.totalorder %s18, 9
      %p172 = por %p170, %p171
      %p173 = scmp.ne.s32.totalorder %s164, %s165
      %p174 = scmp.eq.s32.totalorder %s18, 0
      %p175 = por %p173, %p174
      %p176 = scmp.ne.s32.totalorder %s164, %s165
      %p177 = scmp.eq.s32.totalorder %s19, 9
      %p178 = por %p176, %p177
      %p180 = scmp.ne.s32.totalorder %s165, %s179
      %p181 = scmp.eq.s32.totalorder %s19, 0
      %p182 = por %p180, %p181
      %p183 = scmp.le.s32.totalorder 1, %s13
      %p184 = scmp.lt.s32.totalorder %s13, 11
      %p185 = pnand %p183, %p184
      %p186 = pneg %p185
      // Predicated region
      $region9: #{somenet_pallas.1} parent=5 // pred_check
        _
      $region10: #{somenet_pallas.1} parent=5 // pred_check_branch
        %188 = sbr.rel (%p185) target = $region12
      $region11: #{somenet_pallas.1} parent=5 // pred_region
        %s189 = ssub.s32 %s13, 1
        // Predicated region
        $region13: #{somenet_pallas.1} parent=11 // pred_check
          %p190 = pneg %p34
        $region14: #{somenet_pallas.1} parent=11 // pred_check_branch
          %192 = sbr.rel (%p190) target = $region16
        $region15: #{somenet_pallas.1} parent=11 // pred_region
          _
        $region16: #{somenet_pallas.1} parent=11 // pred_fallthru
          _
        // Predicated region
        $region17: #{somenet_pallas.1} parent=11 // pred_check
          %p193 = pneg %p133
        $region18: #{somenet_pallas.1} parent=11 // pred_check_branch
          %195 = sbr.rel (%p193) target = $region20
        $region19: #{somenet_pallas.1} parent=11 // pred_region
          _
        $region20: #{somenet_pallas.1} parent=11 // pred_fallthru
          _
        // Predicated region
        $region21: #{somenet_pallas.1} parent=11 // pred_check
          %p196 = pneg %p154
        $region22: #{somenet_pallas.1} parent=11 // pred_check_branch
          %198 = sbr.rel (%p196) target = $region24
        $region23: #{somenet_pallas.1} parent=11 // pred_region
          _
        $region24: #{somenet_pallas.1} parent=11 // pred_fallthru
          _
      $region12: #{somenet_pallas.1} parent=5 // pred_fallthru
        _
      %p199 = scmp.lt.s32.totalorder %s13, 10
      // Predicated region
      $region25: #{somenet_pallas.1} parent=5 // pred_check
        %p200 = pneg %p199
      $region26: #{somenet_pallas.1} parent=5 // pred_check_branch
        %202 = sbr.rel (%p200) target = $region28
      $region27: #{somenet_pallas.1} parent=5 // pred_region
        // Predicated region
        $region29: #{somenet_pallas.1} parent=27 // pred_check
          %p203 = pneg %p54
        $region30: #{somenet_pallas.1} parent=27 // pred_check_branch
          %205 = sbr.rel (%p203) target = $region32
        $region31: #{somenet_pallas.1} parent=27 // pred_region
          %p206 = scmp.lt.s32.totalorder %s13, 9
          %s207 = scalar_select %p206, %s13, 9
          %s208 = smul.addr %s207, 64
          %s209 = smul.addr %s208, 4
          %s210 = scalar_lea.vmem %s1, %s209
        $region32: #{somenet_pallas.1} parent=27 // pred_fallthru
          _
        // Predicated region
        $region33: #{somenet_pallas.1} parent=27 // pred_check
          %p211 = pneg %p80
        $region34: #{somenet_pallas.1} parent=27 // pred_check_branch
          %213 = sbr.rel (%p211) target = $region36
        $region35: #{somenet_pallas.1} parent=27 // pred_region
          %p214 = scmp.lt.s32.totalorder %s13, 9
          %s215 = scalar_select %p214, %s13, 9
          %s216 = smul.addr %s215, 64
          %s217 = smul.addr %s216, 4
          %s218 = scalar_lea.vmem %s2, %s217
        $region36: #{somenet_pallas.1} parent=27 // pred_fallthru
          _
        // Predicated region
        $region37: #{somenet_pallas.1} parent=27 // pred_check
          %p219 = pneg %p106
        $region38: #{somenet_pallas.1} parent=27 // pred_check_branch
          %221 = sbr.rel (%p219) target = $region40
        $region39: #{somenet_pallas.1} parent=27 // pred_region
          %p222 = scmp.lt.s32.totalorder %s13, 9
          %s223 = scalar_select %p222, %s13, 9
          %s224 = smul.addr %s223, 4
          %s225 = scalar_lea.vmem %s3, %s224
        $region40: #{somenet_pallas.1} parent=27 // pred_fallthru
          _
      $region28: #{somenet_pallas.1} parent=5 // pred_fallthru
        _
      %p226 = scmp.le.s32.totalorder 1, %s13
      %p227 = scmp.lt.s32.totalorder %s13, 11
      %p228 = pnand %p226, %p227
      %p229 = pneg %p228
      // Predicated region
      $region41: #{somenet_pallas.1} parent=5 // pred_check
        _
      $region42: #{somenet_pallas.1} parent=5 // pred_check_branch
        %231 = sbr.rel (%p228) target = $region44
      $region43: #{somenet_pallas.1} parent=5 // pred_region
        %s232 = ssub.s32 %s13, 1
        %p233 = pneg %p34
        %p234 = pneg %p31
        %p235 = scmp.lt.s32.totalorder %s18, 9
        %s236 = scalar_select %p235, %s18, 9
        %s237 = smul.addr %s236, 64
        %s238 = smul.addr %s237, 4
        %s239 = scalar_lea.vmem %s1, %s238
        %p240 = pneg %p60
        %p241 = pneg %p57
        %p242 = scmp.lt.s32.totalorder %s18, 9
        %s243 = scalar_select %p242, %s18, 9
        %s244 = smul.addr %s243, 64
        %s245 = smul.addr %s244, 4
        %s246 = scalar_lea.vmem %s2, %s245
        %p247 = pneg %p86
        %p248 = pneg %p83
        %p249 = scmp.lt.s32.totalorder %s18, 9
        %s250 = scalar_select %p249, %s18, 9
        %s251 = smul.addr %s250, 4
        %s252 = scalar_lea.vmem %s3, %s251
        %p253 = pneg %p112
        %p254 = pneg %p109
        %p255 = pneg %p133
        %p256 = pneg %p130
        %p257 = pneg %p154
        %p258 = pneg %p151
        %p259 = pneg %p175
        %p260 = pneg %p172
        %p261 = scmp.lt.s32.totalorder %s18, 9
        %s262 = scalar_select %p261, %s18, 9
        %s263 = smul.addr %s262, 64
        %s264 = smul.addr %s263, 4
        %s265 = scalar_lea.vmem %s1, %s264
        %p266 = scmp.lt.s32.totalorder %s18, 9
        %s267 = scalar_select %p266, %s18, 9
        %s268 = smul.addr %s267, 64
        %s269 = smul.addr %s268, 4
        %s270 = scalar_lea.vmem %s2, %s269
        %p271 = scmp.lt.s32.totalorder %s18, 9
        %s272 = scalar_select %p271, %s18, 9
        %s273 = smul.addr %s272, 4
        %s274 = scalar_lea.vmem %s3, %s273
        %p276 = scmp.eq.s32.totalorder %s18, 0
        // Predicated region
        $region45: #{somenet_pallas.1} parent=43 // pred_check
          %p277 = pneg %p276
        $region46: #{somenet_pallas.1} parent=43 // pred_check_branch
          %279 = sbr.rel (%p277) target = $region48
        $region47: #{somenet_pallas.1} parent=43 // pred_region
          %v280 = vld [vmem:[%s0] sm:$0x3]
          %v281 = vld [vmem:[%s0 + $0x2] sm:$0x3]
          %v282 = vld [vmem:[%s0 + $0x4] sm:$0x3]
          %v283 = vld [vmem:[%s0 + $0x6] sm:$0x3]
          %v284 = vld [vmem:[%s0 + $0x8] sm:$0x3]
          %v285 = vld [vmem:[%s0 + $0xa] sm:$0x3]
          %v286 = vld [vmem:[%s0 + $0xc] sm:$0x3]
          %v287 = vld [vmem:[%s0 + $0xe] sm:$0x3]
          %288 = vst [vmem:[#allocation2] sm:$0x3] %v280
          %289 = vst [vmem:[#allocation2 + $0x2] sm:$0x3] %v281
          %290 = vst [vmem:[#allocation2 + $0x4] sm:$0x3] %v282
          %291 = vst [vmem:[#allocation2 + $0x6] sm:$0x3] %v283
          %292 = vst [vmem:[#allocation2 + $0x8] sm:$0x3] %v284
          %293 = vst [vmem:[#allocation2 + $0xa] sm:$0x3] %v285
          %294 = vst [vmem:[#allocation2 + $0xc] sm:$0x3] %v286
          %295 = vst [vmem:[#allocation2 + $0xe] sm:$0x3] %v287
        $region48: #{somenet_pallas.1} parent=43 // pred_fallthru
          _
        %v296 = vld [vmem:[%s265] sm:$0xff]
        %v297 = vld [vmem:[%s265 + $0x8] sm:$0xff]
        %v298 = vld [vmem:[%s265 + $0x10] sm:$0xff]
        %v299 = vld [vmem:[%s265 + $0x18] sm:$0xff]
        %v300 = vld [vmem:[%s265 + $0x20] sm:$0xff]
        %v301 = vld [vmem:[%s265 + $0x28] sm:$0xff]
        %v302 = vld [vmem:[%s265 + $0x30] sm:$0xff]
        %v303 = vld [vmem:[%s265 + $0x38] sm:$0xff]
        %v304 = vld [vmem:[%s265 + $0x40] sm:$0xff]
        %v305 = vld [vmem:[%s265 + $0x48] sm:$0xff]
        %v306 = vld [vmem:[%s265 + $0x50] sm:$0xff]
        %v307 = vld [vmem:[%s265 + $0x58] sm:$0xff]
        %v308 = vld [vmem:[%s265 + $0x60] sm:$0xff]
        %v309 = vld [vmem:[%s265 + $0x68] sm:$0xff]
        %v310 = vld [vmem:[%s265 + $0x70] sm:$0xff]
        %v311 = vld [vmem:[%s265 + $0x78] sm:$0xff]
        %v312 = vld [vmem:[%s265 + $0x80] sm:$0xff]
        %v313 = vld [vmem:[%s265 + $0x88] sm:$0xff]
        %v314 = vld [vmem:[%s265 + $0x90] sm:$0xff]
        %v315 = vld [vmem:[%s265 + $0x98] sm:$0xff]
        %v316 = vld [vmem:[%s265 + $0xa0] sm:$0xff]
        %v317 = vld [vmem:[%s265 + $0xa8] sm:$0xff]
        %v318 = vld [vmem:[%s265 + $0xb0] sm:$0xff]
        %v319 = vld [vmem:[%s265 + $0xb8] sm:$0xff]
        %v320 = vld [vmem:[%s265 + $0xc0] sm:$0xff]
        %v321 = vld [vmem:[%s265 + $0xc8] sm:$0xff]
        %v322 = vld [vmem:[%s265 + $0xd0] sm:$0xff]
        %v323 = vld [vmem:[%s265 + $0xd8] sm:$0xff]
        %v324 = vld [vmem:[%s265 + $0xe0] sm:$0xff]
        %v325 = vld [vmem:[%s265 + $0xe8] sm:$0xff]
        %v326 = vld [vmem:[%s265 + $0xf0] sm:$0xff]
        %v327 = vld [vmem:[%s265 + $0xf8] sm:$0xff]
        %v328 = vld [vmem:[%s270] sm:$0xff]
        %v329 = vld [vmem:[%s270 + $0x8] sm:$0xff]
        %v330 = vld [vmem:[%s270 + $0x10] sm:$0xff]
        %v331 = vld [vmem:[%s270 + $0x18] sm:$0xff]
        %v332 = vld [vmem:[%s270 + $0x20] sm:$0xff]
        %v333 = vld [vmem:[%s270 + $0x28] sm:$0xff]
        %v334 = vld [vmem:[%s270 + $0x30] sm:$0xff]
        %v335 = vld [vmem:[%s270 + $0x38] sm:$0xff]
        %v336 = vld [vmem:[%s270 + $0x40] sm:$0xff]
        %v337 = vld [vmem:[%s270 + $0x48] sm:$0xff]
        %v338 = vld [vmem:[%s270 + $0x50] sm:$0xff]
        %v339 = vld [vmem:[%s270 + $0x58] sm:$0xff]
        %v340 = vld [vmem:[%s270 + $0x60] sm:$0xff]
        %v341 = vld [vmem:[%s270 + $0x68] sm:$0xff]
        %v342 = vld [vmem:[%s270 + $0x70] sm:$0xff]
        %v343 = vld [vmem:[%s270 + $0x78] sm:$0xff]
        %v344 = vld [vmem:[%s270 + $0x80] sm:$0xff]
        %v345 = vld [vmem:[%s270 + $0x88] sm:$0xff]
        %v346 = vld [vmem:[%s270 + $0x90] sm:$0xff]
        %v347 = vld [vmem:[%s270 + $0x98] sm:$0xff]
        %v348 = vld [vmem:[%s270 + $0xa0] sm:$0xff]
        %v349 = vld [vmem:[%s270 + $0xa8] sm:$0xff]
        %v350 = vld [vmem:[%s270 + $0xb0] sm:$0xff]
        %v351 = vld [vmem:[%s270 + $0xb8] sm:$0xff]
        %v352 = vld [vmem:[%s270 + $0xc0] sm:$0xff]
        %v353 = vld [vmem:[%s270 + $0xc8] sm:$0xff]
        %v354 = vld [vmem:[%s270 + $0xd0] sm:$0xff]
        %v355 = vld [vmem:[%s270 + $0xd8] sm:$0xff]
        %v356 = vld [vmem:[%s270 + $0xe0] sm:$0xff]
        %v357 = vld [vmem:[%s270 + $0xe8] sm:$0xff]
        %v358 = vld [vmem:[%s270 + $0xf0] sm:$0xff]
        %v359 = vld [vmem:[%s270 + $0xf8] sm:$0xff]
        %v360 = vld [vmem:[%s274] sm:$0xf]
        %v361 = vld [vmem:[#allocation2] sm:$0x3]
        %v362 = vpack.c.bf16 %v361, %v361
        %v364 = vlaneseq
        %v365 = vshrl.u32 %v364, 7
        %v366 = vsub.s32 0, %v365
        %v367 = vrot.slane %v360, %v366
        %v368 = vlaneseq
        %v369 = vshrl.u32 %v368, 7
        %v370 = vsub.s32 1, %v369
        %v371 = vrot.slane %v360, %v370
        %v372 = vlaneseq
        %v373 = vshrl.u32 %v372, 7
        %v374 = vsub.s32 2, %v373
        %v375 = vrot.slane %v360, %v374
        %v376 = vlaneseq
        %v377 = vshrl.u32 %v376, 7
        %v378 = vsub.s32 3, %v377
        %v379 = vrot.slane %v360, %v378
        %v416 = vunpack.c.l.b16 %v296
        %v417 = vunpack.c.h.b16 %v296
        %v418 = vunpack.c.l.b16 %v297
        %v419 = vunpack.c.h.b16 %v297
        %v420 = vunpack.c.l.b16 %v298
        %v421 = vunpack.c.h.b16 %v298
        %v422 = vunpack.c.l.b16 %v299
        %v423 = vunpack.c.h.b16 %v299
        %v424 = vunpack.c.l.b16 %v300
        %v425 = vunpack.c.h.b16 %v300
        %v426 = vunpack.c.l.b16 %v301
        %v427 = vunpack.c.h.b16 %v301
        %v428 = vunpack.c.l.b16 %v302
        %v429 = vunpack.c.h.b16 %v302
        %v430 = vunpack.c.l.b16 %v303
        %v431 = vunpack.c.h.b16 %v303
        %v432 = vunpack.c.l.b16 %v304
        %v433 = vunpack.c.h.b16 %v304
        %v434 = vunpack.c.l.b16 %v305
        %v435 = vunpack.c.h.b16 %v305
        %v436 = vunpack.c.l.b16 %v306
        %v437 = vunpack.c.h.b16 %v306
        %v438 = vunpack.c.l.b16 %v307
        %v439 = vunpack.c.h.b16 %v307
        %v440 = vunpack.c.l.b16 %v308
        %v441 = vunpack.c.h.b16 %v308
        %v442 = vunpack.c.l.b16 %v309
        %v443 = vunpack.c.h.b16 %v309
        %v444 = vunpack.c.l.b16 %v310
        %v445 = vunpack.c.h.b16 %v310
        %v446 = vunpack.c.l.b16 %v311
        %v447 = vunpack.c.h.b16 %v311
        %v448 = vunpack.c.l.b16 %v312
        %v449 = vunpack.c.h.b16 %v312
        %v450 = vunpack.c.l.b16 %v313
        %v451 = vunpack.c.h.b16 %v313
        %v452 = vunpack.c.l.b16 %v314
        %v453 = vunpack.c.h.b16 %v314
        %v454 = vunpack.c.l.b16 %v315
        %v455 = vunpack.c.h.b16 %v315
        %v456 = vunpack.c.l.b16 %v316
        %v457 = vunpack.c.h.b16 %v316
        %v458 = vunpack.c.l.b16 %v317
        %v459 = vunpack.c.h.b16 %v317
        %v460 = vunpack.c.l.b16 %v318
        %v461 = vunpack.c.h.b16 %v318
        %v462 = vunpack.c.l.b16 %v319
        %v463 = vunpack.c.h.b16 %v319
        %v464 = vunpack.c.l.b16 %v320
        %v465 = vunpack.c.h.b16 %v320
        %v466 = vunpack.c.l.b16 %v321
        %v467 = vunpack.c.h.b16 %v321
        %v468 = vunpack.c.l.b16 %v322
        %v469 = vunpack.c.h.b16 %v322
        %v470 = vunpack.c.l.b16 %v323
        %v471 = vunpack.c.h.b16 %v323
        %v472 = vunpack.c.l.b16 %v324
        %v473 = vunpack.c.h.b16 %v324
        %v474 = vunpack.c.l.b16 %v325
        %v475 = vunpack.c.h.b16 %v325
        %v476 = vunpack.c.l.b16 %v326
        %v477 = vunpack.c.h.b16 %v326
        %v478 = vunpack.c.l.b16 %v327
        %v479 = vunpack.c.h.b16 %v327
        %v480 = vpack.c.b16 %v420, %v416
        %v481 = vpack.c.b16 %v421, %v417
        %v482 = vpack.c.b16 %v422, %v418
        %v483 = vpack.c.b16 %v423, %v419
        %v484 = vpack.c.b16 %v428, %v424
        %v485 = vpack.c.b16 %v429, %v425
        %v486 = vpack.c.b16 %v430, %v426
        %v487 = vpack.c.b16 %v431, %v427
        %v488 = vpack.c.b16 %v436, %v432
        %v489 = vpack.c.b16 %v437, %v433
        %v490 = vpack.c.b16 %v438, %v434
        %v491 = vpack.c.b16 %v439, %v435
        %v492 = vpack.c.b16 %v444, %v440
        %v493 = vpack.c.b16 %v445, %v441
        %v494 = vpack.c.b16 %v446, %v442
        %v495 = vpack.c.b16 %v447, %v443
        %v496 = vpack.c.b16 %v452, %v448
        %v497 = vpack.c.b16 %v453, %v449
        %v498 = vpack.c.b16 %v454, %v450
        %v499 = vpack.c.b16 %v455, %v451
        %v500 = vpack.c.b16 %v460, %v456
        %v501 = vpack.c.b16 %v461, %v457
        %v502 = vpack.c.b16 %v462, %v458
        %v503 = vpack.c.b16 %v463, %v459
        %v504 = vpack.c.b16 %v468, %v464
        %v505 = vpack.c.b16 %v469, %v465
        %v506 = vpack.c.b16 %v470, %v466
        %v507 = vpack.c.b16 %v471, %v467
        %v508 = vpack.c.b16 %v476, %v472
        %v509 = vpack.c.b16 %v477, %v473
        %v510 = vpack.c.b16 %v478, %v474
        %v511 = vpack.c.b16 %v479, %v475
        %544 = vmatprep.subr.bf16.mxu0 %v509
        %545 = vmatpush1.bf16.msra.mxu0 %v508
        %546 = vmatprep.subr.bf16.mxu0 %v505
        %547 = vmatpush1.bf16.msra.mxu0 %v504
        %548 = vmatprep.subr.bf16.mxu0 %v501
        %549 = vmatpush1.bf16.msra.mxu0 %v500
        %550 = vmatprep.subr.bf16.mxu0 %v497
        %551 = vmatpush1.bf16.msra.mxu0 %v496
        %552 = vmatprep.subr.bf16.mxu0 %v493
        %553 = vmatpush1.bf16.msra.mxu0 %v492
        %554 = vmatprep.subr.bf16.mxu0 %v489
        %555 = vmatpush1.bf16.msra.mxu0 %v488
        %556 = vmatprep.subr.bf16.mxu0 %v485
        %557 = vmatpush1.bf16.msra.mxu0 %v484
        %558 = vmatprep.subr.bf16.mxu0 %v481
        %559 = vmatpush1.bf16.msra.mxu0 %v480
        %560 = vmatprep.subr.bf16.mxu0 0
        %561 = vmatpush2.bf16.msra.mxu0 0
        %562 = vmatprep.subr.bf16.mxu0 0
        %563 = vmatpush2.bf16.msra.mxu0 0
        %564 = vmatprep.subr.bf16.mxu0 0
        %565 = vmatpush2.bf16.msra.mxu0 0
        %566 = vmatprep.subr.bf16.mxu0 0
        %567 = vmatpush2.bf16.msra.mxu0 0
        %568 = vmatprep.subr.bf16.mxu0 0
        %569 = vmatpush2.bf16.msra.mxu0 0
        %570 = vmatprep.subr.bf16.mxu0 0
        %571 = vmatpush2.bf16.msra.mxu0 0
        %572 = vmatprep.subr.bf16.mxu0 0
        %573 = vmatpush2.bf16.msra.mxu0 0
        %574 = vmatprep.subr.bf16.mxu0 0
        %575 = vmatpush2.bf16.msra.mxu0 0
        %576 = vmatprep.mubr.bf16.mxu0 0
        %577 = vmatmul.mubr.bf16.gmra.mxu0 %v362
        %v578 = vpop.f32.mrf.mxu0
        %v579 = vadd.f32 %v367, %v578
        %v580 = vpop.f32.mrf.mxu0
        %v581 = vadd.f32 %v371, %v580
        %v582 = vpop.f32.mrf.mxu0
        %v583 = vpop.f32.mrf.mxu0
        %584 = vdwg.mxu0
        %585 = vmatprep.subr.bf16.mxu0 %v511
        %586 = vmatpush1.bf16.msra.mxu0 %v510
        %587 = vmatprep.subr.bf16.mxu0 %v507
        %588 = vmatpush1.bf16.msra.mxu0 %v506
        %589 = vmatprep.subr.bf16.mxu0 %v503
        %590 = vmatpush1.bf16.msra.mxu0 %v502
        %591 = vmatprep.subr.bf16.mxu0 %v499
        %592 = vmatpush1.bf16.msra.mxu0 %v498
        %593 = vmatprep.subr.bf16.mxu0 %v495
        %594 = vmatpush1.bf16.msra.mxu0 %v494
        %595 = vmatprep.subr.bf16.mxu0 %v491
        %596 = vmatpush1.bf16.msra.mxu0 %v490
        %597 = vmatprep.subr.bf16.mxu0 %v487
        %598 = vmatpush1.bf16.msra.mxu0 %v486
        %599 = vmatprep.subr.bf16.mxu0 %v483
        %600 = vmatpush1.bf16.msra.mxu0 %v482
        %601 = vmatprep.subr.bf16.mxu0 0
        %602 = vmatpush2.bf16.msra.mxu0 0
        %603 = vmatprep.subr.bf16.mxu0 0
        %604 = vmatpush2.bf16.msra.mxu0 0
        %605 = vmatprep.subr.bf16.mxu0 0
        %606 = vmatpush2.bf16.msra.mxu0 0
        %607 = vmatprep.subr.bf16.mxu0 0
        %608 = vmatpush2.bf16.msra.mxu0 0
        %609 = vmatprep.subr.bf16.mxu0 0
        %610 = vmatpush2.bf16.msra.mxu0 0
        %611 = vmatprep.subr.bf16.mxu0 0
        %612 = vmatpush2.bf16.msra.mxu0 0
        %613 = vmatprep.subr.bf16.mxu0 0
        %614 = vmatpush2.bf16.msra.mxu0 0
        %615 = vmatprep.subr.bf16.mxu0 0
        %616 = vmatpush2.bf16.msra.mxu0 0
        %617 = vmatprep.mubr.bf16.mxu0 0
        %618 = vmatmul.mubr.bf16.gmra.mxu0 %v362
        %v619 = vpop.f32.mrf.mxu0
        %v620 = vadd.f32 %v375, %v619
        %v621 = vpop.f32.mrf.mxu0
        %v622 = vadd.f32 %v379, %v621
        %v623 = vpop.f32.mrf.mxu0
        %v624 = vpop.f32.mrf.mxu0
        %625 = vdwg.mxu0
        %v630 = vcombine.low %v579, %v581
        %v631 = vcombine.low %v620, %v622
        %v633 = vunpack.c.l.s4 1983009808
        %v634 = vunpack.c.0.s8 %v633
        %v635 = vlaneseq
        %v636 = vshrl.u32 %v635, 7
        %v637 = vsub.s32 %v634, %v636
        %v638 = vrot.slane %v630, %v637
        %v640 = vunpack.c.l.s4 1983009808
        %v641 = vunpack.c.0.s8 %v640
        %v642 = vlaneseq
        %v643 = vshrl.u32 %v642, 7
        %v644 = vsub.s32 %v641, %v643
        %v645 = vrot.slane %v631, %v644
        %v646 = vcombine.low %v638, %v645
        %648 = vst [vmem:[#allocation3] sm:$0xff] %v646
        %s649 = scalar_lea.vmem [#allocation2], 2
        %v650 = vld [vmem:[%s649] sm:$0x3]
        %v651 = vpack.c.bf16 %v650, %v650
        %652 = vmatprep.subr.bf16.mxu0 %v509
        %653 = vmatpush1.bf16.msra.mxu0 %v508
        %654 = vmatprep.subr.bf16.mxu0 %v505
        %655 = vmatpush1.bf16.msra.mxu0 %v504
        %656 = vmatprep.subr.bf16.mxu0 %v501
        %657 = vmatpush1.bf16.msra.mxu0 %v500
        %658 = vmatprep.subr.bf16.mxu0 %v497
        %659 = vmatpush1.bf16.msra.mxu0 %v496
        %660 = vmatprep.subr.bf16.mxu0 %v493
        %661 = vmatpush1.bf16.msra.mxu0 %v492
        %662 = vmatprep.subr.bf16.mxu0 %v489
        %663 = vmatpush1.bf16.msra.mxu0 %v488
        %664 = vmatprep.subr.bf16.mxu0 %v485
        %665 = vmatpush1.bf16.msra.mxu0 %v484
        %666 = vmatprep.subr.bf16.mxu0 %v481
        %667 = vmatpush1.bf16.msra.mxu0 %v480
        %668 = vmatprep.subr.bf16.mxu0 0
        %669 = vmatpush2.bf16.msra.mxu0 0
        %670 = vmatprep.subr.bf16.mxu0 0
        %671 = vmatpush2.bf16.msra.mxu0 0
        %672 = vmatprep.subr.bf16.mxu0 0
        %673 = vmatpush2.bf16.msra.mxu0 0
        %674 = vmatprep.subr.bf16.mxu0 0
        %675 = vmatpush2.bf16.msra.mxu0 0
        %676 = vmatprep.subr.bf16.mxu0 0
        %677 = vmatpush2.bf16.msra.mxu0 0
        %678 = vmatprep.subr.bf16.mxu0 0
        %679 = vmatpush2.bf16.msra.mxu0 0
        %680 = vmatprep.subr.bf16.mxu0 0
        %681 = vmatpush2.bf16.msra.mxu0 0
        %682 = vmatprep.subr.bf16.mxu0 0
        %683 = vmatpush2.bf16.msra.mxu0 0
        %684 = vmatprep.mubr.bf16.mxu0 0
        %685 = vmatmul.mubr.bf16.gmra.mxu0 %v651
        %v686 = vpop.f32.mrf.mxu0
        %v687 = vadd.f32 %v367, %v686
        %v688 = vpop.f32.mrf.mxu0
        %v689 = vadd.f32 %v371, %v688
        %v690 = vpop.f32.mrf.mxu0
        %v691 = vpop.f32.mrf.mxu0
        %692 = vdwg.mxu0
        %693 = vmatprep.subr.bf16.mxu0 %v511
        %694 = vmatpush1.bf16.msra.mxu0 %v510
        %695 = vmatprep.subr.bf16.mxu0 %v507
        %696 = vmatpush1.bf16.msra.mxu0 %v506
        %697 = vmatprep.subr.bf16.mxu0 %v503
        %698 = vmatpush1.bf16.msra.mxu0 %v502
        %699 = vmatprep.subr.bf16.mxu0 %v499
        %700 = vmatpush1.bf16.msra.mxu0 %v498
        %701 = vmatprep.subr.bf16.mxu0 %v495
        %702 = vmatpush1.bf16.msra.mxu0 %v494
        %703 = vmatprep.subr.bf16.mxu0 %v491
        %704 = vmatpush1.bf16.msra.mxu0 %v490
        %705 = vmatprep.subr.bf16.mxu0 %v487
        %706 = vmatpush1.bf16.msra.mxu0 %v486
        %707 = vmatprep.subr.bf16.mxu0 %v483
        %708 = vmatpush1.bf16.msra.mxu0 %v482
        %709 = vmatprep.subr.bf16.mxu0 0
        %710 = vmatpush2.bf16.msra.mxu0 0
        %711 = vmatprep.subr.bf16.mxu0 0
        %712 = vmatpush2.bf16.msra.mxu0 0
        %713 = vmatprep.subr.bf16.mxu0 0
        %714 = vmatpush2.bf16.msra.mxu0 0
        %715 = vmatprep.subr.bf16.mxu0 0
        %716 = vmatpush2.bf16.msra.mxu0 0
        %717 = vmatprep.subr.bf16.mxu0 0
        %718 = vmatpush2.bf16.msra.mxu0 0
        %719 = vmatprep.subr.bf16.mxu0 0
        %720 = vmatpush2.bf16.msra.mxu0 0
        %721 = vmatprep.subr.bf16.mxu0 0
        %722 = vmatpush2.bf16.msra.mxu0 0
        %723 = vmatprep.subr.bf16.mxu0 0
        %724 = vmatpush2.bf16.msra.mxu0 0
        %725 = vmatprep.mubr.bf16.mxu0 0
        %726 = vmatmul.mubr.bf16.gmra.mxu0 %v651
        %v727 = vpop.f32.mrf.mxu0
        %v728 = vadd.f32 %v375, %v727
        %v729 = vpop.f32.mrf.mxu0
        %v730 = vadd.f32 %v379, %v729
        %v731 = vpop.f32.mrf.mxu0
        %v732 = vpop.f32.mrf.mxu0
        %733 = vdwg.mxu0
        %v738 = vcombine.low %v687, %v689
        %v739 = vcombine.low %v728, %v730
        %v741 = vunpack.c.l.s4 1983009808
        %v742 = vunpack.c.0.s8 %v741
        %v743 = vlaneseq
        %v744 = vshrl.u32 %v743, 7
        %v745 = vsub.s32 %v742, %v744
        %v746 = vrot.slane %v738, %v745
        %v748 = vunpack.c.l.s4 1983009808
        %v749 = vunpack.c.0.s8 %v748
        %v750 = vlaneseq
        %v751 = vshrl.u32 %v750, 7
        %v752 = vsub.s32 %v749, %v751
        %v753 = vrot.slane %v739, %v752
        %v754 = vcombine.low %v746, %v753
        %s756 = scalar_lea.vmem [#allocation3], 8
        %757 = vst [vmem:[%s756] sm:$0xff] %v754
        %s758 = scalar_lea.vmem [#allocation2], 4
        %v759 = vld [vmem:[%s758] sm:$0x3]
        %v760 = vpack.c.bf16 %v759, %v759
        %761 = vmatprep.subr.bf16.mxu0 %v509
        %762 = vmatpush1.bf16.msra.mxu0 %v508
        %763 = vmatprep.subr.bf16.mxu0 %v505
        %764 = vmatpush1.bf16.msra.mxu0 %v504
        %765 = vmatprep.subr.bf16.mxu0 %v501
        %766 = vmatpush1.bf16.msra.mxu0 %v500
        %767 = vmatprep.subr.bf16.mxu0 %v497
        %768 = vmatpush1.bf16.msra.mxu0 %v496
        %769 = vmatprep.subr.bf16.mxu0 %v493
        %770 = vmatpush1.bf16.msra.mxu0 %v492
        %771 = vmatprep.subr.bf16.mxu0 %v489
        %772 = vmatpush1.bf16.msra.mxu0 %v488
        %773 = vmatprep.subr.bf16.mxu0 %v485
        %774 = vmatpush1.bf16.msra.mxu0 %v484
        %775 = vmatprep.subr.bf16.mxu0 %v481
        %776 = vmatpush1.bf16.msra.mxu0 %v480
        %777 = vmatprep.subr.bf16.mxu0 0
        %778 = vmatpush2.bf16.msra.mxu0 0
        %779 = vmatprep.subr.bf16.mxu0 0
        %780 = vmatpush2.bf16.msra.mxu0 0
        %781 = vmatprep.subr.bf16.mxu0 0
        %782 = vmatpush2.bf16.msra.mxu0 0
        %783 = vmatprep.subr.bf16.mxu0 0
        %784 = vmatpush2.bf16.msra.mxu0 0
        %785 = vmatprep.subr.bf16.mxu0 0
        %786 = vmatpush2.bf16.msra.mxu0 0
        %787 = vmatprep.subr.bf16.mxu0 0
        %788 = vmatpush2.bf16.msra.mxu0 0
        %789 = vmatprep.subr.bf16.mxu0 0
        %790 = vmatpush2.bf16.msra.mxu0 0
        %791 = vmatprep.subr.bf16.mxu0 0
        %792 = vmatpush2.bf16.msra.mxu0 0
        %793 = vmatprep.mubr.bf16.mxu0 0
        %794 = vmatmul.mubr.bf16.gmra.mxu0 %v760
        %v795 = vpop.f32.mrf.mxu0
        %v796 = vadd.f32 %v367, %v795
        %v797 = vpop.f32.mrf.mxu0
        %v798 = vadd.f32 %v371, %v797
        %v799 = vpop.f32.mrf.mxu0
        %v800 = vpop.f32.mrf.mxu0
        %801 = vdwg.mxu0
        %802 = vmatprep.subr.bf16.mxu0 %v511
        %803 = vmatpush1.bf16.msra.mxu0 %v510
        %804 = vmatprep.subr.bf16.mxu0 %v507
        %805 = vmatpush1.bf16.msra.mxu0 %v506
        %806 = vmatprep.subr.bf16.mxu0 %v503
        %807 = vmatpush1.bf16.msra.mxu0 %v502
        %808 = vmatprep.subr.bf16.mxu0 %v499
        %809 = vmatpush1.bf16.msra.mxu0 %v498
        %810 = vmatprep.subr.bf16.mxu0 %v495
        %811 = vmatpush1.bf16.msra.mxu0 %v494
        %812 = vmatprep.subr.bf16.mxu0 %v491
        %813 = vmatpush1.bf16.msra.mxu0 %v490
        %814 = vmatprep.subr.bf16.mxu0 %v487
        %815 = vmatpush1.bf16.msra.mxu0 %v486
        %816 = vmatprep.subr.bf16.mxu0 %v483
        %817 = vmatpush1.bf16.msra.mxu0 %v482
        %818 = vmatprep.subr.bf16.mxu0 0
        %819 = vmatpush2.bf16.msra.mxu0 0
        %820 = vmatprep.subr.bf16.mxu0 0
        %821 = vmatpush2.bf16.msra.mxu0 0
        %822 = vmatprep.subr.bf16.mxu0 0
        %823 = vmatpush2.bf16.msra.mxu0 0
        %824 = vmatprep.subr.bf16.mxu0 0
        %825 = vmatpush2.bf16.msra.mxu0 0
        %826 = vmatprep.subr.bf16.mxu0 0
        %827 = vmatpush2.bf16.msra.mxu0 0
        %828 = vmatprep.subr.bf16.mxu0 0
        %829 = vmatpush2.bf16.msra.mxu0 0
        %830 = vmatprep.subr.bf16.mxu0 0
        %831 = vmatpush2.bf16.msra.mxu0 0
        %832 = vmatprep.subr.bf16.mxu0 0
        %833 = vmatpush2.bf16.msra.mxu0 0
        %834 = vmatprep.mubr.bf16.mxu0 0
        %835 = vmatmul.mubr.bf16.gmra.mxu0 %v760
        %v836 = vpop.f32.mrf.mxu0
        %v837 = vadd.f32 %v375, %v836
        %v838 = vpop.f32.mrf.mxu0
        %v839 = vadd.f32 %v379, %v838
        %v840 = vpop.f32.mrf.mxu0
        %v841 = vpop.f32.mrf.mxu0
        %842 = vdwg.mxu0
        %v847 = vcombine.low %v796, %v798
        %v848 = vcombine.low %v837, %v839
        %v850 = vunpack.c.l.s4 1983009808
        %v851 = vunpack.c.0.s8 %v850
        %v852 = vlaneseq
        %v853 = vshrl.u32 %v852, 7
        %v854 = vsub.s32 %v851, %v853
        %v855 = vrot.slane %v847, %v854
        %v857 = vunpack.c.l.s4 1983009808
        %v858 = vunpack.c.0.s8 %v857
        %v859 = vlaneseq
        %v860 = vshrl.u32 %v859, 7
        %v861 = vsub.s32 %v858, %v860
        %v862 = vrot.slane %v848, %v861
        %v863 = vcombine.low %v855, %v862
        %s865 = scalar_lea.vmem [#allocation3], 16
        %866 = vst [vmem:[%s865] sm:$0xff] %v863
        %s867 = scalar_lea.vmem [#allocation2], 6
        %v868 = vld [vmem:[%s867] sm:$0x3]
        %v869 = vpack.c.bf16 %v868, %v868
        %870 = vmatprep.subr.bf16.mxu0 %v509
        %871 = vmatpush1.bf16.msra.mxu0 %v508
        %872 = vmatprep.subr.bf16.mxu0 %v505
        %873 = vmatpush1.bf16.msra.mxu0 %v504
        %874 = vmatprep.subr.bf16.mxu0 %v501
        %875 = vmatpush1.bf16.msra.mxu0 %v500
        %876 = vmatprep.subr.bf16.mxu0 %v497
        %877 = vmatpush1.bf16.msra.mxu0 %v496
        %878 = vmatprep.subr.bf16.mxu0 %v493
        %879 = vmatpush1.bf16.msra.mxu0 %v492
        %880 = vmatprep.subr.bf16.mxu0 %v489
        %881 = vmatpush1.bf16.msra.mxu0 %v488
        %882 = vmatprep.subr.bf16.mxu0 %v485
        %883 = vmatpush1.bf16.msra.mxu0 %v484
        %884 = vmatprep.subr.bf16.mxu0 %v481
        %885 = vmatpush1.bf16.msra.mxu0 %v480
        %886 = vmatprep.subr.bf16.mxu0 0
        %887 = vmatpush2.bf16.msra.mxu0 0
        %888 = vmatprep.subr.bf16.mxu0 0
        %889 = vmatpush2.bf16.msra.mxu0 0
        %890 = vmatprep.subr.bf16.mxu0 0
        %891 = vmatpush2.bf16.msra.mxu0 0
        %892 = vmatprep.subr.bf16.mxu0 0
        %893 = vmatpush2.bf16.msra.mxu0 0
        %894 = vmatprep.subr.bf16.mxu0 0
        %895 = vmatpush2.bf16.msra.mxu0 0
        %896 = vmatprep.subr.bf16.mxu0 0
        %897 = vmatpush2.bf16.msra.mxu0 0
        %898 = vmatprep.subr.bf16.mxu0 0
        %899 = vmatpush2.bf16.msra.mxu0 0
        %900 = vmatprep.subr.bf16.mxu0 0
        %901 = vmatpush2.bf16.msra.mxu0 0
        %902 = vmatprep.mubr.bf16.mxu0 0
        %903 = vmatmul.mubr.bf16.gmra.mxu0 %v869
        %v904 = vpop.f32.mrf.mxu0
        %v905 = vadd.f32 %v367, %v904
        %v906 = vpop.f32.mrf.mxu0
        %v907 = vadd.f32 %v371, %v906
        %v908 = vpop.f32.mrf.mxu0
        %v909 = vpop.f32.mrf.mxu0
        %910 = vdwg.mxu0
        %911 = vmatprep.subr.bf16.mxu0 %v511
        %912 = vmatpush1.bf16.msra.mxu0 %v510
        %913 = vmatprep.subr.bf16.mxu0 %v507
        %914 = vmatpush1.bf16.msra.mxu0 %v506
        %915 = vmatprep.subr.bf16.mxu0 %v503
        %916 = vmatpush1.bf16.msra.mxu0 %v502
        %917 = vmatprep.subr.bf16.mxu0 %v499
        %918 = vmatpush1.bf16.msra.mxu0 %v498
        %919 = vmatprep.subr.bf16.mxu0 %v495
        %920 = vmatpush1.bf16.msra.mxu0 %v494
        %921 = vmatprep.subr.bf16.mxu0 %v491
        %922 = vmatpush1.bf16.msra.mxu0 %v490
        %923 = vmatprep.subr.bf16.mxu0 %v487
        %924 = vmatpush1.bf16.msra.mxu0 %v486
        %925 = vmatprep.subr.bf16.mxu0 %v483
        %926 = vmatpush1.bf16.msra.mxu0 %v482
        %927 = vmatprep.subr.bf16.mxu0 0
        %928 = vmatpush2.bf16.msra.mxu0 0
        %929 = vmatprep.subr.bf16.mxu0 0
        %930 = vmatpush2.bf16.msra.mxu0 0
        %931 = vmatprep.subr.bf16.mxu0 0
        %932 = vmatpush2.bf16.msra.mxu0 0
        %933 = vmatprep.subr.bf16.mxu0 0
        %934 = vmatpush2.bf16.msra.mxu0 0
        %935 = vmatprep.subr.bf16.mxu0 0
        %936 = vmatpush2.bf16.msra.mxu0 0
        %937 = vmatprep.subr.bf16.mxu0 0
        %938 = vmatpush2.bf16.msra.mxu0 0
        %939 = vmatprep.subr.bf16.mxu0 0
        %940 = vmatpush2.bf16.msra.mxu0 0
        %941 = vmatprep.subr.bf16.mxu0 0
        %942 = vmatpush2.bf16.msra.mxu0 0
        %943 = vmatprep.mubr.bf16.mxu0 0
        %944 = vmatmul.mubr.bf16.gmra.mxu0 %v869
        %v945 = vpop.f32.mrf.mxu0
        %v946 = vadd.f32 %v375, %v945
        %v947 = vpop.f32.mrf.mxu0
        %v948 = vadd.f32 %v379, %v947
        %v949 = vpop.f32.mrf.mxu0
        %v950 = vpop.f32.mrf.mxu0
        %951 = vdwg.mxu0
        %v956 = vcombine.low %v905, %v907
        %v957 = vcombine.low %v946, %v948
        %v959 = vunpack.c.l.s4 1983009808
        %v960 = vunpack.c.0.s8 %v959
        %v961 = vlaneseq
        %v962 = vshrl.u32 %v961, 7
        %v963 = vsub.s32 %v960, %v962
        %v964 = vrot.slane %v956, %v963
        %v966 = vunpack.c.l.s4 1983009808
        %v967 = vunpack.c.0.s8 %v966
        %v968 = vlaneseq
        %v969 = vshrl.u32 %v968, 7
        %v970 = vsub.s32 %v967, %v969
        %v971 = vrot.slane %v957, %v970
        %v972 = vcombine.low %v964, %v971
        %s974 = scalar_lea.vmem [#allocation3], 24
        %975 = vst [vmem:[%s974] sm:$0xff] %v972
        %s976 = scalar_lea.vmem [#allocation2], 8
        %v977 = vld [vmem:[%s976] sm:$0x3]
        %v978 = vpack.c.bf16 %v977, %v977
        %979 = vmatprep.subr.bf16.mxu0 %v509
        %980 = vmatpush1.bf16.msra.mxu0 %v508
        %981 = vmatprep.subr.bf16.mxu0 %v505
        %982 = vmatpush1.bf16.msra.mxu0 %v504
        %983 = vmatprep.subr.bf16.mxu0 %v501
        %984 = vmatpush1.bf16.msra.mxu0 %v500
        %985 = vmatprep.subr.bf16.mxu0 %v497
        %986 = vmatpush1.bf16.msra.mxu0 %v496
        %987 = vmatprep.subr.bf16.mxu0 %v493
        %988 = vmatpush1.bf16.msra.mxu0 %v492
        %989 = vmatprep.subr.bf16.mxu0 %v489
        %990 = vmatpush1.bf16.msra.mxu0 %v488
        %991 = vmatprep.subr.bf16.mxu0 %v485
        %992 = vmatpush1.bf16.msra.mxu0 %v484
        %993 = vmatprep.subr.bf16.mxu0 %v481
        %994 = vmatpush1.bf16.msra.mxu0 %v480
        %995 = vmatprep.subr.bf16.mxu0 0
        %996 = vmatpush2.bf16.msra.mxu0 0
        %997 = vmatprep.subr.bf16.mxu0 0
        %998 = vmatpush2.bf16.msra.mxu0 0
        %999 = vmatprep.subr.bf16.mxu0 0
        %1000 = vmatpush2.bf16.msra.mxu0 0
        %1001 = vmatprep.subr.bf16.mxu0 0
        %1002 = vmatpush2.bf16.msra.mxu0 0
        %1003 = vmatprep.subr.bf16.mxu0 0
        %1004 = vmatpush2.bf16.msra.mxu0 0
        %1005 = vmatprep.subr.bf16.mxu0 0
        %1006 = vmatpush2.bf16.msra.mxu0 0
        %1007 = vmatprep.subr.bf16.mxu0 0
        %1008 = vmatpush2.bf16.msra.mxu0 0
        %1009 = vmatprep.subr.bf16.mxu0 0
        %1010 = vmatpush2.bf16.msra.mxu0 0
        %1011 = vmatprep.mubr.bf16.mxu0 0
        %1012 = vmatmul.mubr.bf16.gmra.mxu0 %v978
        %v1013 = vpop.f32.mrf.mxu0
        %v1014 = vadd.f32 %v367, %v1013
        %v1015 = vpop.f32.mrf.mxu0
        %v1016 = vadd.f32 %v371, %v1015
        %v1017 = vpop.f32.mrf.mxu0
        %v1018 = vpop.f32.mrf.mxu0
        %1019 = vdwg.mxu0
        %1020 = vmatprep.subr.bf16.mxu0 %v511
        %1021 = vmatpush1.bf16.msra.mxu0 %v510
        %1022 = vmatprep.subr.bf16.mxu0 %v507
        %1023 = vmatpush1.bf16.msra.mxu0 %v506
        %1024 = vmatprep.subr.bf16.mxu0 %v503
        %1025 = vmatpush1.bf16.msra.mxu0 %v502
        %1026 = vmatprep.subr.bf16.mxu0 %v499
        %1027 = vmatpush1.bf16.msra.mxu0 %v498
        %1028 = vmatprep.subr.bf16.mxu0 %v495
        %1029 = vmatpush1.bf16.msra.mxu0 %v494
        %1030 = vmatprep.subr.bf16.mxu0 %v491
        %1031 = vmatpush1.bf16.msra.mxu0 %v490
        %1032 = vmatprep.subr.bf16.mxu0 %v487
        %1033 = vmatpush1.bf16.msra.mxu0 %v486
        %1034 = vmatprep.subr.bf16.mxu0 %v483
        %1035 = vmatpush1.bf16.msra.mxu0 %v482
        %1036 = vmatprep.subr.bf16.mxu0 0
        %1037 = vmatpush2.bf16.msra.mxu0 0
        %1038 = vmatprep.subr.bf16.mxu0 0
        %1039 = vmatpush2.bf16.msra.mxu0 0
        %1040 = vmatprep.subr.bf16.mxu0 0
        %1041 = vmatpush2.bf16.msra.mxu0 0
        %1042 = vmatprep.subr.bf16.mxu0 0
        %1043 = vmatpush2.bf16.msra.mxu0 0
        %1044 = vmatprep.subr.bf16.mxu0 0
        %1045 = vmatpush2.bf16.msra.mxu0 0
        %1046 = vmatprep.subr.bf16.mxu0 0
        %1047 = vmatpush2.bf16.msra.mxu0 0
        %1048 = vmatprep.subr.bf16.mxu0 0
        %1049 = vmatpush2.bf16.msra.mxu0 0
        %1050 = vmatprep.subr.bf16.mxu0 0
        %1051 = vmatpush2.bf16.msra.mxu0 0
        %1052 = vmatprep.mubr.bf16.mxu0 0
        %1053 = vmatmul.mubr.bf16.gmra.mxu0 %v978
        %v1054 = vpop.f32.mrf.mxu0
        %v1055 = vadd.f32 %v375, %v1054
        %v1056 = vpop.f32.mrf.mxu0
        %v1057 = vadd.f32 %v379, %v1056
        %v1058 = vpop.f32.mrf.mxu0
        %v1059 = vpop.f32.mrf.mxu0
        %1060 = vdwg.mxu0
        %v1065 = vcombine.low %v1014, %v1016
        %v1066 = vcombine.low %v1055, %v1057
        %v1068 = vunpack.c.l.s4 1983009808
        %v1069 = vunpack.c.0.s8 %v1068
        %v1070 = vlaneseq
        %v1071 = vshrl.u32 %v1070, 7
        %v1072 = vsub.s32 %v1069, %v1071
        %v1073 = vrot.slane %v1065, %v1072
        %v1075 = vunpack.c.l.s4 1983009808
        %v1076 = vunpack.c.0.s8 %v1075
        %v1077 = vlaneseq
        %v1078 = vshrl.u32 %v1077, 7
        %v1079 = vsub.s32 %v1076, %v1078
        %v1080 = vrot.slane %v1066, %v1079
        %v1081 = vcombine.low %v1073, %v1080
        %s1083 = scalar_lea.vmem [#allocation3], 32
        %1084 = vst [vmem:[%s1083] sm:$0xff] %v1081
        %s1085 = scalar_lea.vmem [#allocation2], 10
        %v1086 = vld [vmem:[%s1085] sm:$0x3]
        %v1087 = vpack.c.bf16 %v1086, %v1086
        %1088 = vmatprep.subr.bf16.mxu0 %v509
        %1089 = vmatpush1.bf16.msra.mxu0 %v508
        %1090 = vmatprep.subr.bf16.mxu0 %v505
        %1091 = vmatpush1.bf16.msra.mxu0 %v504
        %1092 = vmatprep.subr.bf16.mxu0 %v501
        %1093 = vmatpush1.bf16.msra.mxu0 %v500
        %1094 = vmatprep.subr.bf16.mxu0 %v497
        %1095 = vmatpush1.bf16.msra.mxu0 %v496
        %1096 = vmatprep.subr.bf16.mxu0 %v493
        %1097 = vmatpush1.bf16.msra.mxu0 %v492
        %1098 = vmatprep.subr.bf16.mxu0 %v489
        %1099 = vmatpush1.bf16.msra.mxu0 %v488
        %1100 = vmatprep.subr.bf16.mxu0 %v485
        %1101 = vmatpush1.bf16.msra.mxu0 %v484
        %1102 = vmatprep.subr.bf16.mxu0 %v481
        %1103 = vmatpush1.bf16.msra.mxu0 %v480
        %1104 = vmatprep.subr.bf16.mxu0 0
        %1105 = vmatpush2.bf16.msra.mxu0 0
        %1106 = vmatprep.subr.bf16.mxu0 0
        %1107 = vmatpush2.bf16.msra.mxu0 0
        %1108 = vmatprep.subr.bf16.mxu0 0
        %1109 = vmatpush2.bf16.msra.mxu0 0
        %1110 = vmatprep.subr.bf16.mxu0 0
        %1111 = vmatpush2.bf16.msra.mxu0 0
        %1112 = vmatprep.subr.bf16.mxu0 0
        %1113 = vmatpush2.bf16.msra.mxu0 0
        %1114 = vmatprep.subr.bf16.mxu0 0
        %1115 = vmatpush2.bf16.msra.mxu0 0
        %1116 = vmatprep.subr.bf16.mxu0 0
        %1117 = vmatpush2.bf16.msra.mxu0 0
        %1118 = vmatprep.subr.bf16.mxu0 0
        %1119 = vmatpush2.bf16.msra.mxu0 0
        %1120 = vmatprep.mubr.bf16.mxu0 0
        %1121 = vmatmul.mubr.bf16.gmra.mxu0 %v1087
        %v1122 = vpop.f32.mrf.mxu0
        %v1123 = vadd.f32 %v367, %v1122
        %v1124 = vpop.f32.mrf.mxu0
        %v1125 = vadd.f32 %v371, %v1124
        %v1126 = vpop.f32.mrf.mxu0
        %v1127 = vpop.f32.mrf.mxu0
        %1128 = vdwg.mxu0
        %1129 = vmatprep.subr.bf16.mxu0 %v511
        %1130 = vmatpush1.bf16.msra.mxu0 %v510
        %1131 = vmatprep.subr.bf16.mxu0 %v507
        %1132 = vmatpush1.bf16.msra.mxu0 %v506
        %1133 = vmatprep.subr.bf16.mxu0 %v503
        %1134 = vmatpush1.bf16.msra.mxu0 %v502
        %1135 = vmatprep.subr.bf16.mxu0 %v499
        %1136 = vmatpush1.bf16.msra.mxu0 %v498
        %1137 = vmatprep.subr.bf16.mxu0 %v495
        %1138 = vmatpush1.bf16.msra.mxu0 %v494
        %1139 = vmatprep.subr.bf16.mxu0 %v491
        %1140 = vmatpush1.bf16.msra.mxu0 %v490
        %1141 = vmatprep.subr.bf16.mxu0 %v487
        %1142 = vmatpush1.bf16.msra.mxu0 %v486
        %1143 = vmatprep.subr.bf16.mxu0 %v483
        %1144 = vmatpush1.bf16.msra.mxu0 %v482
        %1145 = vmatprep.subr.bf16.mxu0 0
        %1146 = vmatpush2.bf16.msra.mxu0 0
        %1147 = vmatprep.subr.bf16.mxu0 0
        %1148 = vmatpush2.bf16.msra.mxu0 0
        %1149 = vmatprep.subr.bf16.mxu0 0
        %1150 = vmatpush2.bf16.msra.mxu0 0
        %1151 = vmatprep.subr.bf16.mxu0 0
        %1152 = vmatpush2.bf16.msra.mxu0 0
        %1153 = vmatprep.subr.bf16.mxu0 0
        %1154 = vmatpush2.bf16.msra.mxu0 0
        %1155 = vmatprep.subr.bf16.mxu0 0
        %1156 = vmatpush2.bf16.msra.mxu0 0
        %1157 = vmatprep.subr.bf16.mxu0 0
        %1158 = vmatpush2.bf16.msra.mxu0 0
        %1159 = vmatprep.subr.bf16.mxu0 0
        %1160 = vmatpush2.bf16.msra.mxu0 0
        %1161 = vmatprep.mubr.bf16.mxu0 0
        %1162 = vmatmul.mubr.bf16.gmra.mxu0 %v1087
        %v1163 = vpop.f32.mrf.mxu0
        %v1164 = vadd.f32 %v375, %v1163
        %v1165 = vpop.f32.mrf.mxu0
        %v1166 = vadd.f32 %v379, %v1165
        %v1167 = vpop.f32.mrf.mxu0
        %v1168 = vpop.f32.mrf.mxu0
        %1169 = vdwg.mxu0
        %v1174 = vcombine.low %v1123, %v1125
        %v1175 = vcombine.low %v1164, %v1166
        %v1177 = vunpack.c.l.s4 1983009808
        %v1178 = vunpack.c.0.s8 %v1177
        %v1179 = vlaneseq
        %v1180 = vshrl.u32 %v1179, 7
        %v1181 = vsub.s32 %v1178, %v1180
        %v1182 = vrot.slane %v1174, %v1181
        %v1184 = vunpack.c.l.s4 1983009808
        %v1185 = vunpack.c.0.s8 %v1184
        %v1186 = vlaneseq
        %v1187 = vshrl.u32 %v1186, 7
        %v1188 = vsub.s32 %v1185, %v1187
        %v1189 = vrot.slane %v1175, %v1188
        %v1190 = vcombine.low %v1182, %v1189
        %s1192 = scalar_lea.vmem [#allocation3], 40
        %1193 = vst [vmem:[%s1192] sm:$0xff] %v1190
        %s1194 = scalar_lea.vmem [#allocation2], 12
        %v1195 = vld [vmem:[%s1194] sm:$0x3]
        %v1196 = vpack.c.bf16 %v1195, %v1195
        %1197 = vmatprep.subr.bf16.mxu0 %v509
        %1198 = vmatpush1.bf16.msra.mxu0 %v508
        %1199 = vmatprep.subr.bf16.mxu0 %v505
        %1200 = vmatpush1.bf16.msra.mxu0 %v504
        %1201 = vmatprep.subr.bf16.mxu0 %v501
        %1202 = vmatpush1.bf16.msra.mxu0 %v500
        %1203 = vmatprep.subr.bf16.mxu0 %v497
        %1204 = vmatpush1.bf16.msra.mxu0 %v496
        %1205 = vmatprep.subr.bf16.mxu0 %v493
        %1206 = vmatpush1.bf16.msra.mxu0 %v492
        %1207 = vmatprep.subr.bf16.mxu0 %v489
        %1208 = vmatpush1.bf16.msra.mxu0 %v488
        %1209 = vmatprep.subr.bf16.mxu0 %v485
        %1210 = vmatpush1.bf16.msra.mxu0 %v484
        %1211 = vmatprep.subr.bf16.mxu0 %v481
        %1212 = vmatpush1.bf16.msra.mxu0 %v480
        %1213 = vmatprep.subr.bf16.mxu0 0
        %1214 = vmatpush2.bf16.msra.mxu0 0
        %1215 = vmatprep.subr.bf16.mxu0 0
        %1216 = vmatpush2.bf16.msra.mxu0 0
        %1217 = vmatprep.subr.bf16.mxu0 0
        %1218 = vmatpush2.bf16.msra.mxu0 0
        %1219 = vmatprep.subr.bf16.mxu0 0
        %1220 = vmatpush2.bf16.msra.mxu0 0
        %1221 = vmatprep.subr.bf16.mxu0 0
        %1222 = vmatpush2.bf16.msra.mxu0 0
        %1223 = vmatprep.subr.bf16.mxu0 0
        %1224 = vmatpush2.bf16.msra.mxu0 0
        %1225 = vmatprep.subr.bf16.mxu0 0
        %1226 = vmatpush2.bf16.msra.mxu0 0
        %1227 = vmatprep.subr.bf16.mxu0 0
        %1228 = vmatpush2.bf16.msra.mxu0 0
        %1229 = vmatprep.mubr.bf16.mxu0 0
        %1230 = vmatmul.mubr.bf16.gmra.mxu0 %v1196
        %v1231 = vpop.f32.mrf.mxu0
        %v1232 = vadd.f32 %v367, %v1231
        %v1233 = vpop.f32.mrf.mxu0
        %v1234 = vadd.f32 %v371, %v1233
        %v1235 = vpop.f32.mrf.mxu0
        %v1236 = vpop.f32.mrf.mxu0
        %1237 = vdwg.mxu0
        %1238 = vmatprep.subr.bf16.mxu0 %v511
        %1239 = vmatpush1.bf16.msra.mxu0 %v510
        %1240 = vmatprep.subr.bf16.mxu0 %v507
        %1241 = vmatpush1.bf16.msra.mxu0 %v506
        %1242 = vmatprep.subr.bf16.mxu0 %v503
        %1243 = vmatpush1.bf16.msra.mxu0 %v502
        %1244 = vmatprep.subr.bf16.mxu0 %v499
        %1245 = vmatpush1.bf16.msra.mxu0 %v498
        %1246 = vmatprep.subr.bf16.mxu0 %v495
        %1247 = vmatpush1.bf16.msra.mxu0 %v494
        %1248 = vmatprep.subr.bf16.mxu0 %v491
        %1249 = vmatpush1.bf16.msra.mxu0 %v490
        %1250 = vmatprep.subr.bf16.mxu0 %v487
        %1251 = vmatpush1.bf16.msra.mxu0 %v486
        %1252 = vmatprep.subr.bf16.mxu0 %v483
        %1253 = vmatpush1.bf16.msra.mxu0 %v482
        %1254 = vmatprep.subr.bf16.mxu0 0
        %1255 = vmatpush2.bf16.msra.mxu0 0
        %1256 = vmatprep.subr.bf16.mxu0 0
        %1257 = vmatpush2.bf16.msra.mxu0 0
        %1258 = vmatprep.subr.bf16.mxu0 0
        %1259 = vmatpush2.bf16.msra.mxu0 0
        %1260 = vmatprep.subr.bf16.mxu0 0
        %1261 = vmatpush2.bf16.msra.mxu0 0
        %1262 = vmatprep.subr.bf16.mxu0 0
        %1263 = vmatpush2.bf16.msra.mxu0 0
        %1264 = vmatprep.subr.bf16.mxu0 0
        %1265 = vmatpush2.bf16.msra.mxu0 0
        %1266 = vmatprep.subr.bf16.mxu0 0
        %1267 = vmatpush2.bf16.msra.mxu0 0
        %1268 = vmatprep.subr.bf16.mxu0 0
        %1269 = vmatpush2.bf16.msra.mxu0 0
        %1270 = vmatprep.mubr.bf16.mxu0 0
        %1271 = vmatmul.mubr.bf16.gmra.mxu0 %v1196
        %v1272 = vpop.f32.mrf.mxu0
        %v1273 = vadd.f32 %v375, %v1272
        %v1274 = vpop.f32.mrf.mxu0
        %v1275 = vadd.f32 %v379, %v1274
        %v1276 = vpop.f32.mrf.mxu0
        %v1277 = vpop.f32.mrf.mxu0
        %1278 = vdwg.mxu0
        %v1283 = vcombine.low %v1232, %v1234
        %v1284 = vcombine.low %v1273, %v1275
        %v1286 = vunpack.c.l.s4 1983009808
        %v1287 = vunpack.c.0.s8 %v1286
        %v1288 = vlaneseq
        %v1289 = vshrl.u32 %v1288, 7
        %v1290 = vsub.s32 %v1287, %v1289
        %v1291 = vrot.slane %v1283, %v1290
        %v1293 = vunpack.c.l.s4 1983009808
        %v1294 = vunpack.c.0.s8 %v1293
        %v1295 = vlaneseq
        %v1296 = vshrl.u32 %v1295, 7
        %v1297 = vsub.s32 %v1294, %v1296
        %v1298 = vrot.slane %v1284, %v1297
        %v1299 = vcombine.low %v1291, %v1298
        %s1301 = scalar_lea.vmem [#allocation3], 48
        %1302 = vst [vmem:[%s1301] sm:$0xff] %v1299
        %s1303 = scalar_lea.vmem [#allocation2], 14
        %v1304 = vld [vmem:[%s1303] sm:$0x3]
        %v1305 = vpack.c.bf16 %v1304, %v1304
        %1306 = vmatprep.subr.bf16.mxu0 %v509
        %1307 = vmatpush1.bf16.msra.mxu0 %v508
        %1308 = vmatprep.subr.bf16.mxu0 %v505
        %1309 = vmatpush1.bf16.msra.mxu0 %v504
        %1310 = vmatprep.subr.bf16.mxu0 %v501
        %1311 = vmatpush1.bf16.msra.mxu0 %v500
        %1312 = vmatprep.subr.bf16.mxu0 %v497
        %1313 = vmatpush1.bf16.msra.mxu0 %v496
        %1314 = vmatprep.subr.bf16.mxu0 %v493
        %1315 = vmatpush1.bf16.msra.mxu0 %v492
        %1316 = vmatprep.subr.bf16.mxu0 %v489
        %1317 = vmatpush1.bf16.msra.mxu0 %v488
        %1318 = vmatprep.subr.bf16.mxu0 %v485
        %1319 = vmatpush1.bf16.msra.mxu0 %v484
        %1320 = vmatprep.subr.bf16.mxu0 %v481
        %1321 = vmatpush1.bf16.msra.mxu0 %v480
        %1322 = vmatprep.subr.bf16.mxu0 0
        %1323 = vmatpush2.bf16.msra.mxu0 0
        %1324 = vmatprep.subr.bf16.mxu0 0
        %1325 = vmatpush2.bf16.msra.mxu0 0
        %1326 = vmatprep.subr.bf16.mxu0 0
        %1327 = vmatpush2.bf16.msra.mxu0 0
        %1328 = vmatprep.subr.bf16.mxu0 0
        %1329 = vmatpush2.bf16.msra.mxu0 0
        %1330 = vmatprep.subr.bf16.mxu0 0
        %1331 = vmatpush2.bf16.msra.mxu0 0
        %1332 = vmatprep.subr.bf16.mxu0 0
        %1333 = vmatpush2.bf16.msra.mxu0 0
        %1334 = vmatprep.subr.bf16.mxu0 0
        %1335 = vmatpush2.bf16.msra.mxu0 0
        %1336 = vmatprep.subr.bf16.mxu0 0
        %1337 = vmatpush2.bf16.msra.mxu0 0
        %1338 = vmatprep.mubr.bf16.mxu0 0
        %1339 = vmatmul.mubr.bf16.gmra.mxu0 %v1305
        %v1340 = vpop.f32.mrf.mxu0
        %v1341 = vadd.f32 %v367, %v1340
        %v1342 = vpop.f32.mrf.mxu0
        %v1343 = vadd.f32 %v371, %v1342
        %v1344 = vpop.f32.mrf.mxu0
        %v1345 = vpop.f32.mrf.mxu0
        %1346 = vdwg.mxu0
        %1347 = vmatprep.subr.bf16.mxu0 %v511
        %1348 = vmatpush1.bf16.msra.mxu0 %v510
        %1349 = vmatprep.subr.bf16.mxu0 %v507
        %1350 = vmatpush1.bf16.msra.mxu0 %v506
        %1351 = vmatprep.subr.bf16.mxu0 %v503
        %1352 = vmatpush1.bf16.msra.mxu0 %v502
        %1353 = vmatprep.subr.bf16.mxu0 %v499
        %1354 = vmatpush1.bf16.msra.mxu0 %v498
        %1355 = vmatprep.subr.bf16.mxu0 %v495
        %1356 = vmatpush1.bf16.msra.mxu0 %v494
        %1357 = vmatprep.subr.bf16.mxu0 %v491
        %1358 = vmatpush1.bf16.msra.mxu0 %v490
        %1359 = vmatprep.subr.bf16.mxu0 %v487
        %1360 = vmatpush1.bf16.msra.mxu0 %v486
        %1361 = vmatprep.subr.bf16.mxu0 %v483
        %1362 = vmatpush1.bf16.msra.mxu0 %v482
        %1363 = vmatprep.subr.bf16.mxu0 0
        %1364 = vmatpush2.bf16.msra.mxu0 0
        %1365 = vmatprep.subr.bf16.mxu0 0
        %1366 = vmatpush2.bf16.msra.mxu0 0
        %1367 = vmatprep.subr.bf16.mxu0 0
        %1368 = vmatpush2.bf16.msra.mxu0 0
        %1369 = vmatprep.subr.bf16.mxu0 0
        %1370 = vmatpush2.bf16.msra.mxu0 0
        %1371 = vmatprep.subr.bf16.mxu0 0
        %1372 = vmatpush2.bf16.msra.mxu0 0
        %1373 = vmatprep.subr.bf16.mxu0 0
        %1374 = vmatpush2.bf16.msra.mxu0 0
        %1375 = vmatprep.subr.bf16.mxu0 0
        %1376 = vmatpush2.bf16.msra.mxu0 0
        %1377 = vmatprep.subr.bf16.mxu0 0
        %1378 = vmatpush2.bf16.msra.mxu0 0
        %1379 = vmatprep.mubr.bf16.mxu0 0
        %1380 = vmatmul.mubr.bf16.gmra.mxu0 %v1305
        %v1381 = vpop.f32.mrf.mxu0
        %v1382 = vadd.f32 %v375, %v1381
        %v1383 = vpop.f32.mrf.mxu0
        %v1384 = vadd.f32 %v379, %v1383
        %v1385 = vpop.f32.mrf.mxu0
        %v1386 = vpop.f32.mrf.mxu0
        %1387 = vdwg.mxu0
        %v1392 = vcombine.low %v1341, %v1343
        %v1393 = vcombine.low %v1382, %v1384
        %v1395 = vunpack.c.l.s4 1983009808
        %v1396 = vunpack.c.0.s8 %v1395
        %v1397 = vlaneseq
        %v1398 = vshrl.u32 %v1397, 7
        %v1399 = vsub.s32 %v1396, %v1398
        %v1400 = vrot.slane %v1392, %v1399
        %v1402 = vunpack.c.l.s4 1983009808
        %v1403 = vunpack.c.0.s8 %v1402
        %v1404 = vlaneseq
        %v1405 = vshrl.u32 %v1404, 7
        %v1406 = vsub.s32 %v1403, %v1405
        %v1407 = vrot.slane %v1393, %v1406
        %v1408 = vcombine.low %v1400, %v1407
        %s1410 = scalar_lea.vmem [#allocation3], 56
        %1411 = vst [vmem:[%s1410] sm:$0xff] %v1408
        %v1412 = vlaneseq
        %v1413 = vand.u32 %v1412, 127
        %v1414 = vadd.s32 %v1413, 128
        %v1415 = vadd.s32 %v1413, 256
        %v1416 = vadd.s32 %v1413, 384
        %vm1417 = vcmp.lt.s32.totalorder %v1413, 0
        %v1418 = vsub.s32 0, %v1413
        %v1419 = vsel %vm1417, %v1418, %v1413
        %v1420 = vshrl.u32 %v1419, 7
        %v1421 = vand.u32 %v1419, 127
        %v1422 = vsub.s32 0, %v1421
        %v1423 = vsel %vm1417, %v1422, %v1421
        %vm1424 = vcmp.lt.s32.totalorder %v1414, 0
        %v1425 = vsub.s32 0, %v1414
        %v1426 = vsel %vm1424, %v1425, %v1414
        %v1427 = vshrl.u32 %v1426, 7
        %v1428 = vand.u32 %v1426, 127
        %v1429 = vsub.s32 0, %v1428
        %v1430 = vsel %vm1424, %v1429, %v1428
        %vm1431 = vcmp.lt.s32.totalorder %v1415, 0
        %v1432 = vsub.s32 0, %v1415
        %v1433 = vsel %vm1431, %v1432, %v1415
        %v1434 = vshrl.u32 %v1433, 7
        %v1435 = vand.u32 %v1433, 127
        %v1436 = vsub.s32 0, %v1435
        %v1437 = vsel %vm1431, %v1436, %v1435
        %vm1438 = vcmp.lt.s32.totalorder %v1416, 0
        %v1439 = vsub.s32 0, %v1416
        %v1440 = vsel %vm1438, %v1439, %v1416
        %v1441 = vshrl.u32 %v1440, 7
        %v1442 = vand.u32 %v1440, 127
        %v1443 = vsub.s32 0, %v1442
        %v1444 = vsel %vm1438, %v1443, %v1442
        %vm1445 = vcmp.ne.s32.totalorder %v1423, 0
        %vm1446 = vcmp.ne.s32.totalorder %v1430, 0
        %vm1447 = vcmp.ne.s32.totalorder %v1437, 0
        %vm1448 = vcmp.ne.s32.totalorder %v1444, 0
        %vm1449 = vcmp.lt.s32.totalorder %v1423, 0
        %vm1450 = vcmp.lt.s32.totalorder %v1430, 0
        %vm1451 = vcmp.lt.s32.totalorder %v1437, 0
        %vm1452 = vcmp.lt.s32.totalorder %v1444, 0
        %vm1453 = vmand %vm1449, %vm1445
        %vm1454 = vmand %vm1450, %vm1446
        %vm1455 = vmand %vm1451, %vm1447
        %vm1456 = vmand %vm1452, %vm1448
        %v1457 = vadd.s32 %v1423, 128
        %v1458 = vadd.s32 %v1430, 128
        %v1459 = vadd.s32 %v1437, 128
        %v1460 = vadd.s32 %v1444, 128
        %v1461 = vsel %vm1453, %v1457, %v1423
        %v1462 = vsel %vm1454, %v1458, %v1430
        %v1463 = vsel %vm1455, %v1459, %v1437
        %v1464 = vsel %vm1456, %v1460, %v1444
        %vm1465 = vcmp.lt.s32.totalorder %v1461, 64
        %vm1466 = vcmp.lt.s32.totalorder %v1462, 64
        %vm1467 = vcmp.lt.s32.totalorder %v1463, 64
        %vm1468 = vcmp.lt.s32.totalorder %v1464, 64
        %vm1469 = vcmp.lt.s32.totalorder %v1413, 64
        %v1470 = vld [vmem:[#allocation3] sm:$0xff]
        %v1471 = vld [vmem:[%s1410] sm:$0xff]
        %v1472 = vsel %vm1465, 1, 0
        %v1473 = vsel %vm1466, 1, 0
        %v1474 = vsel %vm1467, 1, 0
        %v1475 = vsel %vm1468, 1, 0
        %vm1476 = vcmp.eq.s32.totalorder %v1472, 1
        %vm1477 = vcmp.eq.s32.totalorder %v1473, 1
        %vm1478 = vcmp.eq.s32.totalorder %v1474, 1
        %vm1479 = vcmp.eq.s32.totalorder %v1475, 1
        %v1481 = vcombine.high %v1470, %v1470
        %v1483 = vunpack.c.l.s4 1983009808
        %v1484 = vunpack.c.0.s8 %v1483
        %v1485 = vlaneseq
        %v1486 = vshrl.u32 %v1485, 7
        %v1487 = vsub.s32 %v1484, %v1486
        %v1488 = vrot.slane %v1470, %v1487
        %v1490 = vunpack.c.l.s4 1983009808
        %v1491 = vunpack.c.0.s8 %v1490
        %v1492 = vlaneseq
        %v1493 = vshrl.u32 %v1492, 7
        %v1494 = vsub.s32 %v1491, %v1493
        %v1495 = vrot.slane %v1481, %v1494
        %v1496 = vcombine.high %v1488, %v1488
        %v1497 = vcombine.high %v1495, %v1495
        %v1503 = vcombine.high %v1471, %v1471
        %v1505 = vunpack.c.l.s4 1983009808
        %v1506 = vunpack.c.0.s8 %v1505
        %v1507 = vlaneseq
        %v1508 = vshrl.u32 %v1507, 7
        %v1509 = vsub.s32 %v1506, %v1508
        %v1510 = vrot.slane %v1471, %v1509
        %v1512 = vunpack.c.l.s4 1983009808
        %v1513 = vunpack.c.0.s8 %v1512
        %v1514 = vlaneseq
        %v1515 = vshrl.u32 %v1514, 7
        %v1516 = vsub.s32 %v1513, %v1515
        %v1517 = vrot.slane %v1503, %v1516
        %v1518 = vcombine.high %v1510, %v1510
        %v1519 = vcombine.high %v1517, %v1517
        %v1524 = vsel %vm1476, %v1488, %v1510
        %v1525 = vsel %vm1477, %v1496, %v1518
        %v1526 = vsel %vm1478, %v1495, %v1517
        %v1527 = vsel %vm1479, %v1497, %v1519
        %v1560 = vunpack.c.l.b16 %v328
        %v1561 = vunpack.c.h.b16 %v328
        %v1562 = vunpack.c.l.b16 %v329
        %v1563 = vunpack.c.h.b16 %v329
        %v1564 = vunpack.c.l.b16 %v330
        %v1565 = vunpack.c.h.b16 %v330
        %v1566 = vunpack.c.l.b16 %v331
        %v1567 = vunpack.c.h.b16 %v331
        %v1568 = vunpack.c.l.b16 %v332
        %v1569 = vunpack.c.h.b16 %v332
        %v1570 = vunpack.c.l.b16 %v333
        %v1571 = vunpack.c.h.b16 %v333
        %v1572 = vunpack.c.l.b16 %v334
        %v1573 = vunpack.c.h.b16 %v334
        %v1574 = vunpack.c.l.b16 %v335
        %v1575 = vunpack.c.h.b16 %v335
        %v1576 = vunpack.c.l.b16 %v336
        %v1577 = vunpack.c.h.b16 %v336
        %v1578 = vunpack.c.l.b16 %v337
        %v1579 = vunpack.c.h.b16 %v337
        %v1580 = vunpack.c.l.b16 %v338
        %v1581 = vunpack.c.h.b16 %v338
        %v1582 = vunpack.c.l.b16 %v339
        %v1583 = vunpack.c.h.b16 %v339
        %v1584 = vunpack.c.l.b16 %v340
        %v1585 = vunpack.c.h.b16 %v340
        %v1586 = vunpack.c.l.b16 %v341
        %v1587 = vunpack.c.h.b16 %v341
        %v1588 = vunpack.c.l.b16 %v342
        %v1589 = vunpack.c.h.b16 %v342
        %v1590 = vunpack.c.l.b16 %v343
        %v1591 = vunpack.c.h.b16 %v343
        %v1592 = vunpack.c.l.b16 %v344
        %v1593 = vunpack.c.h.b16 %v344
        %v1594 = vunpack.c.l.b16 %v345
        %v1595 = vunpack.c.h.b16 %v345
        %v1596 = vunpack.c.l.b16 %v346
        %v1597 = vunpack.c.h.b16 %v346
        %v1598 = vunpack.c.l.b16 %v347
        %v1599 = vunpack.c.h.b16 %v347
        %v1600 = vunpack.c.l.b16 %v348
        %v1601 = vunpack.c.h.b16 %v348
        %v1602 = vunpack.c.l.b16 %v349
        %v1603 = vunpack.c.h.b16 %v349
        %v1604 = vunpack.c.l.b16 %v350
        %v1605 = vunpack.c.h.b16 %v350
        %v1606 = vunpack.c.l.b16 %v351
        %v1607 = vunpack.c.h.b16 %v351
        %v1608 = vunpack.c.l.b16 %v352
        %v1609 = vunpack.c.h.b16 %v352
        %v1610 = vunpack.c.l.b16 %v353
        %v1611 = vunpack.c.h.b16 %v353
        %v1612 = vunpack.c.l.b16 %v354
        %v1613 = vunpack.c.h.b16 %v354
        %v1614 = vunpack.c.l.b16 %v355
        %v1615 = vunpack.c.h.b16 %v355
        %v1616 = vunpack.c.l.b16 %v356
        %v1617 = vunpack.c.h.b16 %v356
        %v1618 = vunpack.c.l.b16 %v357
        %v1619 = vunpack.c.h.b16 %v357
        %v1620 = vunpack.c.l.b16 %v358
        %v1621 = vunpack.c.h.b16 %v358
        %v1622 = vunpack.c.l.b16 %v359
        %v1623 = vunpack.c.h.b16 %v359
        %v1624 = vpack.c.b16 %v1564, %v1560
        %v1625 = vpack.c.b16 %v1565, %v1561
        %v1626 = vpack.c.b16 %v1566, %v1562
        %v1627 = vpack.c.b16 %v1567, %v1563
        %v1628 = vpack.c.b16 %v1572, %v1568
        %v1629 = vpack.c.b16 %v1573, %v1569
        %v1630 = vpack.c.b16 %v1574, %v1570
        %v1631 = vpack.c.b16 %v1575, %v1571
        %v1632 = vpack.c.b16 %v1580, %v1576
        %v1633 = vpack.c.b16 %v1581, %v1577
        %v1634 = vpack.c.b16 %v1582, %v1578
        %v1635 = vpack.c.b16 %v1583, %v1579
        %v1636 = vpack.c.b16 %v1588, %v1584
        %v1637 = vpack.c.b16 %v1589, %v1585
        %v1638 = vpack.c.b16 %v1590, %v1586
        %v1639 = vpack.c.b16 %v1591, %v1587
        %v1640 = vpack.c.b16 %v1596, %v1592
        %v1641 = vpack.c.b16 %v1597, %v1593
        %v1642 = vpack.c.b16 %v1598, %v1594
        %v1643 = vpack.c.b16 %v1599, %v1595
        %v1644 = vpack.c.b16 %v1604, %v1600
        %v1645 = vpack.c.b16 %v1605, %v1601
        %v1646 = vpack.c.b16 %v1606, %v1602
        %v1647 = vpack.c.b16 %v1607, %v1603
        %v1648 = vpack.c.b16 %v1612, %v1608
        %v1649 = vpack.c.b16 %v1613, %v1609
        %v1650 = vpack.c.b16 %v1614, %v1610
        %v1651 = vpack.c.b16 %v1615, %v1611
        %v1652 = vpack.c.b16 %v1620, %v1616
        %v1653 = vpack.c.b16 %v1621, %v1617
        %v1654 = vpack.c.b16 %v1622, %v1618
        %v1655 = vpack.c.b16 %v1623, %v1619
        %1688 = vmatprep.subr.bf16.mxu0 %v1653
        %1689 = vmatpush1.bf16.msra.mxu0 %v1652
        %1690 = vmatprep.subr.bf16.mxu0 %v1649
        %1691 = vmatpush1.bf16.msra.mxu0 %v1648
        %1692 = vmatprep.subr.bf16.mxu0 %v1645
        %1693 = vmatpush1.bf16.msra.mxu0 %v1644
        %1694 = vmatprep.subr.bf16.mxu0 %v1641
        %1695 = vmatpush1.bf16.msra.mxu0 %v1640
        %1696 = vmatprep.subr.bf16.mxu0 %v1637
        %1697 = vmatpush1.bf16.msra.mxu0 %v1636
        %1698 = vmatprep.subr.bf16.mxu0 %v1633
        %1699 = vmatpush1.bf16.msra.mxu0 %v1632
        %1700 = vmatprep.subr.bf16.mxu0 %v1629
        %1701 = vmatpush1.bf16.msra.mxu0 %v1628
        %1702 = vmatprep.subr.bf16.mxu0 %v1625
        %1703 = vmatpush1.bf16.msra.mxu0 %v1624
        %1704 = vmatprep.subr.bf16.mxu0 0
        %1705 = vmatpush2.bf16.msra.mxu0 0
        %1706 = vmatprep.subr.bf16.mxu0 0
        %1707 = vmatpush2.bf16.msra.mxu0 0
        %1708 = vmatprep.subr.bf16.mxu0 0
        %1709 = vmatpush2.bf16.msra.mxu0 0
        %1710 = vmatprep.subr.bf16.mxu0 0
        %1711 = vmatpush2.bf16.msra.mxu0 0
        %1712 = vmatprep.subr.bf16.mxu0 0
        %1713 = vmatpush2.bf16.msra.mxu0 0
        %1714 = vmatprep.subr.bf16.mxu0 0
        %1715 = vmatpush2.bf16.msra.mxu0 0
        %1716 = vmatprep.subr.bf16.mxu0 0
        %1717 = vmatpush2.bf16.msra.mxu0 0
        %1718 = vmatprep.subr.bf16.mxu0 0
        %1719 = vmatpush2.bf16.msra.mxu0 0
        %1720 = vmatprep.mubr.bf16.mxu0 0
        %1721 = vmatmul.mubr.bf16.gmra.mxu0 0
        %v1722 = vpop.f32.mrf.mxu0
        %v1723 = vadd.f32 0.0, %v1722
        %v1724 = vpop.f32.mrf.mxu0
        %v1725 = vadd.f32 0.0, %v1724
        %v1726 = vpop.f32.mrf.mxu0
        %v1727 = vpop.f32.mrf.mxu0
        %1728 = vdwg.mxu0
        %1729 = vmatprep.subr.bf16.mxu0 %v1655
        %1730 = vmatpush1.bf16.msra.mxu0 %v1654
        %1731 = vmatprep.subr.bf16.mxu0 %v1651
        %1732 = vmatpush1.bf16.msra.mxu0 %v1650
        %1733 = vmatprep.subr.bf16.mxu0 %v1647
        %1734 = vmatpush1.bf16.msra.mxu0 %v1646
        %1735 = vmatprep.subr.bf16.mxu0 %v1643
        %1736 = vmatpush1.bf16.msra.mxu0 %v1642
        %1737 = vmatprep.subr.bf16.mxu0 %v1639
        %1738 = vmatpush1.bf16.msra.mxu0 %v1638
        %1739 = vmatprep.subr.bf16.mxu0 %v1635
        %1740 = vmatpush1.bf16.msra.mxu0 %v1634
        %1741 = vmatprep.subr.bf16.mxu0 %v1631
        %1742 = vmatpush1.bf16.msra.mxu0 %v1630
        %1743 = vmatprep.subr.bf16.mxu0 %v1627
        %1744 = vmatpush1.bf16.msra.mxu0 %v1626
        %1745 = vmatprep.subr.bf16.mxu0 0
        %1746 = vmatpush2.bf16.msra.mxu0 0
        %1747 = vmatprep.subr.bf16.mxu0 0
        %1748 = vmatpush2.bf16.msra.mxu0 0
        %1749 = vmatprep.subr.bf16.mxu0 0
        %1750 = vmatpush2.bf16.msra.mxu0 0
        %1751 = vmatprep.subr.bf16.mxu0 0
        %1752 = vmatpush2.bf16.msra.mxu0 0
        %1753 = vmatprep.subr.bf16.mxu0 0
        %1754 = vmatpush2.bf16.msra.mxu0 0
        %1755 = vmatprep.subr.bf16.mxu0 0
        %1756 = vmatpush2.bf16.msra.mxu0 0
        %1757 = vmatprep.subr.bf16.mxu0 0
        %1758 = vmatpush2.bf16.msra.mxu0 0
        %1759 = vmatprep.subr.bf16.mxu0 0
        %1760 = vmatpush2.bf16.msra.mxu0 0
        %1761 = vmatprep.mubr.bf16.mxu0 0
        %1762 = vmatmul.mubr.bf16.gmra.mxu0 0
        %v1763 = vpop.f32.mrf.mxu0
        %v1764 = vadd.f32 0.0, %v1763
        %v1765 = vpop.f32.mrf.mxu0
        %v1766 = vadd.f32 0.0, %v1765
        %v1767 = vpop.f32.mrf.mxu0
        %v1768 = vpop.f32.mrf.mxu0
        %1769 = vdwg.mxu0
        %v1770 = vadd.f32 %v1524, %v1723
        %v1771 = vadd.f32 %v1525, %v1725
        %v1772 = vadd.f32 %v1526, %v1764
        %v1773 = vadd.f32 %v1527, %v1766
        %v1774 = vxor.u32 %v1770, 2147483648
        %v1775 = vmul.f32 %v1774, 1.442695
        %v1776 = vpow.pop %v1775
        %v1777 = vadd.f32 %v1776, 1.0
        %v1778 = vrcp.pop %v1777
        %v1779 = vmul.f32 1.0, %v1778
        %v1780 = vxor.u32 %v1771, 2147483648
        %v1781 = vmul.f32 %v1780, 1.442695
        %v1782 = vpow.pop %v1781
        %v1783 = vadd.f32 %v1782, 1.0
        %v1784 = vrcp.pop %v1783
        %v1785 = vmul.f32 1.0, %v1784
        %v1786 = vtanh.pop %v1772
        %v1787 = vxor.u32 %v1773, 2147483648
        %v1788 = vmul.f32 %v1787, 1.442695
        %v1789 = vpow.pop %v1788
        %v1790 = vadd.f32 %v1789, 1.0
        %v1791 = vrcp.pop %v1790
        %v1792 = vmul.f32 1.0, %v1791
        %v1793 = vmul.f32 %v1785, 0.0
        %v1794 = vmul.f32 %v1779, %v1786
        %v1795 = vadd.f32 %v1793, %v1794
        %v1796 = vtanh.pop %v1795
        %v1797 = vmul.f32 %v1792, %v1796
        %v1798 = vld [vmem:[#allocation2] sm:$0x3]
        %v1799 = vsel %vm1469, 1, 0
        %vm1800 = vcmp.eq.s32.totalorder %v1799, 1
        %v1801 = vsel %vm1800, %v1797, %v1798
        %1802 = vst [vmem:[#allocation2] sm:$0x3] %v1801
        %v1803 = vld [vmem:[%s1303] sm:$0x3]
        %v1804 = vsel %vm1800, %v1803, %v1797
        %1805 = vst [vmem:[%s1303] sm:$0x3] %v1804
        %v1806 = vld [vmem:[%s756] sm:$0xff]
        %v1807 = vld [vmem:[%s1301] sm:$0xff]
        %v1809 = vcombine.high %v1806, %v1806
        %v1811 = vunpack.c.l.s4 1983009808
        %v1812 = vunpack.c.0.s8 %v1811
        %v1813 = vlaneseq
        %v1814 = vshrl.u32 %v1813, 7
        %v1815 = vsub.s32 %v1812, %v1814
        %v1816 = vrot.slane %v1806, %v1815
        %v1818 = vunpack.c.l.s4 1983009808
        %v1819 = vunpack.c.0.s8 %v1818
        %v1820 = vlaneseq
        %v1821 = vshrl.u32 %v1820, 7
        %v1822 = vsub.s32 %v1819, %v1821
        %v1823 = vrot.slane %v1809, %v1822
        %v1824 = vcombine.high %v1816, %v1816
        %v1825 = vcombine.high %v1823, %v1823
        %v1831 = vcombine.high %v1807, %v1807
        %v1833 = vunpack.c.l.s4 1983009808
        %v1834 = vunpack.c.0.s8 %v1833
        %v1835 = vlaneseq
        %v1836 = vshrl.u32 %v1835, 7
        %v1837 = vsub.s32 %v1834, %v1836
        %v1838 = vrot.slane %v1807, %v1837
        %v1840 = vunpack.c.l.s4 1983009808
        %v1841 = vunpack.c.0.s8 %v1840
        %v1842 = vlaneseq
        %v1843 = vshrl.u32 %v1842, 7
        %v1844 = vsub.s32 %v1841, %v1843
        %v1845 = vrot.slane %v1831, %v1844
        %v1846 = vcombine.high %v1838, %v1838
        %v1847 = vcombine.high %v1845, %v1845
        %v1852 = vsel %vm1476, %v1816, %v1838
        %v1853 = vsel %vm1477, %v1824, %v1846
        %v1854 = vsel %vm1478, %v1823, %v1845
        %v1855 = vsel %vm1479, %v1825, %v1847
        %v1856 = vpack.c.bf16 %v1797, %v1797
        %1857 = vmatprep.subr.bf16.mxu0 %v1653
        %1858 = vmatpush1.bf16.msra.mxu0 %v1652
        %1859 = vmatprep.subr.bf16.mxu0 %v1649
        %1860 = vmatpush1.bf16.msra.mxu0 %v1648
        %1861 = vmatprep.subr.bf16.mxu0 %v1645
        %1862 = vmatpush1.bf16.msra.mxu0 %v1644
        %1863 = vmatprep.subr.bf16.mxu0 %v1641
        %1864 = vmatpush1.bf16.msra.mxu0 %v1640
        %1865 = vmatprep.subr.bf16.mxu0 %v1637
        %1866 = vmatpush1.bf16.msra.mxu0 %v1636
        %1867 = vmatprep.subr.bf16.mxu0 %v1633
        %1868 = vmatpush1.bf16.msra.mxu0 %v1632
        %1869 = vmatprep.subr.bf16.mxu0 %v1629
        %1870 = vmatpush1.bf16.msra.mxu0 %v1628
        %1871 = vmatprep.subr.bf16.mxu0 %v1625
        %1872 = vmatpush1.bf16.msra.mxu0 %v1624
        %1873 = vmatprep.subr.bf16.mxu0 0
        %1874 = vmatpush2.bf16.msra.mxu0 0
        %1875 = vmatprep.subr.bf16.mxu0 0
        %1876 = vmatpush2.bf16.msra.mxu0 0
        %1877 = vmatprep.subr.bf16.mxu0 0
        %1878 = vmatpush2.bf16.msra.mxu0 0
        %1879 = vmatprep.subr.bf16.mxu0 0
        %1880 = vmatpush2.bf16.msra.mxu0 0
        %1881 = vmatprep.subr.bf16.mxu0 0
        %1882 = vmatpush2.bf16.msra.mxu0 0
        %1883 = vmatprep.subr.bf16.mxu0 0
        %1884 = vmatpush2.bf16.msra.mxu0 0
        %1885 = vmatprep.subr.bf16.mxu0 0
        %1886 = vmatpush2.bf16.msra.mxu0 0
        %1887 = vmatprep.subr.bf16.mxu0 0
        %1888 = vmatpush2.bf16.msra.mxu0 0
        %1889 = vmatprep.mubr.bf16.mxu0 0
        %1890 = vmatmul.mubr.bf16.gmra.mxu0 %v1856
        %v1891 = vpop.f32.mrf.mxu0
        %v1892 = vadd.f32 0.0, %v1891
        %v1893 = vpop.f32.mrf.mxu0
        %v1894 = vadd.f32 0.0, %v1893
        %v1895 = vpop.f32.mrf.mxu0
        %v1896 = vpop.f32.mrf.mxu0
        %1897 = vdwg.mxu0
        %1898 = vmatprep.subr.bf16.mxu0 %v1655
        %1899 = vmatpush1.bf16.msra.mxu0 %v1654
        %1900 = vmatprep.subr.bf16.mxu0 %v1651
        %1901 = vmatpush1.bf16.msra.mxu0 %v1650
        %1902 = vmatprep.subr.bf16.mxu0 %v1647
        %1903 = vmatpush1.bf16.msra.mxu0 %v1646
        %1904 = vmatprep.subr.bf16.mxu0 %v1643
        %1905 = vmatpush1.bf16.msra.mxu0 %v1642
        %1906 = vmatprep.subr.bf16.mxu0 %v1639
        %1907 = vmatpush1.bf16.msra.mxu0 %v1638
        %1908 = vmatprep.subr.bf16.mxu0 %v1635
        %1909 = vmatpush1.bf16.msra.mxu0 %v1634
        %1910 = vmatprep.subr.bf16.mxu0 %v1631
        %1911 = vmatpush1.bf16.msra.mxu0 %v1630
        %1912 = vmatprep.subr.bf16.mxu0 %v1627
        %1913 = vmatpush1.bf16.msra.mxu0 %v1626
        %1914 = vmatprep.subr.bf16.mxu0 0
        %1915 = vmatpush2.bf16.msra.mxu0 0
        %1916 = vmatprep.subr.bf16.mxu0 0
        %1917 = vmatpush2.bf16.msra.mxu0 0
        %1918 = vmatprep.subr.bf16.mxu0 0
        %1919 = vmatpush2.bf16.msra.mxu0 0
        %1920 = vmatprep.subr.bf16.mxu0 0
        %1921 = vmatpush2.bf16.msra.mxu0 0
        %1922 = vmatprep.subr.bf16.mxu0 0
        %1923 = vmatpush2.bf16.msra.mxu0 0
        %1924 = vmatprep.subr.bf16.mxu0 0
        %1925 = vmatpush2.bf16.msra.mxu0 0
        %1926 = vmatprep.subr.bf16.mxu0 0
        %1927 = vmatpush2.bf16.msra.mxu0 0
        %1928 = vmatprep.subr.bf16.mxu0 0
        %1929 = vmatpush2.bf16.msra.mxu0 0
        %1930 = vmatprep.mubr.bf16.mxu0 0
        %1931 = vmatmul.mubr.bf16.gmra.mxu0 %v1856
        %v1932 = vpop.f32.mrf.mxu0
        %v1933 = vadd.f32 0.0, %v1932
        %v1934 = vpop.f32.mrf.mxu0
        %v1935 = vadd.f32 0.0, %v1934
        %v1936 = vpop.f32.mrf.mxu0
        %v1937 = vpop.f32.mrf.mxu0
        %1938 = vdwg.mxu0
        %v1939 = vadd.f32 %v1852, %v1892
        %v1940 = vadd.f32 %v1853, %v1894
        %v1941 = vadd.f32 %v1854, %v1933
        %v1942 = vadd.f32 %v1855, %v1935
        %v1943 = vxor.u32 %v1939, 2147483648
        %v1944 = vmul.f32 %v1943, 1.442695
        %v1945 = vpow.pop %v1944
        %v1946 = vadd.f32 %v1945, 1.0
        %v1947 = vrcp.pop %v1946
        %v1948 = vmul.f32 1.0, %v1947
        %v1949 = vxor.u32 %v1940, 2147483648
        %v1950 = vmul.f32 %v1949, 1.442695
        %v1951 = vpow.pop %v1950
        %v1952 = vadd.f32 %v1951, 1.0
        %v1953 = vrcp.pop %v1952
        %v1954 = vmul.f32 1.0, %v1953
        %v1955 = vtanh.pop %v1941
        %v1956 = vxor.u32 %v1942, 2147483648
        %v1957 = vmul.f32 %v1956, 1.442695
        %v1958 = vpow.pop %v1957
        %v1959 = vadd.f32 %v1958, 1.0
        %v1960 = vrcp.pop %v1959
        %v1961 = vmul.f32 1.0, %v1960
        %v1962 = vmul.f32 %v1954, %v1795
        %v1963 = vmul.f32 %v1948, %v1955
        %v1964 = vadd.f32 %v1962, %v1963
        %v1965 = vtanh.pop %v1964
        %v1966 = vmul.f32 %v1961, %v1965
        %v1967 = vld [vmem:[%s649] sm:$0x3]
        %v1968 = vsel %vm1800, %v1966, %v1967
        %1969 = vst [vmem:[%s649] sm:$0x3] %v1968
        %v1970 = vld [vmem:[%s1194] sm:$0x3]
        %v1971 = vsel %vm1800, %v1970, %v1966
        %1972 = vst [vmem:[%s1194] sm:$0x3] %v1971
        %v1973 = vld [vmem:[%s865] sm:$0xff]
        %v1974 = vld [vmem:[%s1192] sm:$0xff]
        %v1976 = vcombine.high %v1973, %v1973
        %v1978 = vunpack.c.l.s4 1983009808
        %v1979 = vunpack.c.0.s8 %v1978
        %v1980 = vlaneseq
        %v1981 = vshrl.u32 %v1980, 7
        %v1982 = vsub.s32 %v1979, %v1981
        %v1983 = vrot.slane %v1973, %v1982
        %v1985 = vunpack.c.l.s4 1983009808
        %v1986 = vunpack.c.0.s8 %v1985
        %v1987 = vlaneseq
        %v1988 = vshrl.u32 %v1987, 7
        %v1989 = vsub.s32 %v1986, %v1988
        %v1990 = vrot.slane %v1976, %v1989
        %v1991 = vcombine.high %v1983, %v1983
        %v1992 = vcombine.high %v1990, %v1990
        %v1998 = vcombine.high %v1974, %v1974
        %v2000 = vunpack.c.l.s4 1983009808
        %v2001 = vunpack.c.0.s8 %v2000
        %v2002 = vlaneseq
        %v2003 = vshrl.u32 %v2002, 7
        %v2004 = vsub.s32 %v2001, %v2003
        %v2005 = vrot.slane %v1974, %v2004
        %v2007 = vunpack.c.l.s4 1983009808
        %v2008 = vunpack.c.0.s8 %v2007
        %v2009 = vlaneseq
        %v2010 = vshrl.u32 %v2009, 7
        %v2011 = vsub.s32 %v2008, %v2010
        %v2012 = vrot.slane %v1998, %v2011
        %v2013 = vcombine.high %v2005, %v2005
        %v2014 = vcombine.high %v2012, %v2012
        %v2019 = vsel %vm1476, %v1983, %v2005
        %v2020 = vsel %vm1477, %v1991, %v2013
        %v2021 = vsel %vm1478, %v1990, %v2012
        %v2022 = vsel %vm1479, %v1992, %v2014
        %v2023 = vpack.c.bf16 %v1966, %v1966
        %2024 = vmatprep.subr.bf16.mxu0 %v1653
        %2025 = vmatpush1.bf16.msra.mxu0 %v1652
        %2026 = vmatprep.subr.bf16.mxu0 %v1649
        %2027 = vmatpush1.bf16.msra.mxu0 %v1648
        %2028 = vmatprep.subr.bf16.mxu0 %v1645
        %2029 = vmatpush1.bf16.msra.mxu0 %v1644
        %2030 = vmatprep.subr.bf16.mxu0 %v1641
        %2031 = vmatpush1.bf16.msra.mxu0 %v1640
        %2032 = vmatprep.subr.bf16.mxu0 %v1637
        %2033 = vmatpush1.bf16.msra.mxu0 %v1636
        %2034 = vmatprep.subr.bf16.mxu0 %v1633
        %2035 = vmatpush1.bf16.msra.mxu0 %v1632
        %2036 = vmatprep.subr.bf16.mxu0 %v1629
        %2037 = vmatpush1.bf16.msra.mxu0 %v1628
        %2038 = vmatprep.subr.bf16.mxu0 %v1625
        %2039 = vmatpush1.bf16.msra.mxu0 %v1624
        %2040 = vmatprep.subr.bf16.mxu0 0
        %2041 = vmatpush2.bf16.msra.mxu0 0
        %2042 = vmatprep.subr.bf16.mxu0 0
        %2043 = vmatpush2.bf16.msra.mxu0 0
        %2044 = vmatprep.subr.bf16.mxu0 0
        %2045 = vmatpush2.bf16.msra.mxu0 0
        %2046 = vmatprep.subr.bf16.mxu0 0
        %2047 = vmatpush2.bf16.msra.mxu0 0
        %2048 = vmatprep.subr.bf16.mxu0 0
        %2049 = vmatpush2.bf16.msra.mxu0 0
        %2050 = vmatprep.subr.bf16.mxu0 0
        %2051 = vmatpush2.bf16.msra.mxu0 0
        %2052 = vmatprep.subr.bf16.mxu0 0
        %2053 = vmatpush2.bf16.msra.mxu0 0
        %2054 = vmatprep.subr.bf16.mxu0 0
        %2055 = vmatpush2.bf16.msra.mxu0 0
        %2056 = vmatprep.mubr.bf16.mxu0 0
        %2057 = vmatmul.mubr.bf16.gmra.mxu0 %v2023
        %v2058 = vpop.f32.mrf.mxu0
        %v2059 = vadd.f32 0.0, %v2058
        %v2060 = vpop.f32.mrf.mxu0
        %v2061 = vadd.f32 0.0, %v2060
        %v2062 = vpop.f32.mrf.mxu0
        %v2063 = vpop.f32.mrf.mxu0
        %2064 = vdwg.mxu0
        %2065 = vmatprep.subr.bf16.mxu0 %v1655
        %2066 = vmatpush1.bf16.msra.mxu0 %v1654
        %2067 = vmatprep.subr.bf16.mxu0 %v1651
        %2068 = vmatpush1.bf16.msra.mxu0 %v1650
        %2069 = vmatprep.subr.bf16.mxu0 %v1647
        %2070 = vmatpush1.bf16.msra.mxu0 %v1646
        %2071 = vmatprep.subr.bf16.mxu0 %v1643
        %2072 = vmatpush1.bf16.msra.mxu0 %v1642
        %2073 = vmatprep.subr.bf16.mxu0 %v1639
        %2074 = vmatpush1.bf16.msra.mxu0 %v1638
        %2075 = vmatprep.subr.bf16.mxu0 %v1635
        %2076 = vmatpush1.bf16.msra.mxu0 %v1634
        %2077 = vmatprep.subr.bf16.mxu0 %v1631
        %2078 = vmatpush1.bf16.msra.mxu0 %v1630
        %2079 = vmatprep.subr.bf16.mxu0 %v1627
        %2080 = vmatpush1.bf16.msra.mxu0 %v1626
        %2081 = vmatprep.subr.bf16.mxu0 0
        %2082 = vmatpush2.bf16.msra.mxu0 0
        %2083 = vmatprep.subr.bf16.mxu0 0
        %2084 = vmatpush2.bf16.msra.mxu0 0
        %2085 = vmatprep.subr.bf16.mxu0 0
        %2086 = vmatpush2.bf16.msra.mxu0 0
        %2087 = vmatprep.subr.bf16.mxu0 0
        %2088 = vmatpush2.bf16.msra.mxu0 0
        %2089 = vmatprep.subr.bf16.mxu0 0
        %2090 = vmatpush2.bf16.msra.mxu0 0
        %2091 = vmatprep.subr.bf16.mxu0 0
        %2092 = vmatpush2.bf16.msra.mxu0 0
        %2093 = vmatprep.subr.bf16.mxu0 0
        %2094 = vmatpush2.bf16.msra.mxu0 0
        %2095 = vmatprep.subr.bf16.mxu0 0
        %2096 = vmatpush2.bf16.msra.mxu0 0
        %2097 = vmatprep.mubr.bf16.mxu0 0
        %2098 = vmatmul.mubr.bf16.gmra.mxu0 %v2023
        %v2099 = vpop.f32.mrf.mxu0
        %v2100 = vadd.f32 0.0, %v2099
        %v2101 = vpop.f32.mrf.mxu0
        %v2102 = vadd.f32 0.0, %v2101
        %v2103 = vpop.f32.mrf.mxu0
        %v2104 = vpop.f32.mrf.mxu0
        %2105 = vdwg.mxu0
        %v2106 = vadd.f32 %v2019, %v2059
        %v2107 = vadd.f32 %v2020, %v2061
        %v2108 = vadd.f32 %v2021, %v2100
        %v2109 = vadd.f32 %v2022, %v2102
        %v2110 = vxor.u32 %v2106, 2147483648
        %v2111 = vmul.f32 %v2110, 1.442695
        %v2112 = vpow.pop %v2111
        %v2113 = vadd.f32 %v2112, 1.0
        %v2114 = vrcp.pop %v2113
        %v2115 = vmul.f32 1.0, %v2114
        %v2116 = vxor.u32 %v2107, 2147483648
        %v2117 = vmul.f32 %v2116, 1.442695
        %v2118 = vpow.pop %v2117
        %v2119 = vadd.f32 %v2118, 1.0
        %v2120 = vrcp.pop %v2119
        %v2121 = vmul.f32 1.0, %v2120
        %v2122 = vtanh.pop %v2108
        %v2123 = vxor.u32 %v2109, 2147483648
        %v2124 = vmul.f32 %v2123, 1.442695
        %v2125 = vpow.pop %v2124
        %v2126 = vadd.f32 %v2125, 1.0
        %v2127 = vrcp.pop %v2126
        %v2128 = vmul.f32 1.0, %v2127
        %v2129 = vmul.f32 %v2121, %v1964
        %v2130 = vmul.f32 %v2115, %v2122
        %v2131 = vadd.f32 %v2129, %v2130
        %v2132 = vtanh.pop %v2131
        %v2133 = vmul.f32 %v2128, %v2132
        %v2134 = vld [vmem:[%s758] sm:$0x3]
        %v2135 = vsel %vm1800, %v2133, %v2134
        %2136 = vst [vmem:[%s758] sm:$0x3] %v2135
        %v2137 = vld [vmem:[%s1085] sm:$0x3]
        %v2138 = vsel %vm1800, %v2137, %v2133
        %2139 = vst [vmem:[%s1085] sm:$0x3] %v2138
        %v2140 = vld [vmem:[%s974] sm:$0xff]
        %v2141 = vld [vmem:[%s1083] sm:$0xff]
        %v2143 = vcombine.high %v2140, %v2140
        %v2145 = vunpack.c.l.s4 1983009808
        %v2146 = vunpack.c.0.s8 %v2145
        %v2147 = vlaneseq
        %v2148 = vshrl.u32 %v2147, 7
        %v2149 = vsub.s32 %v2146, %v2148
        %v2150 = vrot.slane %v2140, %v2149
        %v2152 = vunpack.c.l.s4 1983009808
        %v2153 = vunpack.c.0.s8 %v2152
        %v2154 = vlaneseq
        %v2155 = vshrl.u32 %v2154, 7
        %v2156 = vsub.s32 %v2153, %v2155
        %v2157 = vrot.slane %v2143, %v2156
        %v2158 = vcombine.high %v2150, %v2150
        %v2159 = vcombine.high %v2157, %v2157
        %v2165 = vcombine.high %v2141, %v2141
        %v2167 = vunpack.c.l.s4 1983009808
        %v2168 = vunpack.c.0.s8 %v2167
        %v2169 = vlaneseq
        %v2170 = vshrl.u32 %v2169, 7
        %v2171 = vsub.s32 %v2168, %v2170
        %v2172 = vrot.slane %v2141, %v2171
        %v2174 = vunpack.c.l.s4 1983009808
        %v2175 = vunpack.c.0.s8 %v2174
        %v2176 = vlaneseq
        %v2177 = vshrl.u32 %v2176, 7
        %v2178 = vsub.s32 %v2175, %v2177
        %v2179 = vrot.slane %v2165, %v2178
        %v2180 = vcombine.high %v2172, %v2172
        %v2181 = vcombine.high %v2179, %v2179
        %v2186 = vsel %vm1476, %v2150, %v2172
        %v2187 = vsel %vm1477, %v2158, %v2180
        %v2188 = vsel %vm1478, %v2157, %v2179
        %v2189 = vsel %vm1479, %v2159, %v2181
        %v2190 = vpack.c.bf16 %v2133, %v2133
        %2191 = vmatprep.subr.bf16.mxu0 %v1653
        %2192 = vmatpush1.bf16.msra.mxu0 %v1652
        %2193 = vmatprep.subr.bf16.mxu0 %v1649
        %2194 = vmatpush1.bf16.msra.mxu0 %v1648
        %2195 = vmatprep.subr.bf16.mxu0 %v1645
        %2196 = vmatpush1.bf16.msra.mxu0 %v1644
        %2197 = vmatprep.subr.bf16.mxu0 %v1641
        %2198 = vmatpush1.bf16.msra.mxu0 %v1640
        %2199 = vmatprep.subr.bf16.mxu0 %v1637
        %2200 = vmatpush1.bf16.msra.mxu0 %v1636
        %2201 = vmatprep.subr.bf16.mxu0 %v1633
        %2202 = vmatpush1.bf16.msra.mxu0 %v1632
        %2203 = vmatprep.subr.bf16.mxu0 %v1629
        %2204 = vmatpush1.bf16.msra.mxu0 %v1628
        %2205 = vmatprep.subr.bf16.mxu0 %v1625
        %2206 = vmatpush1.bf16.msra.mxu0 %v1624
        %2207 = vmatprep.subr.bf16.mxu0 0
        %2208 = vmatpush2.bf16.msra.mxu0 0
        %2209 = vmatprep.subr.bf16.mxu0 0
        %2210 = vmatpush2.bf16.msra.mxu0 0
        %2211 = vmatprep.subr.bf16.mxu0 0
        %2212 = vmatpush2.bf16.msra.mxu0 0
        %2213 = vmatprep.subr.bf16.mxu0 0
        %2214 = vmatpush2.bf16.msra.mxu0 0
        %2215 = vmatprep.subr.bf16.mxu0 0
        %2216 = vmatpush2.bf16.msra.mxu0 0
        %2217 = vmatprep.subr.bf16.mxu0 0
        %2218 = vmatpush2.bf16.msra.mxu0 0
        %2219 = vmatprep.subr.bf16.mxu0 0
        %2220 = vmatpush2.bf16.msra.mxu0 0
        %2221 = vmatprep.subr.bf16.mxu0 0
        %2222 = vmatpush2.bf16.msra.mxu0 0
        %2223 = vmatprep.mubr.bf16.mxu0 0
        %2224 = vmatmul.mubr.bf16.gmra.mxu0 %v2190
        %v2225 = vpop.f32.mrf.mxu0
        %v2226 = vadd.f32 0.0, %v2225
        %v2227 = vpop.f32.mrf.mxu0
        %v2228 = vadd.f32 0.0, %v2227
        %v2229 = vpop.f32.mrf.mxu0
        %v2230 = vpop.f32.mrf.mxu0
        %2231 = vdwg.mxu0
        %2232 = vmatprep.subr.bf16.mxu0 %v1655
        %2233 = vmatpush1.bf16.msra.mxu0 %v1654
        %2234 = vmatprep.subr.bf16.mxu0 %v1651
        %2235 = vmatpush1.bf16.msra.mxu0 %v1650
        %2236 = vmatprep.subr.bf16.mxu0 %v1647
        %2237 = vmatpush1.bf16.msra.mxu0 %v1646
        %2238 = vmatprep.subr.bf16.mxu0 %v1643
        %2239 = vmatpush1.bf16.msra.mxu0 %v1642
        %2240 = vmatprep.subr.bf16.mxu0 %v1639
        %2241 = vmatpush1.bf16.msra.mxu0 %v1638
        %2242 = vmatprep.subr.bf16.mxu0 %v1635
        %2243 = vmatpush1.bf16.msra.mxu0 %v1634
        %2244 = vmatprep.subr.bf16.mxu0 %v1631
        %2245 = vmatpush1.bf16.msra.mxu0 %v1630
        %2246 = vmatprep.subr.bf16.mxu0 %v1627
        %2247 = vmatpush1.bf16.msra.mxu0 %v1626
        %2248 = vmatprep.subr.bf16.mxu0 0
        %2249 = vmatpush2.bf16.msra.mxu0 0
        %2250 = vmatprep.subr.bf16.mxu0 0
        %2251 = vmatpush2.bf16.msra.mxu0 0
        %2252 = vmatprep.subr.bf16.mxu0 0
        %2253 = vmatpush2.bf16.msra.mxu0 0
        %2254 = vmatprep.subr.bf16.mxu0 0
        %2255 = vmatpush2.bf16.msra.mxu0 0
        %2256 = vmatprep.subr.bf16.mxu0 0
        %2257 = vmatpush2.bf16.msra.mxu0 0
        %2258 = vmatprep.subr.bf16.mxu0 0
        %2259 = vmatpush2.bf16.msra.mxu0 0
        %2260 = vmatprep.subr.bf16.mxu0 0
        %2261 = vmatpush2.bf16.msra.mxu0 0
        %2262 = vmatprep.subr.bf16.mxu0 0
        %2263 = vmatpush2.bf16.msra.mxu0 0
        %2264 = vmatprep.mubr.bf16.mxu0 0
        %2265 = vmatmul.mubr.bf16.gmra.mxu0 %v2190
        %v2266 = vpop.f32.mrf.mxu0
        %v2267 = vadd.f32 0.0, %v2266
        %v2268 = vpop.f32.mrf.mxu0
        %v2269 = vadd.f32 0.0, %v2268
        %v2270 = vpop.f32.mrf.mxu0
        %v2271 = vpop.f32.mrf.mxu0
        %2272 = vdwg.mxu0
        %v2273 = vadd.f32 %v2186, %v2226
        %v2274 = vadd.f32 %v2187, %v2228
        %v2275 = vadd.f32 %v2188, %v2267
        %v2276 = vadd.f32 %v2189, %v2269
        %v2277 = vxor.u32 %v2273, 2147483648
        %v2278 = vmul.f32 %v2277, 1.442695
        %v2279 = vpow.pop %v2278
        %v2280 = vadd.f32 %v2279, 1.0
        %v2281 = vrcp.pop %v2280
        %v2282 = vmul.f32 1.0, %v2281
        %v2283 = vxor.u32 %v2274, 2147483648
        %v2284 = vmul.f32 %v2283, 1.442695
        %v2285 = vpow.pop %v2284
        %v2286 = vadd.f32 %v2285, 1.0
        %v2287 = vrcp.pop %v2286
        %v2288 = vmul.f32 1.0, %v2287
        %v2289 = vtanh.pop %v2275
        %v2290 = vxor.u32 %v2276, 2147483648
        %v2291 = vmul.f32 %v2290, 1.442695
        %v2292 = vpow.pop %v2291
        %v2293 = vadd.f32 %v2292, 1.0
        %v2294 = vrcp.pop %v2293
        %v2295 = vmul.f32 1.0, %v2294
        %v2296 = vmul.f32 %v2288, %v2131
        %v2297 = vmul.f32 %v2282, %v2289
        %v2298 = vadd.f32 %v2296, %v2297
        %v2299 = vtanh.pop %v2298
        %v2300 = vmul.f32 %v2295, %v2299
        %v2301 = vld [vmem:[%s867] sm:$0x3]
        %v2302 = vsel %vm1800, %v2300, %v2301
        %2303 = vst [vmem:[%s867] sm:$0x3] %v2302
        %v2304 = vld [vmem:[%s976] sm:$0x3]
        %v2305 = vsel %vm1800, %v2304, %v2300
        %2306 = vst [vmem:[%s976] sm:$0x3] %v2305
        %v2307 = vld [vmem:[%s1083] sm:$0xff]
        %v2308 = vld [vmem:[%s974] sm:$0xff]
        %v2310 = vcombine.high %v2307, %v2307
        %v2312 = vunpack.c.l.s4 1983009808
        %v2313 = vunpack.c.0.s8 %v2312
        %v2314 = vlaneseq
        %v2315 = vshrl.u32 %v2314, 7
        %v2316 = vsub.s32 %v2313, %v2315
        %v2317 = vrot.slane %v2307, %v2316
        %v2319 = vunpack.c.l.s4 1983009808
        %v2320 = vunpack.c.0.s8 %v2319
        %v2321 = vlaneseq
        %v2322 = vshrl.u32 %v2321, 7
        %v2323 = vsub.s32 %v2320, %v2322
        %v2324 = vrot.slane %v2310, %v2323
        %v2325 = vcombine.high %v2317, %v2317
        %v2326 = vcombine.high %v2324, %v2324
        %v2332 = vcombine.high %v2308, %v2308
        %v2334 = vunpack.c.l.s4 1983009808
        %v2335 = vunpack.c.0.s8 %v2334
        %v2336 = vlaneseq
        %v2337 = vshrl.u32 %v2336, 7
        %v2338 = vsub.s32 %v2335, %v2337
        %v2339 = vrot.slane %v2308, %v2338
        %v2341 = vunpack.c.l.s4 1983009808
        %v2342 = vunpack.c.0.s8 %v2341
        %v2343 = vlaneseq
        %v2344 = vshrl.u32 %v2343, 7
        %v2345 = vsub.s32 %v2342, %v2344
        %v2346 = vrot.slane %v2332, %v2345
        %v2347 = vcombine.high %v2339, %v2339
        %v2348 = vcombine.high %v2346, %v2346
        %v2353 = vsel %vm1476, %v2317, %v2339
        %v2354 = vsel %vm1477, %v2325, %v2347
        %v2355 = vsel %vm1478, %v2324, %v2346
        %v2356 = vsel %vm1479, %v2326, %v2348
        %v2357 = vpack.c.bf16 %v2300, %v2300
        %2358 = vmatprep.subr.bf16.mxu0 %v1653
        %2359 = vmatpush1.bf16.msra.mxu0 %v1652
        %2360 = vmatprep.subr.bf16.mxu0 %v1649
        %2361 = vmatpush1.bf16.msra.mxu0 %v1648
        %2362 = vmatprep.subr.bf16.mxu0 %v1645
        %2363 = vmatpush1.bf16.msra.mxu0 %v1644
        %2364 = vmatprep.subr.bf16.mxu0 %v1641
        %2365 = vmatpush1.bf16.msra.mxu0 %v1640
        %2366 = vmatprep.subr.bf16.mxu0 %v1637
        %2367 = vmatpush1.bf16.msra.mxu0 %v1636
        %2368 = vmatprep.subr.bf16.mxu0 %v1633
        %2369 = vmatpush1.bf16.msra.mxu0 %v1632
        %2370 = vmatprep.subr.bf16.mxu0 %v1629
        %2371 = vmatpush1.bf16.msra.mxu0 %v1628
        %2372 = vmatprep.subr.bf16.mxu0 %v1625
        %2373 = vmatpush1.bf16.msra.mxu0 %v1624
        %2374 = vmatprep.subr.bf16.mxu0 0
        %2375 = vmatpush2.bf16.msra.mxu0 0
        %2376 = vmatprep.subr.bf16.mxu0 0
        %2377 = vmatpush2.bf16.msra.mxu0 0
        %2378 = vmatprep.subr.bf16.mxu0 0
        %2379 = vmatpush2.bf16.msra.mxu0 0
        %2380 = vmatprep.subr.bf16.mxu0 0
        %2381 = vmatpush2.bf16.msra.mxu0 0
        %2382 = vmatprep.subr.bf16.mxu0 0
        %2383 = vmatpush2.bf16.msra.mxu0 0
        %2384 = vmatprep.subr.bf16.mxu0 0
        %2385 = vmatpush2.bf16.msra.mxu0 0
        %2386 = vmatprep.subr.bf16.mxu0 0
        %2387 = vmatpush2.bf16.msra.mxu0 0
        %2388 = vmatprep.subr.bf16.mxu0 0
        %2389 = vmatpush2.bf16.msra.mxu0 0
        %2390 = vmatprep.mubr.bf16.mxu0 0
        %2391 = vmatmul.mubr.bf16.gmra.mxu0 %v2357
        %v2392 = vpop.f32.mrf.mxu0
        %v2393 = vadd.f32 0.0, %v2392
        %v2394 = vpop.f32.mrf.mxu0
        %v2395 = vadd.f32 0.0, %v2394
        %v2396 = vpop.f32.mrf.mxu0
        %v2397 = vpop.f32.mrf.mxu0
        %2398 = vdwg.mxu0
        %2399 = vmatprep.subr.bf16.mxu0 %v1655
        %2400 = vmatpush1.bf16.msra.mxu0 %v1654
        %2401 = vmatprep.subr.bf16.mxu0 %v1651
        %2402 = vmatpush1.bf16.msra.mxu0 %v1650
        %2403 = vmatprep.subr.bf16.mxu0 %v1647
        %2404 = vmatpush1.bf16.msra.mxu0 %v1646
        %2405 = vmatprep.subr.bf16.mxu0 %v1643
        %2406 = vmatpush1.bf16.msra.mxu0 %v1642
        %2407 = vmatprep.subr.bf16.mxu0 %v1639
        %2408 = vmatpush1.bf16.msra.mxu0 %v1638
        %2409 = vmatprep.subr.bf16.mxu0 %v1635
        %2410 = vmatpush1.bf16.msra.mxu0 %v1634
        %2411 = vmatprep.subr.bf16.mxu0 %v1631
        %2412 = vmatpush1.bf16.msra.mxu0 %v1630
        %2413 = vmatprep.subr.bf16.mxu0 %v1627
        %2414 = vmatpush1.bf16.msra.mxu0 %v1626
        %2415 = vmatprep.subr.bf16.mxu0 0
        %2416 = vmatpush2.bf16.msra.mxu0 0
        %2417 = vmatprep.subr.bf16.mxu0 0
        %2418 = vmatpush2.bf16.msra.mxu0 0
        %2419 = vmatprep.subr.bf16.mxu0 0
        %2420 = vmatpush2.bf16.msra.mxu0 0
        %2421 = vmatprep.subr.bf16.mxu0 0
        %2422 = vmatpush2.bf16.msra.mxu0 0
        %2423 = vmatprep.subr.bf16.mxu0 0
        %2424 = vmatpush2.bf16.msra.mxu0 0
        %2425 = vmatprep.subr.bf16.mxu0 0
        %2426 = vmatpush2.bf16.msra.mxu0 0
        %2427 = vmatprep.subr.bf16.mxu0 0
        %2428 = vmatpush2.bf16.msra.mxu0 0
        %2429 = vmatprep.subr.bf16.mxu0 0
        %2430 = vmatpush2.bf16.msra.mxu0 0
        %2431 = vmatprep.mubr.bf16.mxu0 0
        %2432 = vmatmul.mubr.bf16.gmra.mxu0 %v2357
        %v2433 = vpop.f32.mrf.mxu0
        %v2434 = vadd.f32 0.0, %v2433
        %v2435 = vpop.f32.mrf.mxu0
        %v2436 = vadd.f32 0.0, %v2435
        %v2437 = vpop.f32.mrf.mxu0
        %v2438 = vpop.f32.mrf.mxu0
        %2439 = vdwg.mxu0
        %v2440 = vadd.f32 %v2353, %v2393
        %v2441 = vadd.f32 %v2354, %v2395
        %v2442 = vadd.f32 %v2355, %v2434
        %v2443 = vadd.f32 %v2356, %v2436
        %v2444 = vxor.u32 %v2440, 2147483648
        %v2445 = vmul.f32 %v2444, 1.442695
        %v2446 = vpow.pop %v2445
        %v2447 = vadd.f32 %v2446, 1.0
        %v2448 = vrcp.pop %v2447
        %v2449 = vmul.f32 1.0, %v2448
        %v2450 = vxor.u32 %v2441, 2147483648
        %v2451 = vmul.f32 %v2450, 1.442695
        %v2452 = vpow.pop %v2451
        %v2453 = vadd.f32 %v2452, 1.0
        %v2454 = vrcp.pop %v2453
        %v2455 = vmul.f32 1.0, %v2454
        %v2456 = vtanh.pop %v2442
        %v2457 = vxor.u32 %v2443, 2147483648
        %v2458 = vmul.f32 %v2457, 1.442695
        %v2459 = vpow.pop %v2458
        %v2460 = vadd.f32 %v2459, 1.0
        %v2461 = vrcp.pop %v2460
        %v2462 = vmul.f32 1.0, %v2461
        %v2463 = vmul.f32 %v2455, %v2298
        %v2464 = vmul.f32 %v2449, %v2456
        %v2465 = vadd.f32 %v2463, %v2464
        %v2466 = vtanh.pop %v2465
        %v2467 = vmul.f32 %v2462, %v2466
        %v2468 = vld [vmem:[%s976] sm:$0x3]
        %v2469 = vsel %vm1800, %v2467, %v2468
        %2470 = vst [vmem:[%s976] sm:$0x3] %v2469
        %v2471 = vld [vmem:[%s867] sm:$0x3]
        %v2472 = vsel %vm1800, %v2471, %v2467
        %2473 = vst [vmem:[%s867] sm:$0x3] %v2472
        %v2474 = vld [vmem:[%s1192] sm:$0xff]
        %v2475 = vld [vmem:[%s865] sm:$0xff]
        %v2477 = vcombine.high %v2474, %v2474
        %v2479 = vunpack.c.l.s4 1983009808
        %v2480 = vunpack.c.0.s8 %v2479
        %v2481 = vlaneseq
        %v2482 = vshrl.u32 %v2481, 7
        %v2483 = vsub.s32 %v2480, %v2482
        %v2484 = vrot.slane %v2474, %v2483
        %v2486 = vunpack.c.l.s4 1983009808
        %v2487 = vunpack.c.0.s8 %v2486
        %v2488 = vlaneseq
        %v2489 = vshrl.u32 %v2488, 7
        %v2490 = vsub.s32 %v2487, %v2489
        %v2491 = vrot.slane %v2477, %v2490
        %v2492 = vcombine.high %v2484, %v2484
        %v2493 = vcombine.high %v2491, %v2491
        %v2499 = vcombine.high %v2475, %v2475
        %v2501 = vunpack.c.l.s4 1983009808
        %v2502 = vunpack.c.0.s8 %v2501
        %v2503 = vlaneseq
        %v2504 = vshrl.u32 %v2503, 7
        %v2505 = vsub.s32 %v2502, %v2504
        %v2506 = vrot.slane %v2475, %v2505
        %v2508 = vunpack.c.l.s4 1983009808
        %v2509 = vunpack.c.0.s8 %v2508
        %v2510 = vlaneseq
        %v2511 = vshrl.u32 %v2510, 7
        %v2512 = vsub.s32 %v2509, %v2511
        %v2513 = vrot.slane %v2499, %v2512
        %v2514 = vcombine.high %v2506, %v2506
        %v2515 = vcombine.high %v2513, %v2513
        %v2520 = vsel %vm1476, %v2484, %v2506
        %v2521 = vsel %vm1477, %v2492, %v2514
        %v2522 = vsel %vm1478, %v2491, %v2513
        %v2523 = vsel %vm1479, %v2493, %v2515
        %v2524 = vpack.c.bf16 %v2467, %v2467
        %2525 = vmatprep.subr.bf16.mxu0 %v1653
        %2526 = vmatpush1.bf16.msra.mxu0 %v1652
        %2527 = vmatprep.subr.bf16.mxu0 %v1649
        %2528 = vmatpush1.bf16.msra.mxu0 %v1648
        %2529 = vmatprep.subr.bf16.mxu0 %v1645
        %2530 = vmatpush1.bf16.msra.mxu0 %v1644
        %2531 = vmatprep.subr.bf16.mxu0 %v1641
        %2532 = vmatpush1.bf16.msra.mxu0 %v1640
        %2533 = vmatprep.subr.bf16.mxu0 %v1637
        %2534 = vmatpush1.bf16.msra.mxu0 %v1636
        %2535 = vmatprep.subr.bf16.mxu0 %v1633
        %2536 = vmatpush1.bf16.msra.mxu0 %v1632
        %2537 = vmatprep.subr.bf16.mxu0 %v1629
        %2538 = vmatpush1.bf16.msra.mxu0 %v1628
        %2539 = vmatprep.subr.bf16.mxu0 %v1625
        %2540 = vmatpush1.bf16.msra.mxu0 %v1624
        %2541 = vmatprep.subr.bf16.mxu0 0
        %2542 = vmatpush2.bf16.msra.mxu0 0
        %2543 = vmatprep.subr.bf16.mxu0 0
        %2544 = vmatpush2.bf16.msra.mxu0 0
        %2545 = vmatprep.subr.bf16.mxu0 0
        %2546 = vmatpush2.bf16.msra.mxu0 0
        %2547 = vmatprep.subr.bf16.mxu0 0
        %2548 = vmatpush2.bf16.msra.mxu0 0
        %2549 = vmatprep.subr.bf16.mxu0 0
        %2550 = vmatpush2.bf16.msra.mxu0 0
        %2551 = vmatprep.subr.bf16.mxu0 0
        %2552 = vmatpush2.bf16.msra.mxu0 0
        %2553 = vmatprep.subr.bf16.mxu0 0
        %2554 = vmatpush2.bf16.msra.mxu0 0
        %2555 = vmatprep.subr.bf16.mxu0 0
        %2556 = vmatpush2.bf16.msra.mxu0 0
        %2557 = vmatprep.mubr.bf16.mxu0 0
        %2558 = vmatmul.mubr.bf16.gmra.mxu0 %v2524
        %v2559 = vpop.f32.mrf.mxu0
        %v2560 = vadd.f32 0.0, %v2559
        %v2561 = vpop.f32.mrf.mxu0
        %v2562 = vadd.f32 0.0, %v2561
        %v2563 = vpop.f32.mrf.mxu0
        %v2564 = vpop.f32.mrf.mxu0
        %2565 = vdwg.mxu0
        %2566 = vmatprep.subr.bf16.mxu0 %v1655
        %2567 = vmatpush1.bf16.msra.mxu0 %v1654
        %2568 = vmatprep.subr.bf16.mxu0 %v1651
        %2569 = vmatpush1.bf16.msra.mxu0 %v1650
        %2570 = vmatprep.subr.bf16.mxu0 %v1647
        %2571 = vmatpush1.bf16.msra.mxu0 %v1646
        %2572 = vmatprep.subr.bf16.mxu0 %v1643
        %2573 = vmatpush1.bf16.msra.mxu0 %v1642
        %2574 = vmatprep.subr.bf16.mxu0 %v1639
        %2575 = vmatpush1.bf16.msra.mxu0 %v1638
        %2576 = vmatprep.subr.bf16.mxu0 %v1635
        %2577 = vmatpush1.bf16.msra.mxu0 %v1634
        %2578 = vmatprep.subr.bf16.mxu0 %v1631
        %2579 = vmatpush1.bf16.msra.mxu0 %v1630
        %2580 = vmatprep.subr.bf16.mxu0 %v1627
        %2581 = vmatpush1.bf16.msra.mxu0 %v1626
        %2582 = vmatprep.subr.bf16.mxu0 0
        %2583 = vmatpush2.bf16.msra.mxu0 0
        %2584 = vmatprep.subr.bf16.mxu0 0
        %2585 = vmatpush2.bf16.msra.mxu0 0
        %2586 = vmatprep.subr.bf16.mxu0 0
        %2587 = vmatpush2.bf16.msra.mxu0 0
        %2588 = vmatprep.subr.bf16.mxu0 0
        %2589 = vmatpush2.bf16.msra.mxu0 0
        %2590 = vmatprep.subr.bf16.mxu0 0
        %2591 = vmatpush2.bf16.msra.mxu0 0
        %2592 = vmatprep.subr.bf16.mxu0 0
        %2593 = vmatpush2.bf16.msra.mxu0 0
        %2594 = vmatprep.subr.bf16.mxu0 0
        %2595 = vmatpush2.bf16.msra.mxu0 0
        %2596 = vmatprep.subr.bf16.mxu0 0
        %2597 = vmatpush2.bf16.msra.mxu0 0
        %2598 = vmatprep.mubr.bf16.mxu0 0
        %2599 = vmatmul.mubr.bf16.gmra.mxu0 %v2524
        %v2600 = vpop.f32.mrf.mxu0
        %v2601 = vadd.f32 0.0, %v2600
        %v2602 = vpop.f32.mrf.mxu0
        %v2603 = vadd.f32 0.0, %v2602
        %v2604 = vpop.f32.mrf.mxu0
        %v2605 = vpop.f32.mrf.mxu0
        %2606 = vdwg.mxu0
        %v2607 = vadd.f32 %v2520, %v2560
        %v2608 = vadd.f32 %v2521, %v2562
        %v2609 = vadd.f32 %v2522, %v2601
        %v2610 = vadd.f32 %v2523, %v2603
        %v2611 = vxor.u32 %v2607, 2147483648
        %v2612 = vmul.f32 %v2611, 1.442695
        %v2613 = vpow.pop %v2612
        %v2614 = vadd.f32 %v2613, 1.0
        %v2615 = vrcp.pop %v2614
        %v2616 = vmul.f32 1.0, %v2615
        %v2617 = vxor.u32 %v2608, 2147483648
        %v2618 = vmul.f32 %v2617, 1.442695
        %v2619 = vpow.pop %v2618
        %v2620 = vadd.f32 %v2619, 1.0
        %v2621 = vrcp.pop %v2620
        %v2622 = vmul.f32 1.0, %v2621
        %v2623 = vtanh.pop %v2609
        %v2624 = vxor.u32 %v2610, 2147483648
        %v2625 = vmul.f32 %v2624, 1.442695
        %v2626 = vpow.pop %v2625
        %v2627 = vadd.f32 %v2626, 1.0
        %v2628 = vrcp.pop %v2627
        %v2629 = vmul.f32 1.0, %v2628
        %v2630 = vmul.f32 %v2622, %v2465
        %v2631 = vmul.f32 %v2616, %v2623
        %v2632 = vadd.f32 %v2630, %v2631
        %v2633 = vtanh.pop %v2632
        %v2634 = vmul.f32 %v2629, %v2633
        %v2635 = vld [vmem:[%s1085] sm:$0x3]
        %v2636 = vsel %vm1800, %v2634, %v2635
        %2637 = vst [vmem:[%s1085] sm:$0x3] %v2636
        %v2638 = vld [vmem:[%s758] sm:$0x3]
        %v2639 = vsel %vm1800, %v2638, %v2634
        %2640 = vst [vmem:[%s758] sm:$0x3] %v2639
        %v2641 = vld [vmem:[%s1301] sm:$0xff]
        %v2642 = vld [vmem:[%s756] sm:$0xff]
        %v2644 = vcombine.high %v2641, %v2641
        %v2646 = vunpack.c.l.s4 1983009808
        %v2647 = vunpack.c.0.s8 %v2646
        %v2648 = vlaneseq
        %v2649 = vshrl.u32 %v2648, 7
        %v2650 = vsub.s32 %v2647, %v2649
        %v2651 = vrot.slane %v2641, %v2650
        %v2653 = vunpack.c.l.s4 1983009808
        %v2654 = vunpack.c.0.s8 %v2653
        %v2655 = vlaneseq
        %v2656 = vshrl.u32 %v2655, 7
        %v2657 = vsub.s32 %v2654, %v2656
        %v2658 = vrot.slane %v2644, %v2657
        %v2659 = vcombine.high %v2651, %v2651
        %v2660 = vcombine.high %v2658, %v2658
        %v2666 = vcombine.high %v2642, %v2642
        %v2668 = vunpack.c.l.s4 1983009808
        %v2669 = vunpack.c.0.s8 %v2668
        %v2670 = vlaneseq
        %v2671 = vshrl.u32 %v2670, 7
        %v2672 = vsub.s32 %v2669, %v2671
        %v2673 = vrot.slane %v2642, %v2672
        %v2675 = vunpack.c.l.s4 1983009808
        %v2676 = vunpack.c.0.s8 %v2675
        %v2677 = vlaneseq
        %v2678 = vshrl.u32 %v2677, 7
        %v2679 = vsub.s32 %v2676, %v2678
        %v2680 = vrot.slane %v2666, %v2679
        %v2681 = vcombine.high %v2673, %v2673
        %v2682 = vcombine.high %v2680, %v2680
        %v2687 = vsel %vm1476, %v2651, %v2673
        %v2688 = vsel %vm1477, %v2659, %v2681
        %v2689 = vsel %vm1478, %v2658, %v2680
        %v2690 = vsel %vm1479, %v2660, %v2682
        %v2691 = vpack.c.bf16 %v2634, %v2634
        %2692 = vmatprep.subr.bf16.mxu0 %v1653
        %2693 = vmatpush1.bf16.msra.mxu0 %v1652
        %2694 = vmatprep.subr.bf16.mxu0 %v1649
        %2695 = vmatpush1.bf16.msra.mxu0 %v1648
        %2696 = vmatprep.subr.bf16.mxu0 %v1645
        %2697 = vmatpush1.bf16.msra.mxu0 %v1644
        %2698 = vmatprep.subr.bf16.mxu0 %v1641
        %2699 = vmatpush1.bf16.msra.mxu0 %v1640
        %2700 = vmatprep.subr.bf16.mxu0 %v1637
        %2701 = vmatpush1.bf16.msra.mxu0 %v1636
        %2702 = vmatprep.subr.bf16.mxu0 %v1633
        %2703 = vmatpush1.bf16.msra.mxu0 %v1632
        %2704 = vmatprep.subr.bf16.mxu0 %v1629
        %2705 = vmatpush1.bf16.msra.mxu0 %v1628
        %2706 = vmatprep.subr.bf16.mxu0 %v1625
        %2707 = vmatpush1.bf16.msra.mxu0 %v1624
        %2708 = vmatprep.subr.bf16.mxu0 0
        %2709 = vmatpush2.bf16.msra.mxu0 0
        %2710 = vmatprep.subr.bf16.mxu0 0
        %2711 = vmatpush2.bf16.msra.mxu0 0
        %2712 = vmatprep.subr.bf16.mxu0 0
        %2713 = vmatpush2.bf16.msra.mxu0 0
        %2714 = vmatprep.subr.bf16.mxu0 0
        %2715 = vmatpush2.bf16.msra.mxu0 0
        %2716 = vmatprep.subr.bf16.mxu0 0
        %2717 = vmatpush2.bf16.msra.mxu0 0
        %2718 = vmatprep.subr.bf16.mxu0 0
        %2719 = vmatpush2.bf16.msra.mxu0 0
        %2720 = vmatprep.subr.bf16.mxu0 0
        %2721 = vmatpush2.bf16.msra.mxu0 0
        %2722 = vmatprep.subr.bf16.mxu0 0
        %2723 = vmatpush2.bf16.msra.mxu0 0
        %2724 = vmatprep.mubr.bf16.mxu0 0
        %2725 = vmatmul.mubr.bf16.gmra.mxu0 %v2691
        %v2726 = vpop.f32.mrf.mxu0
        %v2727 = vadd.f32 0.0, %v2726
        %v2728 = vpop.f32.mrf.mxu0
        %v2729 = vadd.f32 0.0, %v2728
        %v2730 = vpop.f32.mrf.mxu0
        %v2731 = vpop.f32.mrf.mxu0
        %2732 = vdwg.mxu0
        %2733 = vmatprep.subr.bf16.mxu0 %v1655
        %2734 = vmatpush1.bf16.msra.mxu0 %v1654
        %2735 = vmatprep.subr.bf16.mxu0 %v1651
        %2736 = vmatpush1.bf16.msra.mxu0 %v1650
        %2737 = vmatprep.subr.bf16.mxu0 %v1647
        %2738 = vmatpush1.bf16.msra.mxu0 %v1646
        %2739 = vmatprep.subr.bf16.mxu0 %v1643
        %2740 = vmatpush1.bf16.msra.mxu0 %v1642
        %2741 = vmatprep.subr.bf16.mxu0 %v1639
        %2742 = vmatpush1.bf16.msra.mxu0 %v1638
        %2743 = vmatprep.subr.bf16.mxu0 %v1635
        %2744 = vmatpush1.bf16.msra.mxu0 %v1634
        %2745 = vmatprep.subr.bf16.mxu0 %v1631
        %2746 = vmatpush1.bf16.msra.mxu0 %v1630
        %2747 = vmatprep.subr.bf16.mxu0 %v1627
        %2748 = vmatpush1.bf16.msra.mxu0 %v1626
        %2749 = vmatprep.subr.bf16.mxu0 0
        %2750 = vmatpush2.bf16.msra.mxu0 0
        %2751 = vmatprep.subr.bf16.mxu0 0
        %2752 = vmatpush2.bf16.msra.mxu0 0
        %2753 = vmatprep.subr.bf16.mxu0 0
        %2754 = vmatpush2.bf16.msra.mxu0 0
        %2755 = vmatprep.subr.bf16.mxu0 0
        %2756 = vmatpush2.bf16.msra.mxu0 0
        %2757 = vmatprep.subr.bf16.mxu0 0
        %2758 = vmatpush2.bf16.msra.mxu0 0
        %2759 = vmatprep.subr.bf16.mxu0 0
        %2760 = vmatpush2.bf16.msra.mxu0 0
        %2761 = vmatprep.subr.bf16.mxu0 0
        %2762 = vmatpush2.bf16.msra.mxu0 0
        %2763 = vmatprep.subr.bf16.mxu0 0
        %2764 = vmatpush2.bf16.msra.mxu0 0
        %2765 = vmatprep.mubr.bf16.mxu0 0
        %2766 = vmatmul.mubr.bf16.gmra.mxu0 %v2691
        %v2767 = vpop.f32.mrf.mxu0
        %v2768 = vadd.f32 0.0, %v2767
        %v2769 = vpop.f32.mrf.mxu0
        %v2770 = vadd.f32 0.0, %v2769
        %v2771 = vpop.f32.mrf.mxu0
        %v2772 = vpop.f32.mrf.mxu0
        %2773 = vdwg.mxu0
        %v2774 = vadd.f32 %v2687, %v2727
        %v2775 = vadd.f32 %v2688, %v2729
        %v2776 = vadd.f32 %v2689, %v2768
        %v2777 = vadd.f32 %v2690, %v2770
        %v2778 = vxor.u32 %v2774, 2147483648
        %v2779 = vmul.f32 %v2778, 1.442695
        %v2780 = vpow.pop %v2779
        %v2781 = vadd.f32 %v2780, 1.0
        %v2782 = vrcp.pop %v2781
        %v2783 = vmul.f32 1.0, %v2782
        %v2784 = vxor.u32 %v2775, 2147483648
        %v2785 = vmul.f32 %v2784, 1.442695
        %v2786 = vpow.pop %v2785
        %v2787 = vadd.f32 %v2786, 1.0
        %v2788 = vrcp.pop %v2787
        %v2789 = vmul.f32 1.0, %v2788
        %v2790 = vtanh.pop %v2776
        %v2791 = vxor.u32 %v2777, 2147483648
        %v2792 = vmul.f32 %v2791, 1.442695
        %v2793 = vpow.pop %v2792
        %v2794 = vadd.f32 %v2793, 1.0
        %v2795 = vrcp.pop %v2794
        %v2796 = vmul.f32 1.0, %v2795
        %v2797 = vmul.f32 %v2789, %v2632
        %v2798 = vmul.f32 %v2783, %v2790
        %v2799 = vadd.f32 %v2797, %v2798
        %v2800 = vtanh.pop %v2799
        %v2801 = vmul.f32 %v2796, %v2800
        %v2802 = vld [vmem:[%s1194] sm:$0x3]
        %v2803 = vsel %vm1800, %v2801, %v2802
        %2804 = vst [vmem:[%s1194] sm:$0x3] %v2803
        %v2805 = vld [vmem:[%s649] sm:$0x3]
        %v2806 = vsel %vm1800, %v2805, %v2801
        %2807 = vst [vmem:[%s649] sm:$0x3] %v2806
        %v2808 = vld [vmem:[%s1410] sm:$0xff]
        %v2809 = vld [vmem:[#allocation3] sm:$0xff]
        %v2811 = vcombine.high %v2808, %v2808
        %v2813 = vunpack.c.l.s4 1983009808
        %v2814 = vunpack.c.0.s8 %v2813
        %v2815 = vlaneseq
        %v2816 = vshrl.u32 %v2815, 7
        %v2817 = vsub.s32 %v2814, %v2816
        %v2818 = vrot.slane %v2808, %v2817
        %v2820 = vunpack.c.l.s4 1983009808
        %v2821 = vunpack.c.0.s8 %v2820
        %v2822 = vlaneseq
        %v2823 = vshrl.u32 %v2822, 7
        %v2824 = vsub.s32 %v2821, %v2823
        %v2825 = vrot.slane %v2811, %v2824
        %v2826 = vcombine.high %v2818, %v2818
        %v2827 = vcombine.high %v2825, %v2825
        %v2833 = vcombine.high %v2809, %v2809
        %v2835 = vunpack.c.l.s4 1983009808
        %v2836 = vunpack.c.0.s8 %v2835
        %v2837 = vlaneseq
        %v2838 = vshrl.u32 %v2837, 7
        %v2839 = vsub.s32 %v2836, %v2838
        %v2840 = vrot.slane %v2809, %v2839
        %v2842 = vunpack.c.l.s4 1983009808
        %v2843 = vunpack.c.0.s8 %v2842
        %v2844 = vlaneseq
        %v2845 = vshrl.u32 %v2844, 7
        %v2846 = vsub.s32 %v2843, %v2845
        %v2847 = vrot.slane %v2833, %v2846
        %v2848 = vcombine.high %v2840, %v2840
        %v2849 = vcombine.high %v2847, %v2847
        %v2854 = vsel %vm1476, %v2818, %v2840
        %v2855 = vsel %vm1477, %v2826, %v2848
        %v2856 = vsel %vm1478, %v2825, %v2847
        %v2857 = vsel %vm1479, %v2827, %v2849
        %v2858 = vpack.c.bf16 %v2801, %v2801
        %2859 = vmatprep.subr.bf16.mxu0 %v1653
        %2860 = vmatpush1.bf16.msra.mxu0 %v1652
        %2861 = vmatprep.subr.bf16.mxu0 %v1649
        %2862 = vmatpush1.bf16.msra.mxu0 %v1648
        %2863 = vmatprep.subr.bf16.mxu0 %v1645
        %2864 = vmatpush1.bf16.msra.mxu0 %v1644
        %2865 = vmatprep.subr.bf16.mxu0 %v1641
        %2866 = vmatpush1.bf16.msra.mxu0 %v1640
        %2867 = vmatprep.subr.bf16.mxu0 %v1637
        %2868 = vmatpush1.bf16.msra.mxu0 %v1636
        %2869 = vmatprep.subr.bf16.mxu0 %v1633
        %2870 = vmatpush1.bf16.msra.mxu0 %v1632
        %2871 = vmatprep.subr.bf16.mxu0 %v1629
        %2872 = vmatpush1.bf16.msra.mxu0 %v1628
        %2873 = vmatprep.subr.bf16.mxu0 %v1625
        %2874 = vmatpush1.bf16.msra.mxu0 %v1624
        %2875 = vmatprep.subr.bf16.mxu0 0
        %2876 = vmatpush2.bf16.msra.mxu0 0
        %2877 = vmatprep.subr.bf16.mxu0 0
        %2878 = vmatpush2.bf16.msra.mxu0 0
        %2879 = vmatprep.subr.bf16.mxu0 0
        %2880 = vmatpush2.bf16.msra.mxu0 0
        %2881 = vmatprep.subr.bf16.mxu0 0
        %2882 = vmatpush2.bf16.msra.mxu0 0
        %2883 = vmatprep.subr.bf16.mxu0 0
        %2884 = vmatpush2.bf16.msra.mxu0 0
        %2885 = vmatprep.subr.bf16.mxu0 0
        %2886 = vmatpush2.bf16.msra.mxu0 0
        %2887 = vmatprep.subr.bf16.mxu0 0
        %2888 = vmatpush2.bf16.msra.mxu0 0
        %2889 = vmatprep.subr.bf16.mxu0 0
        %2890 = vmatpush2.bf16.msra.mxu0 0
        %2891 = vmatprep.mubr.bf16.mxu0 0
        %2892 = vmatmul.mubr.bf16.gmra.mxu0 %v2858
        %v2893 = vpop.f32.mrf.mxu0
        %v2894 = vadd.f32 0.0, %v2893
        %v2895 = vpop.f32.mrf.mxu0
        %v2896 = vadd.f32 0.0, %v2895
        %v2897 = vpop.f32.mrf.mxu0
        %v2898 = vpop.f32.mrf.mxu0
        %2899 = vdwg.mxu0
        %2900 = vmatprep.subr.bf16.mxu0 %v1655
        %2901 = vmatpush1.bf16.msra.mxu0 %v1654
        %2902 = vmatprep.subr.bf16.mxu0 %v1651
        %2903 = vmatpush1.bf16.msra.mxu0 %v1650
        %2904 = vmatprep.subr.bf16.mxu0 %v1647
        %2905 = vmatpush1.bf16.msra.mxu0 %v1646
        %2906 = vmatprep.subr.bf16.mxu0 %v1643
        %2907 = vmatpush1.bf16.msra.mxu0 %v1642
        %2908 = vmatprep.subr.bf16.mxu0 %v1639
        %2909 = vmatpush1.bf16.msra.mxu0 %v1638
        %2910 = vmatprep.subr.bf16.mxu0 %v1635
        %2911 = vmatpush1.bf16.msra.mxu0 %v1634
        %2912 = vmatprep.subr.bf16.mxu0 %v1631
        %2913 = vmatpush1.bf16.msra.mxu0 %v1630
        %2914 = vmatprep.subr.bf16.mxu0 %v1627
        %2915 = vmatpush1.bf16.msra.mxu0 %v1626
        %2916 = vmatprep.subr.bf16.mxu0 0
        %2917 = vmatpush2.bf16.msra.mxu0 0
        %2918 = vmatprep.subr.bf16.mxu0 0
        %2919 = vmatpush2.bf16.msra.mxu0 0
        %2920 = vmatprep.subr.bf16.mxu0 0
        %2921 = vmatpush2.bf16.msra.mxu0 0
        %2922 = vmatprep.subr.bf16.mxu0 0
        %2923 = vmatpush2.bf16.msra.mxu0 0
        %2924 = vmatprep.subr.bf16.mxu0 0
        %2925 = vmatpush2.bf16.msra.mxu0 0
        %2926 = vmatprep.subr.bf16.mxu0 0
        %2927 = vmatpush2.bf16.msra.mxu0 0
        %2928 = vmatprep.subr.bf16.mxu0 0
        %2929 = vmatpush2.bf16.msra.mxu0 0
        %2930 = vmatprep.subr.bf16.mxu0 0
        %2931 = vmatpush2.bf16.msra.mxu0 0
        %2932 = vmatprep.mubr.bf16.mxu0 0
        %2933 = vmatmul.mubr.bf16.gmra.mxu0 %v2858
        %v2934 = vpop.f32.mrf.mxu0
        %v2935 = vadd.f32 0.0, %v2934
        %v2936 = vpop.f32.mrf.mxu0
        %v2937 = vadd.f32 0.0, %v2936
        %v2938 = vpop.f32.mrf.mxu0
        %v2939 = vpop.f32.mrf.mxu0
        %2940 = vdwg.mxu0
        %v2941 = vadd.f32 %v2854, %v2894
        %v2942 = vadd.f32 %v2855, %v2896
        %v2943 = vadd.f32 %v2856, %v2935
        %v2944 = vadd.f32 %v2857, %v2937
        %v2945 = vxor.u32 %v2941, 2147483648
        %v2946 = vmul.f32 %v2945, 1.442695
        %v2947 = vpow.pop %v2946
        %v2948 = vadd.f32 %v2947, 1.0
        %v2949 = vrcp.pop %v2948
        %v2950 = vmul.f32 1.0, %v2949
        %v2951 = vxor.u32 %v2942, 2147483648
        %v2952 = vmul.f32 %v2951, 1.442695
        %v2953 = vpow.pop %v2952
        %v2954 = vadd.f32 %v2953, 1.0
        %v2955 = vrcp.pop %v2954
        %v2956 = vmul.f32 1.0, %v2955
        %v2957 = vtanh.pop %v2943
        %v2958 = vxor.u32 %v2944, 2147483648
        %v2959 = vmul.f32 %v2958, 1.442695
        %v2960 = vpow.pop %v2959
        %v2961 = vadd.f32 %v2960, 1.0
        %v2962 = vrcp.pop %v2961
        %v2963 = vmul.f32 1.0, %v2962
        %v2964 = vmul.f32 %v2956, %v2799
        %v2965 = vmul.f32 %v2950, %v2957
        %v2966 = vadd.f32 %v2964, %v2965
        %v2967 = vtanh.pop %v2966
        %v2968 = vmul.f32 %v2963, %v2967
        %v2969 = vld [vmem:[%s1303] sm:$0x3]
        %v2970 = vsel %vm1800, %v2968, %v2969
        %2971 = vst [vmem:[%s1303] sm:$0x3] %v2970
        %v2972 = vld [vmem:[#allocation2] sm:$0x3]
        %v2973 = vsel %vm1800, %v2972, %v2968
        %2974 = vst [vmem:[#allocation2] sm:$0x3] %v2973
        %p2975 = scmp.eq.s32.totalorder %s18, 9
        // Predicated region
        $region49: #{somenet_pallas.1} parent=43 // pred_check
          %p2976 = pneg %p2975
        $region50: #{somenet_pallas.1} parent=43 // pred_check_branch
          %2978 = sbr.rel (%p2976) target = $region52
        $region51: #{somenet_pallas.1} parent=43 // pred_region
          %v2979 = vld [vmem:[%s1303] sm:$0x3]
          %v2980 = vld [vmem:[%s4] sm:$0xff]
          %v2981 = vld [vmem:[%s4 + $0x8] sm:$0xff]
          %v2982 = vld [vmem:[%s4 + $0x10] sm:$0xff]
          %v2983 = vld [vmem:[%s4 + $0x18] sm:$0xff]
          %v2984 = vld [vmem:[%s4 + $0x20] sm:$0xff]
          %v2985 = vld [vmem:[%s4 + $0x28] sm:$0xff]
          %v2986 = vld [vmem:[%s4 + $0x30] sm:$0xff]
          %v2987 = vld [vmem:[%s4 + $0x38] sm:$0xff]
          %v2988 = vld [vmem:[%s4 + $0x40] sm:$0xff]
          %v2989 = vld [vmem:[%s4 + $0x48] sm:$0xff]
          %v2990 = vld [vmem:[%s4 + $0x50] sm:$0xff]
          %v2991 = vld [vmem:[%s4 + $0x58] sm:$0xff]
          %v2992 = vld [vmem:[%s4 + $0x60] sm:$0xff]
          %v2993 = vld [vmem:[%s4 + $0x68] sm:$0xff]
          %v2994 = vld [vmem:[%s4 + $0x70] sm:$0xff]
          %v2995 = vld [vmem:[%s4 + $0x78] sm:$0xff]
          %v2996 = vld [vmem:[%s5] sm:$0x1]
          %v2998 = vlaneseq
          %v2999 = vshrl.u32 %v2998, 7
          %v3000 = vsub.s32 0, %v2999
          %v3001 = vrot.slane %v2996, %v3000
          %3003 = vmatprep.subr.mxu0 0.0
          %3004 = vmatpush1.msra.mxu0 %v2995
          %3005 = vmatprep.subr.mxu0 0.0
          %3006 = vmatpush1.msra.mxu0 %v2994
          %3007 = vmatprep.subr.mxu0 0.0
          %3008 = vmatpush1.msra.mxu0 %v2993
          %3009 = vmatprep.subr.mxu0 0.0
          %3010 = vmatpush1.msra.mxu0 %v2992
          %3011 = vmatprep.subr.mxu0 0.0
          %3012 = vmatpush1.msra.mxu0 %v2991
          %3013 = vmatprep.subr.mxu0 0.0
          %3014 = vmatpush1.msra.mxu0 %v2990
          %3015 = vmatprep.subr.mxu0 0.0
          %3016 = vmatpush1.msra.mxu0 %v2989
          %3017 = vmatprep.subr.mxu0 0.0
          %3018 = vmatpush1.msra.mxu0 %v2988
          %3019 = vmatprep.subr.mxu0 0.0
          %3020 = vmatpush1.msra.mxu0 %v2987
          %3021 = vmatprep.subr.mxu0 0.0
          %3022 = vmatpush1.msra.mxu0 %v2986
          %3023 = vmatprep.subr.mxu0 0.0
          %3024 = vmatpush1.msra.mxu0 %v2985
          %3025 = vmatprep.subr.mxu0 0.0
          %3026 = vmatpush1.msra.mxu0 %v2984
          %3027 = vmatprep.subr.mxu0 0.0
          %3028 = vmatpush1.msra.mxu0 %v2983
          %3029 = vmatprep.subr.mxu0 0.0
          %3030 = vmatpush1.msra.mxu0 %v2982
          %3031 = vmatprep.subr.mxu0 0.0
          %3032 = vmatpush1.msra.mxu0 %v2981
          %3033 = vmatprep.subr.mxu0 0.0
          %3034 = vmatpush1.msra.mxu0 %v2980
          %3035 = vmatprep.subr.mxu0 0.0
          %3036 = vmatpush2.msra.mxu0 0.0
          %3037 = vmatprep.subr.mxu0 0.0
          %3038 = vmatpush2.msra.mxu0 0.0
          %3039 = vmatprep.subr.mxu0 0.0
          %3040 = vmatpush2.msra.mxu0 0.0
          %3041 = vmatprep.subr.mxu0 0.0
          %3042 = vmatpush2.msra.mxu0 0.0
          %3043 = vmatprep.subr.mxu0 0.0
          %3044 = vmatpush2.msra.mxu0 0.0
          %3045 = vmatprep.subr.mxu0 0.0
          %3046 = vmatpush2.msra.mxu0 0.0
          %3047 = vmatprep.subr.mxu0 0.0
          %3048 = vmatpush2.msra.mxu0 0.0
          %3049 = vmatprep.subr.mxu0 0.0
          %3050 = vmatpush2.msra.mxu0 0.0
          %3051 = vmatprep.subr.mxu0 0.0
          %3052 = vmatpush2.msra.mxu0 0.0
          %3053 = vmatprep.subr.mxu0 0.0
          %3054 = vmatpush2.msra.mxu0 0.0
          %3055 = vmatprep.subr.mxu0 0.0
          %3056 = vmatpush2.msra.mxu0 0.0
          %3057 = vmatprep.subr.mxu0 0.0
          %3058 = vmatpush2.msra.mxu0 0.0
          %3059 = vmatprep.subr.mxu0 0.0
          %3060 = vmatpush2.msra.mxu0 0.0
          %3061 = vmatprep.subr.mxu0 0.0
          %3062 = vmatpush2.msra.mxu0 0.0
          %3063 = vmatprep.subr.mxu0 0.0
          %3064 = vmatpush2.msra.mxu0 0.0
          %3065 = vmatprep.subr.mxu0 0.0
          %3066 = vmatpush2.msra.mxu0 0.0
          %3067 = vmatprep.mubr.f32.mxu0 0.0
          %3068 = vmatmul.mubr.f32.gmra.mxu0 %v2979
          %v3069 = vpop.f32.mrf.mxu0
          %v3070 = vadd.f32 %v3001, %v3069
          %v3071 = vpop.f32.mrf.mxu0
          %3072 = vdwg.mxu0
          %vm3073 = vcmask 123904
          %3074 = vst.msk [vmem:[#allocation4] sm:$0x3] %vm3073, %v3070
        $region52: #{somenet_pallas.1} parent=43 // pred_fallthru
          _
        // Predicated region
        $region53: #{somenet_pallas.1} parent=43 // pred_check
          %p3075 = pneg %p172
        $region54: #{somenet_pallas.1} parent=43 // pred_check_branch
          %3077 = sbr.rel (%p3075) target = $region56
        $region55: #{somenet_pallas.1} parent=43 // pred_region
          %s3079 = ssub.s32 32, 32
          %3080 = vsyncadd [#allocation5], %s3079
          %s3082 = sshll.u32 [#allocation4], 4
          %s3083 = int_to_ptr.vmem [resolvable:$true] %s3082
          %3085 = dma.vmem_to_hbm [thread:$0]  %s3083, 32, %s6, [#allocation5]
        $region56: #{somenet_pallas.1} parent=43 // pred_fallthru
          _
        // Predicated region
        $region57: #{somenet_pallas.1} parent=43 // pred_check
          %p3086 = pneg %p172
        $region58: #{somenet_pallas.1} parent=43 // pred_check_branch
          %3088 = sbr.rel (%p3086) target = $region60
        $region59: #{somenet_pallas.1} parent=43 // pred_region
          %3089 = dma.done [#allocation5], 32
        $region60: #{somenet_pallas.1} parent=43 // pred_fallthru
          _
      $region44: #{somenet_pallas.1} parent=5 // pred_fallthru
        _
      %p3090 = scmp.le.s32.totalorder 2, %s13
      // Predicated region
      $region61: #{somenet_pallas.1} parent=5 // pred_check
        %p3091 = pneg %p3090
      $region62: #{somenet_pallas.1} parent=5 // pred_check_branch
        %3093 = sbr.rel (%p3091) target = $region64
      $region63: #{somenet_pallas.1} parent=5 // pred_region
        %s3094 = ssub.s32 %s13, 2
      $region64: #{somenet_pallas.1} parent=5 // pred_fallthru
        _
    $region6: #{somenet_pallas.1} parent=1 // loop_footer
      %s17 = sadd.s32 1, %s13
    $region7: #{somenet_pallas.1} parent=1 // loop_footer_branch
      %12 = sbr.rel target = $region3
    $region8: #{somenet_pallas.1} parent=1 // loop_exit
      _
    %3095 = vsyncpa [#allocation5], 1
    %s3096 = scalar_lea.sflag [#allocation5], 1
    %3097 = vsyncpa %s3096, 1

</llo_original>
